<compile_context>
chip_gen: v7x
topology: tpu7x:2x2x1
jax: 0.10.0
libtpu: 0.0.40
codegen_flags: <defaults>
</compile_context>

<pallas_src>
import functools

import numpy as np
import jax
import jax.numpy as jnp
from jax import lax
from jax.experimental import pallas as pl
from jax.experimental.pallas import tpu as pltpu


# ---------------------------------------------------------------------------
# Host-side helpers
# ---------------------------------------------------------------------------
def _band_weights(w, w_out):
    """Fold the W-axis taps of a (3,3,3,Ci,Co) kernel into banded matrices.

    Returns wb of shape (9, (w_out+2)*Ci, w_out*Co) with
      wb[kd*3+kh, wq*Ci + ci, wo*Co + co] = w[kd, kh, wq - wo, ci, co]
    when 0 <= wq - wo <= 2, and 0 otherwise.
    """
    kD, kH, kW, Ci, Co = w.shape
    w_in = w_out + kW - 1
    kw_idx = jnp.arange(w_in)[:, None] - jnp.arange(w_out)[None, :]   # (w_in, w_out)
    valid = (kw_idx >= 0) & (kw_idx < kW)
    wb = w[:, :, jnp.where(valid, kw_idx, 0), :, :]                   # (kD,kH,w_in,w_out,Ci,Co)
    wb = jnp.where(valid[None, None, :, :, None, None], wb, 0.0)
    wb = wb.transpose(0, 1, 2, 4, 3, 5)                               # (kD,kH,w_in,Ci,w_out,Co)
    return wb.reshape(kD * kH, w_in * Ci, w_out * Co)


def _vmem_estimate(tD, D, H, W, Ci, Co, cd_bytes, out_bytes):
    """Rough per-step VMEM working-set estimate (double-buffered BlockSpecs)."""
    Hx, Wx = H + 4, W + 4
    K1, N1 = Wx * Ci, (W + 2) * Co
    K2, N2 = N1, W * Co
    Rtot = (tD + 4) * Hx + 4
    Mh = (tD + 2) * Hx + 2
    M2 = tD * Hx
    est = 0
    est += 2 * Rtot * K1 * cd_bytes                       # x slab (double buffered)
    est += 2 * 9 * (K1 * N1 + K2 * N2) * cd_bytes         # band weights
    est += 2 * (N1 + N2) * 4                              # biases
    est += 2 * Mh * 4                                     # h1 validity mask
    est += 2 * tD * H * W * Ci * 4                        # f32 residual block
    est += 2 * tD * H * N2 * out_bytes                    # output block
    est += (2 * Mh * N1 + M2 * N2 + H * N2) * 4           # acc1/h1, acc2, temps
    return est


# ---------------------------------------------------------------------------
# Fused Pallas kernel: conv1(+relu) -> conv2(+relu) -> +x, one (n, d-tile) each
# ---------------------------------------------------------------------------
def _resblock_kernel(xs_ref, wb1_ref, b1_ref, wb2_ref, b2_ref, m_ref, res_ref,
                     o_ref, *, H, W, Co, tD, Hx):
    f32 = jnp.float32
    Mh = (tD + 2) * Hx + 2          # conv1 output rows (incl. interleaved junk)
    M2 = tD * Hx                    # conv2 output rows (incl. interleaved junk)

    # ---- conv1: stride-1 transposed conv (taps pre-flipped on host) --------
    # 9 (kd, kh) taps; the kw taps live inside wb1's band.  Each dot is a real
    # 2D MXU matmul: (Mh, (W+4)*Ci) x ((W+4)*Ci, (W+2)*Co), f32 accumulation.
    acc1 = jnp.zeros((Mh, (W + 2) * Co), f32)
    for kd in range(3):
        for kh in range(3):
            s = kd * Hx + kh
            acc1 = acc1 + jnp.dot(xs_ref[0, 0, s:s + Mh, :],
                                  wb1_ref[kd * 3 + kh],
                                  preferred_element_type=f32)
    # Host-precomputed validity mask reproduces the zero padding conv2 sees at
    # the D/H boundaries (W borders are folded into zeroed rows of wb2).
    h1 = (jnp.maximum(acc1 + b1_ref[0], 0.0) * m_ref[0]).astype(wb2_ref.dtype)

    # ---- conv2 + bias + relu ------------------------------------------------
    acc2 = jnp.zeros((M2, W * Co), f32)
    for kd in range(3):
        for kh in range(3):
            s = kd * Hx + kh
            acc2 = acc2 + jnp.dot(h1[s:s + M2], wb2_ref[kd * 3 + kh],
                                  preferred_element_type=f32)
    out = jnp.maximum(acc2 + b2_ref[0], 0.0)

    # ---- compact (drop H-halo junk rows) + residual add (f32, lane-aligned) -
    for d in range(tD):
        o_ref[0, d * H:(d + 1) * H, :] = (
            out[d * Hx:d * Hx + H] + res_ref[0, d * H:(d + 1) * H, :]
        ).astype(o_ref.dtype)


# ---------------------------------------------------------------------------
# resblock_up forward (stride == 1)
# ---------------------------------------------------------------------------
@functools.partial(jax.jit, static_argnames=("stride", "d_tile", "compute_dtype",
                                              "vmem_budget_bytes"))
def resblock_up_forward(x, params, stride=1, *, d_tile=None,
                        compute_dtype=jnp.bfloat16,
                        vmem_budget_bytes=36 * 1024 * 1024):
    if stride != 1:
        # TODO(synk): see module-level comment -- no consistent dense equivalent.
        raise NotImplementedError("stride != 1 is not supported")

    N, D, H, W, Ci = x.shape
    w1, b1, w2, b2 = params["w1"], params["b1"], params["w2"], params["b2"]
    Co = w1.shape[-1]
    assert Ci == Co, "stride==1 residual add requires input_dim == output_dim"

    Hx, Wx = H + 4, W + 4
    K1, N1 = Wx * Ci, (W + 2) * Co
    K2, N2 = N1, W * Co
    cd_bytes = jnp.dtype(compute_dtype).itemsize
    out_bytes = jnp.dtype(x.dtype).itemsize

    # D-tile: largest divisor of D (<= optional cap) whose working set fits the
    # VMEM budget -- usually the whole D, so steps are few and fat.
    cap = D if d_tile is None else max(1, min(int(d_tile), D))
    tD, est = 1, _vmem_estimate(1, D, H, W, Ci, Co, cd_bytes, out_bytes)
    for t in range(1, cap + 1):
        if D % t == 0:
            e = _vmem_estimate(t, D, H, W, Ci, Co, cd_bytes, out_bytes)
            if e <= vmem_budget_bytes:
                tD, est = t, e
    nDt = D // tD
    Rtot = (tD + 4) * Hx + 4       # slab rows (incl. 4 zero alignment rows)
    Mh = (tD + 2) * Hx + 2         # conv1 rows
    # Static invariants: the largest slab row touched by any conv1 tap is
    # Rtot-1, and taps of h1 rows that feed *kept* conv2 outputs never reach
    # the 4 zero alignment rows.
    assert (Mh - 1) + 2 * Hx + 2 == Rtot - 1
    assert (tD + 3) * Hx + (H + 3) <= (tD + 4) * Hx - 1

    # conv1 == conv with the spatially flipped kernel; fold kw taps (and
    # conv2's W-boundary zero padding) into banded weight matrices.
    wb1 = _band_weights(jnp.flip(w1, (0, 1, 2)), W + 2).astype(compute_dtype)
    wb2 = _band_weights(w2, W)
    wvalid = (jnp.arange(W + 2) >= 1) & (jnp.arange(W + 2) <= W)
    wb2 = (wb2 * jnp.repeat(wvalid, Co)[None, :, None]).astype(compute_dtype)
    b1t = jnp.tile(b1, W + 2).reshape(1, N1).astype(jnp.float32)
    b2t = jnp.tile(b2, W).reshape(1, N2).astype(jnp.float32)

    # h1 validity mask per d-tile (D/H boundary zero padding) -- static,
    # computed with numpy so nothing runs per grid step.
    r = np.arange(Mh)
    masks = []
    for dt in range(nDt):
        d0 = dt * tD
        dg = d0 - 1 + r // Hx
        hg = r % Hx - 1
        masks.append(((dg >= 0) & (dg < D) & (hg >= 0) & (hg < H))
                     .astype(np.float32))
    h1_mask = jnp.asarray(np.stack(masks)[:, :, None])        # (nDt, Mh, 1)

    # Haloed x slabs per (n, d-tile): rows = (d, h), lanes = (w, ci), plus 4
    # zero alignment rows appended once on the host (no per-step zeroing).
    xpad = jnp.pad(x, ((0, 0), (2, 2), (2, 2), (2, 2), (0, 0)))
    slabs = jnp.stack([xpad[:, dt * tD: dt * tD + tD + 4] for dt in range(nDt)],
                      axis=1)                                  # (N,nDt,tD+4,Hx,Wx,Ci)
    slabs = slabs.reshape(N, nDt, (tD + 4) * Hx, Wx * Ci)
    x_slab = jnp.pad(slabs, ((0, 0), (0, 0), (0, 4), (0, 0))).astype(compute_dtype)

    # Residual branch: original un-padded x in f32, lane-aligned (w, ci).
    x_res = x.reshape(N, D * H, W * Ci).astype(jnp.float32)

    kernel = functools.partial(_resblock_kernel, H=H, W=W, Co=Co, tD=tD, Hx=Hx)

    vmem_limit = int(min(96 * 1024 * 1024,
                         max(32 * 1024 * 1024, int(1.5 * est) + (8 << 20))))

    out2d = pl.pallas_call(
        kernel,
        out_shape=jax.ShapeDtypeStruct((N, D * H, N2), x.dtype),
        grid_spec=pltpu.PrefetchScalarGridSpec(
            num_scalar_prefetch=0,
            grid=(N, nDt),
            in_specs=[
                pl.BlockSpec((1, 1, Rtot, K1), lambda n, d: (n, d, 0, 0)),  # x slab
                pl.BlockSpec((9, K1, N1), lambda n, d: (0, 0, 0)),          # wb1
                pl.BlockSpec((1, N1), lambda n, d: (0, 0)),                 # b1
                pl.BlockSpec((9, K2, N2), lambda n, d: (0, 0, 0)),          # wb2
                pl.BlockSpec((1, N2), lambda n, d: (0, 0)),                 # b2
                pl.BlockSpec((1, Mh, 1), lambda n, d: (d, 0, 0)),           # h1 mask
                pl.BlockSpec((1, tD * H, W * Ci), lambda n, d: (n, d, 0)),  # residual
            ],
            out_specs=pl.BlockSpec((1, tD * H, N2), lambda n, d: (n, d, 0)),
        ),
        compiler_params=pltpu.CompilerParams(
            dimension_semantics=("parallel", "arbitrary"),
            vmem_limit_bytes=vmem_limit,
        ),
    )(x_slab, wb1, b1t, wb2, b2t, h1_mask, x_res)

    # Free reshape back to NDHWC (kernel output is already compacted).
    return out2d.reshape(N, D, H, W, Co)


def init_params(key, input_dim, output_dim):
    k1, k2, k3, k4 = jax.random.split(key, 4)
    scale1 = 1.0 / jnp.sqrt(27.0 * input_dim)
    scale2 = 1.0 / jnp.sqrt(27.0 * output_dim)
    return {
        "w1": jax.random.normal(k1, (3, 3, 3, input_dim, output_dim), jnp.float32) * scale1,
        "b1": jax.random.normal(k2, (output_dim,), jnp.float32) * 0.1,
        "w2": jax.random.normal(k3, (3, 3, 3, output_dim, output_dim), jnp.float32) * scale2,
        "b2": jax.random.normal(k4, (output_dim,), jnp.float32) * 0.1,
    }


# ---------------------------------------------------------------------------
# Pure-JAX reference (for correctness verification)
# ---------------------------------------------------------------------------
def _conv_ref(x, w, b):
    y = lax.conv_general_dilated(
        x, w, window_strides=(1, 1, 1), padding="SAME",
        dimension_numbers=("NDHWC", "DHWIO", "NDHWC"))
    return y + b


def resblock_up_ref(x, params):
    h1 = jax.nn.relu(_conv_ref(x, jnp.flip(params["w1"], axis=(0, 1, 2)), params["b1"]))
    h2 = jax.nn.relu(_conv_ref(h1, params["w2"], params["b2"]))
    return h2 + x


if __name__ == "__main__":
    key = jax.random.PRNGKey(0)
    kx, kp = jax.random.split(key)

    # input_dim == output_dim == 16 so W*Co = 128 (lane-dense output), stride == 1
    N, D, H, W, C = 2, 8, 8, 8, 16
    x = jax.random.normal(kx, (N, D, H, W, C), jnp.float32)
    params = init_params(kp, C, C)

    ref = jax.block_until_ready(resblock_up_ref(x, params))

    # Exact-math path (f32 MXU operands) -- tight check against the reference.
    out_f32 = jax.block_until_ready(
        resblock_up_forward(x, params, stride=1, compute_dtype=jnp.float32))
    assert out_f32.shape == (N, D, H, W, C)
    err = float(jnp.max(jnp.abs(out_f32 - ref)))
    assert err < 1e-3, f"f32 kernel mismatch vs reference: {err}"

    # Fast path (bf16 MXU operands, f32 accumulation, f32 residual) -- relative
    # check against the f32 kernel output.
    out_bf16 = jax.block_until_ready(
        resblock_up_forward(x, params, stride=1, compute_dtype=jnp.bfloat16))
    rel = float(jnp.max(jnp.abs(out_bf16 - out_f32)) /
                (jnp.max(jnp.abs(out_f32)) + 1e-6))
    assert rel < 5e-2, f"bf16 kernel relative mismatch vs f32 kernel: {rel}"

    print("KERNEL_OK")
</pallas_src>

<mosaic_0001>
module attributes {stable_mosaic.version = 11 : i64} {
  func.func @_resblock_kernel(%arg0: i32, %arg1: i32, %arg2: memref<1x1x148x192xf32, #tpu.memory_space<vmem>>, %arg3: memref<9x192x160xf32, #tpu.memory_space<vmem>>, %arg4: memref<1x160xf32, #tpu.memory_space<vmem>>, %arg5: memref<9x160x128xf32, #tpu.memory_space<vmem>>, %arg6: memref<1x128xf32, #tpu.memory_space<vmem>>, %arg7: memref<1x122x1xf32, #tpu.memory_space<vmem>>, %arg8: memref<1x64x128xf32, #tpu.memory_space<vmem>>, %arg9: memref<1x64x128xf32, #tpu.memory_space<vmem>>) attributes {dimension_semantics = [#tpu.dimension_semantics<parallel>, #tpu.dimension_semantics<arbitrary>], iteration_bounds = array<i64: 2, 1>, scalar_prefetch = 0 : i64, scratch_operands = 0 : i64, tpu.core_type = #tpu.core_type<tc>, window_params = [{transform_indices = @transform_0, window_bounds = array<i64: 1, 1, 148, 192>}, {pipeline_mode = #tpu.pipeline_mode<synchronous>, transform_indices = @transform_1, window_bounds = array<i64: 9, 192, 160>}, {pipeline_mode = #tpu.pipeline_mode<synchronous>, transform_indices = @transform_2, window_bounds = array<i64: 1, 160>}, {pipeline_mode = #tpu.pipeline_mode<synchronous>, transform_indices = @transform_3, window_bounds = array<i64: 9, 160, 128>}, {pipeline_mode = #tpu.pipeline_mode<synchronous>, transform_indices = @transform_4, window_bounds = array<i64: 1, 128>}, {transform_indices = @transform_5, window_bounds = array<i64: 1, 122, 1>}, {transform_indices = @transform_6, window_bounds = array<i64: 1, 64, 128>}, {transform_indices = @transform_7, window_bounds = array<i64: 1, 64, 128>}]} {
    %cst = arith.constant 0.000000e+00 : f32
    %0 = vector.broadcast %cst : f32 to vector<122x160xf32>
    %c0 = arith.constant 0 : index
    %c0_0 = arith.constant 0 : index
    %c0_1 = arith.constant 0 : index
    %c0_2 = arith.constant 0 : index
    %1 = vector.load %arg2[%c0, %c0_0, %c0_1, %c0_2] : memref<1x1x148x192xf32, #tpu.memory_space<vmem>>, vector<1x1x122x192xf32>
    %2 = vector.shape_cast %1 : vector<1x1x122x192xf32> to vector<122x192xf32>
    %c0_3 = arith.constant 0 : index
    %c0_4 = arith.constant 0 : index
    %c0_5 = arith.constant 0 : index
    %3 = vector.load %arg3[%c0_3, %c0_4, %c0_5] : memref<9x192x160xf32, #tpu.memory_space<vmem>>, vector<1x192x160xf32>
    %4 = vector.shape_cast %3 : vector<1x192x160xf32> to vector<192x160xf32>
    %cst_6 = arith.constant dense<0.000000e+00> : vector<122x160xf32>
    %5 = tpu.matmul %2, %4, %cst_6 {dimension_numbers = #tpu.dot_dimension_numbers<[1], [0], [0], [1], [0, 0, 1, 1], [], []>} : vector<122x192xf32>, vector<192x160xf32>, vector<122x160xf32> -> vector<122x160xf32>
    %6 = arith.addf %0, %5 : vector<122x160xf32>
    %c0_7 = arith.constant 0 : index
    %c0_8 = arith.constant 0 : index
    %c1 = arith.constant 1 : index
    %c0_9 = arith.constant 0 : index
    %7 = vector.load %arg2[%c0_7, %c0_8, %c1, %c0_9] : memref<1x1x148x192xf32, #tpu.memory_space<vmem>>, vector<1x1x122x192xf32>
    %8 = vector.shape_cast %7 : vector<1x1x122x192xf32> to vector<122x192xf32>
    %c1_10 = arith.constant 1 : index
    %c0_11 = arith.constant 0 : index
    %c0_12 = arith.constant 0 : index
    %9 = vector.load %arg3[%c1_10, %c0_11, %c0_12] : memref<9x192x160xf32, #tpu.memory_space<vmem>>, vector<1x192x160xf32>
    %10 = vector.shape_cast %9 : vector<1x192x160xf32> to vector<192x160xf32>
    %cst_13 = arith.constant dense<0.000000e+00> : vector<122x160xf32>
    %11 = tpu.matmul %8, %10, %cst_13 {dimension_numbers = #tpu.dot_dimension_numbers<[1], [0], [0], [1], [0, 0, 1, 1], [], []>} : vector<122x192xf32>, vector<192x160xf32>, vector<122x160xf32> -> vector<122x160xf32>
    %12 = arith.addf %6, %11 : vector<122x160xf32>
    %c0_14 = arith.constant 0 : index
    %c0_15 = arith.constant 0 : index
    %c2 = arith.constant 2 : index
    %c0_16 = arith.constant 0 : index
    %13 = vector.load %arg2[%c0_14, %c0_15, %c2, %c0_16] : memref<1x1x148x192xf32, #tpu.memory_space<vmem>>, vector<1x1x122x192xf32>
    %14 = vector.shape_cast %13 : vector<1x1x122x192xf32> to vector<122x192xf32>
    %c2_17 = arith.constant 2 : index
    %c0_18 = arith.constant 0 : index
    %c0_19 = arith.constant 0 : index
    %15 = vector.load %arg3[%c2_17, %c0_18, %c0_19] : memref<9x192x160xf32, #tpu.memory_space<vmem>>, vector<1x192x160xf32>
    %16 = vector.shape_cast %15 : vector<1x192x160xf32> to vector<192x160xf32>
    %cst_20 = arith.constant dense<0.000000e+00> : vector<122x160xf32>
    %17 = tpu.matmul %14, %16, %cst_20 {dimension_numbers = #tpu.dot_dimension_numbers<[1], [0], [0], [1], [0, 0, 1, 1], [], []>} : vector<122x192xf32>, vector<192x160xf32>, vector<122x160xf32> -> vector<122x160xf32>
    %18 = arith.addf %12, %17 : vector<122x160xf32>
    %c0_21 = arith.constant 0 : index
    %c0_22 = arith.constant 0 : index
    %c12 = arith.constant 12 : index
    %c0_23 = arith.constant 0 : index
    %19 = vector.load %arg2[%c0_21, %c0_22, %c12, %c0_23] : memref<1x1x148x192xf32, #tpu.memory_space<vmem>>, vector<1x1x122x192xf32>
    %20 = vector.shape_cast %19 : vector<1x1x122x192xf32> to vector<122x192xf32>
    %c3 = arith.constant 3 : index
    %c0_24 = arith.constant 0 : index
    %c0_25 = arith.constant 0 : index
    %21 = vector.load %arg3[%c3, %c0_24, %c0_25] : memref<9x192x160xf32, #tpu.memory_space<vmem>>, vector<1x192x160xf32>
    %22 = vector.shape_cast %21 : vector<1x192x160xf32> to vector<192x160xf32>
    %cst_26 = arith.constant dense<0.000000e+00> : vector<122x160xf32>
    %23 = tpu.matmul %20, %22, %cst_26 {dimension_numbers = #tpu.dot_dimension_numbers<[1], [0], [0], [1], [0, 0, 1, 1], [], []>} : vector<122x192xf32>, vector<192x160xf32>, vector<122x160xf32> -> vector<122x160xf32>
    %24 = arith.addf %18, %23 : vector<122x160xf32>
    %c0_27 = arith.constant 0 : index
    %c0_28 = arith.constant 0 : index
    %c13 = arith.constant 13 : index
    %c0_29 = arith.constant 0 : index
    %25 = vector.load %arg2[%c0_27, %c0_28, %c13, %c0_29] : memref<1x1x148x192xf32, #tpu.memory_space<vmem>>, vector<1x1x122x192xf32>
    %26 = vector.shape_cast %25 : vector<1x1x122x192xf32> to vector<122x192xf32>
    %c4 = arith.constant 4 : index
    %c0_30 = arith.constant 0 : index
    %c0_31 = arith.constant 0 : index
    %27 = vector.load %arg3[%c4, %c0_30, %c0_31] : memref<9x192x160xf32, #tpu.memory_space<vmem>>, vector<1x192x160xf32>
    %28 = vector.shape_cast %27 : vector<1x192x160xf32> to vector<192x160xf32>
    %cst_32 = arith.constant dense<0.000000e+00> : vector<122x160xf32>
    %29 = tpu.matmul %26, %28, %cst_32 {dimension_numbers = #tpu.dot_dimension_numbers<[1], [0], [0], [1], [0, 0, 1, 1], [], []>} : vector<122x192xf32>, vector<192x160xf32>, vector<122x160xf32> -> vector<122x160xf32>
    %30 = arith.addf %24, %29 : vector<122x160xf32>
    %c0_33 = arith.constant 0 : index
    %c0_34 = arith.constant 0 : index
    %c14 = arith.constant 14 : index
    %c0_35 = arith.constant 0 : index
    %31 = vector.load %arg2[%c0_33, %c0_34, %c14, %c0_35] : memref<1x1x148x192xf32, #tpu.memory_space<vmem>>, vector<1x1x122x192xf32>
    %32 = vector.shape_cast %31 : vector<1x1x122x192xf32> to vector<122x192xf32>
    %c5 = arith.constant 5 : index
    %c0_36 = arith.constant 0 : index
    %c0_37 = arith.constant 0 : index
    %33 = vector.load %arg3[%c5, %c0_36, %c0_37] : memref<9x192x160xf32, #tpu.memory_space<vmem>>, vector<1x192x160xf32>
    %34 = vector.shape_cast %33 : vector<1x192x160xf32> to vector<192x160xf32>
    %cst_38 = arith.constant dense<0.000000e+00> : vector<122x160xf32>
    %35 = tpu.matmul %32, %34, %cst_38 {dimension_numbers = #tpu.dot_dimension_numbers<[1], [0], [0], [1], [0, 0, 1, 1], [], []>} : vector<122x192xf32>, vector<192x160xf32>, vector<122x160xf32> -> vector<122x160xf32>
    %36 = arith.addf %30, %35 : vector<122x160xf32>
    %c0_39 = arith.constant 0 : index
    %c0_40 = arith.constant 0 : index
    %c24 = arith.constant 24 : index
    %c0_41 = arith.constant 0 : index
    %37 = vector.load %arg2[%c0_39, %c0_40, %c24, %c0_41] : memref<1x1x148x192xf32, #tpu.memory_space<vmem>>, vector<1x1x122x192xf32>
    %38 = vector.shape_cast %37 : vector<1x1x122x192xf32> to vector<122x192xf32>
    %c6 = arith.constant 6 : index
    %c0_42 = arith.constant 0 : index
    %c0_43 = arith.constant 0 : index
    %39 = vector.load %arg3[%c6, %c0_42, %c0_43] : memref<9x192x160xf32, #tpu.memory_space<vmem>>, vector<1x192x160xf32>
    %40 = vector.shape_cast %39 : vector<1x192x160xf32> to vector<192x160xf32>
    %cst_44 = arith.constant dense<0.000000e+00> : vector<122x160xf32>
    %41 = tpu.matmul %38, %40, %cst_44 {dimension_numbers = #tpu.dot_dimension_numbers<[1], [0], [0], [1], [0, 0, 1, 1], [], []>} : vector<122x192xf32>, vector<192x160xf32>, vector<122x160xf32> -> vector<122x160xf32>
    %42 = arith.addf %36, %41 : vector<122x160xf32>
    %c0_45 = arith.constant 0 : index
    %c0_46 = arith.constant 0 : index
    %c25 = arith.constant 25 : index
    %c0_47 = arith.constant 0 : index
    %43 = vector.load %arg2[%c0_45, %c0_46, %c25, %c0_47] : memref<1x1x148x192xf32, #tpu.memory_space<vmem>>, vector<1x1x122x192xf32>
    %44 = vector.shape_cast %43 : vector<1x1x122x192xf32> to vector<122x192xf32>
    %c7 = arith.constant 7 : index
    %c0_48 = arith.constant 0 : index
    %c0_49 = arith.constant 0 : index
    %45 = vector.load %arg3[%c7, %c0_48, %c0_49] : memref<9x192x160xf32, #tpu.memory_space<vmem>>, vector<1x192x160xf32>
    %46 = vector.shape_cast %45 : vector<1x192x160xf32> to vector<192x160xf32>
    %cst_50 = arith.constant dense<0.000000e+00> : vector<122x160xf32>
    %47 = tpu.matmul %44, %46, %cst_50 {dimension_numbers = #tpu.dot_dimension_numbers<[1], [0], [0], [1], [0, 0, 1, 1], [], []>} : vector<122x192xf32>, vector<192x160xf32>, vector<122x160xf32> -> vector<122x160xf32>
    %48 = arith.addf %42, %47 : vector<122x160xf32>
    %c0_51 = arith.constant 0 : index
    %c0_52 = arith.constant 0 : index
    %c26 = arith.constant 26 : index
    %c0_53 = arith.constant 0 : index
    %49 = vector.load %arg2[%c0_51, %c0_52, %c26, %c0_53] : memref<1x1x148x192xf32, #tpu.memory_space<vmem>>, vector<1x1x122x192xf32>
    %50 = vector.shape_cast %49 : vector<1x1x122x192xf32> to vector<122x192xf32>
    %c8 = arith.constant 8 : index
    %c0_54 = arith.constant 0 : index
    %c0_55 = arith.constant 0 : index
    %51 = vector.load %arg3[%c8, %c0_54, %c0_55] : memref<9x192x160xf32, #tpu.memory_space<vmem>>, vector<1x192x160xf32>
    %52 = vector.shape_cast %51 : vector<1x192x160xf32> to vector<192x160xf32>
    %cst_56 = arith.constant dense<0.000000e+00> : vector<122x160xf32>
    %53 = tpu.matmul %50, %52, %cst_56 {dimension_numbers = #tpu.dot_dimension_numbers<[1], [0], [0], [1], [0, 0, 1, 1], [], []>} : vector<122x192xf32>, vector<192x160xf32>, vector<122x160xf32> -> vector<122x160xf32>
    %54 = arith.addf %48, %53 : vector<122x160xf32>
    %c0_57 = arith.constant 0 : index
    %c0_58 = arith.constant 0 : index
    %55 = vector.load %arg4[%c0_57, %c0_58] : memref<1x160xf32, #tpu.memory_space<vmem>>, vector<1x160xf32>
    %56 = vector.shape_cast %55 : vector<1x160xf32> to vector<160xf32>
    %57 = vector.shape_cast %56 : vector<160xf32> to vector<1x160xf32>
    %58 = vector.broadcast %57 : vector<1x160xf32> to vector<122x160xf32>
    %59 = arith.addf %54, %58 : vector<122x160xf32>
    %cst_59 = arith.constant 0.000000e+00 : f32
    %60 = vector.broadcast %cst_59 : f32 to vector<122x160xf32>
    %61 = arith.maximumf %59, %60 : vector<122x160xf32>
    %c0_60 = arith.constant 0 : index
    %c0_61 = arith.constant 0 : index
    %c0_62 = arith.constant 0 : index
    %62 = vector.load %arg7[%c0_60, %c0_61, %c0_62] : memref<1x122x1xf32, #tpu.memory_space<vmem>>, vector<1x122x1xf32>
    %63 = vector.shape_cast %62 : vector<1x122x1xf32> to vector<122x1xf32>
    %64 = vector.broadcast %63 : vector<122x1xf32> to vector<122x160xf32>
    %65 = arith.mulf %61, %64 : vector<122x160xf32>
    %cst_63 = arith.constant 0.000000e+00 : f32
    %66 = vector.broadcast %cst_63 : f32 to vector<96x128xf32>
    %67 = vector.extract_strided_slice %65 {offsets = [0, 0], sizes = [96, 160], strides = [1, 1]} : vector<122x160xf32> to vector<96x160xf32>
    %c0_64 = arith.constant 0 : index
    %c0_65 = arith.constant 0 : index
    %c0_66 = arith.constant 0 : index
    %68 = vector.load %arg5[%c0_64, %c0_65, %c0_66] : memref<9x160x128xf32, #tpu.memory_space<vmem>>, vector<1x160x128xf32>
    %69 = vector.shape_cast %68 : vector<1x160x128xf32> to vector<160x128xf32>
    %cst_67 = arith.constant dense<0.000000e+00> : vector<96x128xf32>
    %70 = tpu.matmul %67, %69, %cst_67 {dimension_numbers = #tpu.dot_dimension_numbers<[1], [0], [0], [1], [0, 0, 1, 1], [], []>} : vector<96x160xf32>, vector<160x128xf32>, vector<96x128xf32> -> vector<96x128xf32>
    %71 = arith.addf %66, %70 : vector<96x128xf32>
    %72 = vector.extract_strided_slice %65 {offsets = [1, 0], sizes = [96, 160], strides = [1, 1]} : vector<122x160xf32> to vector<96x160xf32>
    %c1_68 = arith.constant 1 : index
    %c0_69 = arith.constant 0 : index
    %c0_70 = arith.constant 0 : index
    %73 = vector.load %arg5[%c1_68, %c0_69, %c0_70] : memref<9x160x128xf32, #tpu.memory_space<vmem>>, vector<1x160x128xf32>
    %74 = vector.shape_cast %73 : vector<1x160x128xf32> to vector<160x128xf32>
    %cst_71 = arith.constant dense<0.000000e+00> : vector<96x128xf32>
    %75 = tpu.matmul %72, %74, %cst_71 {dimension_numbers = #tpu.dot_dimension_numbers<[1], [0], [0], [1], [0, 0, 1, 1], [], []>} : vector<96x160xf32>, vector<160x128xf32>, vector<96x128xf32> -> vector<96x128xf32>
    %76 = arith.addf %71, %75 : vector<96x128xf32>
    %77 = vector.extract_strided_slice %65 {offsets = [2, 0], sizes = [96, 160], strides = [1, 1]} : vector<122x160xf32> to vector<96x160xf32>
    %c2_72 = arith.constant 2 : index
    %c0_73 = arith.constant 0 : index
    %c0_74 = arith.constant 0 : index
    %78 = vector.load %arg5[%c2_72, %c0_73, %c0_74] : memref<9x160x128xf32, #tpu.memory_space<vmem>>, vector<1x160x128xf32>
    %79 = vector.shape_cast %78 : vector<1x160x128xf32> to vector<160x128xf32>
    %cst_75 = arith.constant dense<0.000000e+00> : vector<96x128xf32>
    %80 = tpu.matmul %77, %79, %cst_75 {dimension_numbers = #tpu.dot_dimension_numbers<[1], [0], [0], [1], [0, 0, 1, 1], [], []>} : vector<96x160xf32>, vector<160x128xf32>, vector<96x128xf32> -> vector<96x128xf32>
    %81 = arith.addf %76, %80 : vector<96x128xf32>
    %82 = vector.extract_strided_slice %65 {offsets = [12, 0], sizes = [96, 160], strides = [1, 1]} : vector<122x160xf32> to vector<96x160xf32>
    %c3_76 = arith.constant 3 : index
    %c0_77 = arith.constant 0 : index
    %c0_78 = arith.constant 0 : index
    %83 = vector.load %arg5[%c3_76, %c0_77, %c0_78] : memref<9x160x128xf32, #tpu.memory_space<vmem>>, vector<1x160x128xf32>
    %84 = vector.shape_cast %83 : vector<1x160x128xf32> to vector<160x128xf32>
    %cst_79 = arith.constant dense<0.000000e+00> : vector<96x128xf32>
    %85 = tpu.matmul %82, %84, %cst_79 {dimension_numbers = #tpu.dot_dimension_numbers<[1], [0], [0], [1], [0, 0, 1, 1], [], []>} : vector<96x160xf32>, vector<160x128xf32>, vector<96x128xf32> -> vector<96x128xf32>
    %86 = arith.addf %81, %85 : vector<96x128xf32>
    %87 = vector.extract_strided_slice %65 {offsets = [13, 0], sizes = [96, 160], strides = [1, 1]} : vector<122x160xf32> to vector<96x160xf32>
    %c4_80 = arith.constant 4 : index
    %c0_81 = arith.constant 0 : index
    %c0_82 = arith.constant 0 : index
    %88 = vector.load %arg5[%c4_80, %c0_81, %c0_82] : memref<9x160x128xf32, #tpu.memory_space<vmem>>, vector<1x160x128xf32>
    %89 = vector.shape_cast %88 : vector<1x160x128xf32> to vector<160x128xf32>
    %cst_83 = arith.constant dense<0.000000e+00> : vector<96x128xf32>
    %90 = tpu.matmul %87, %89, %cst_83 {dimension_numbers = #tpu.dot_dimension_numbers<[1], [0], [0], [1], [0, 0, 1, 1], [], []>} : vector<96x160xf32>, vector<160x128xf32>, vector<96x128xf32> -> vector<96x128xf32>
    %91 = arith.addf %86, %90 : vector<96x128xf32>
    %92 = vector.extract_strided_slice %65 {offsets = [14, 0], sizes = [96, 160], strides = [1, 1]} : vector<122x160xf32> to vector<96x160xf32>
    %c5_84 = arith.constant 5 : index
    %c0_85 = arith.constant 0 : index
    %c0_86 = arith.constant 0 : index
    %93 = vector.load %arg5[%c5_84, %c0_85, %c0_86] : memref<9x160x128xf32, #tpu.memory_space<vmem>>, vector<1x160x128xf32>
    %94 = vector.shape_cast %93 : vector<1x160x128xf32> to vector<160x128xf32>
    %cst_87 = arith.constant dense<0.000000e+00> : vector<96x128xf32>
    %95 = tpu.matmul %92, %94, %cst_87 {dimension_numbers = #tpu.dot_dimension_numbers<[1], [0], [0], [1], [0, 0, 1, 1], [], []>} : vector<96x160xf32>, vector<160x128xf32>, vector<96x128xf32> -> vector<96x128xf32>
    %96 = arith.addf %91, %95 : vector<96x128xf32>
    %97 = vector.extract_strided_slice %65 {offsets = [24, 0], sizes = [96, 160], strides = [1, 1]} : vector<122x160xf32> to vector<96x160xf32>
    %c6_88 = arith.constant 6 : index
    %c0_89 = arith.constant 0 : index
    %c0_90 = arith.constant 0 : index
    %98 = vector.load %arg5[%c6_88, %c0_89, %c0_90] : memref<9x160x128xf32, #tpu.memory_space<vmem>>, vector<1x160x128xf32>
    %99 = vector.shape_cast %98 : vector<1x160x128xf32> to vector<160x128xf32>
    %cst_91 = arith.constant dense<0.000000e+00> : vector<96x128xf32>
    %100 = tpu.matmul %97, %99, %cst_91 {dimension_numbers = #tpu.dot_dimension_numbers<[1], [0], [0], [1], [0, 0, 1, 1], [], []>} : vector<96x160xf32>, vector<160x128xf32>, vector<96x128xf32> -> vector<96x128xf32>
    %101 = arith.addf %96, %100 : vector<96x128xf32>
    %102 = vector.extract_strided_slice %65 {offsets = [25, 0], sizes = [96, 160], strides = [1, 1]} : vector<122x160xf32> to vector<96x160xf32>
    %c7_92 = arith.constant 7 : index
    %c0_93 = arith.constant 0 : index
    %c0_94 = arith.constant 0 : index
    %103 = vector.load %arg5[%c7_92, %c0_93, %c0_94] : memref<9x160x128xf32, #tpu.memory_space<vmem>>, vector<1x160x128xf32>
    %104 = vector.shape_cast %103 : vector<1x160x128xf32> to vector<160x128xf32>
    %cst_95 = arith.constant dense<0.000000e+00> : vector<96x128xf32>
    %105 = tpu.matmul %102, %104, %cst_95 {dimension_numbers = #tpu.dot_dimension_numbers<[1], [0], [0], [1], [0, 0, 1, 1], [], []>} : vector<96x160xf32>, vector<160x128xf32>, vector<96x128xf32> -> vector<96x128xf32>
    %106 = arith.addf %101, %105 : vector<96x128xf32>
    %107 = vector.extract_strided_slice %65 {offsets = [26, 0], sizes = [96, 160], strides = [1, 1]} : vector<122x160xf32> to vector<96x160xf32>
    %c8_96 = arith.constant 8 : index
    %c0_97 = arith.constant 0 : index
    %c0_98 = arith.constant 0 : index
    %108 = vector.load %arg5[%c8_96, %c0_97, %c0_98] : memref<9x160x128xf32, #tpu.memory_space<vmem>>, vector<1x160x128xf32>
    %109 = vector.shape_cast %108 : vector<1x160x128xf32> to vector<160x128xf32>
    %cst_99 = arith.constant dense<0.000000e+00> : vector<96x128xf32>
    %110 = tpu.matmul %107, %109, %cst_99 {dimension_numbers = #tpu.dot_dimension_numbers<[1], [0], [0], [1], [0, 0, 1, 1], [], []>} : vector<96x160xf32>, vector<160x128xf32>, vector<96x128xf32> -> vector<96x128xf32>
    %111 = arith.addf %106, %110 : vector<96x128xf32>
    %c0_100 = arith.constant 0 : index
    %c0_101 = arith.constant 0 : index
    %112 = vector.load %arg6[%c0_100, %c0_101] : memref<1x128xf32, #tpu.memory_space<vmem>>, vector<1x128xf32>
    %113 = vector.shape_cast %112 : vector<1x128xf32> to vector<128xf32>
    %114 = vector.shape_cast %113 : vector<128xf32> to vector<1x128xf32>
    %115 = vector.broadcast %114 : vector<1x128xf32> to vector<96x128xf32>
    %116 = arith.addf %111, %115 : vector<96x128xf32>
    %cst_102 = arith.constant 0.000000e+00 : f32
    %117 = vector.broadcast %cst_102 : f32 to vector<96x128xf32>
    %118 = arith.maximumf %116, %117 : vector<96x128xf32>
    %119 = vector.extract_strided_slice %118 {offsets = [0, 0], sizes = [8, 128], strides = [1, 1]} : vector<96x128xf32> to vector<8x128xf32>
    %c0_103 = arith.constant 0 : index
    %c0_104 = arith.constant 0 : index
    %c0_105 = arith.constant 0 : index
    %120 = vector.load %arg8[%c0_103, %c0_104, %c0_105] : memref<1x64x128xf32, #tpu.memory_space<vmem>>, vector<1x8x128xf32>
    %121 = vector.shape_cast %120 : vector<1x8x128xf32> to vector<8x128xf32>
    %122 = arith.addf %119, %121 : vector<8x128xf32>
    %c0_106 = arith.constant 0 : index
    %c0_107 = arith.constant 0 : index
    %c0_108 = arith.constant 0 : index
    %123 = vector.load %arg9[%c0_106, %c0_107, %c0_108] : memref<1x64x128xf32, #tpu.memory_space<vmem>>, vector<1x8x128xf32>
    %124 = vector.shape_cast %123 : vector<1x8x128xf32> to vector<8x128xf32>
    %125 = vector.shape_cast %122 : vector<8x128xf32> to vector<1x8x128xf32>
    tpu.vector_store %arg9[%c0_106, %c0_107, %c0_108], %125 {strides = array<i32>} : memref<1x64x128xf32, #tpu.memory_space<vmem>>, vector<1x8x128xf32>,
    %126 = vector.extract_strided_slice %118 {offsets = [12, 0], sizes = [8, 128], strides = [1, 1]} : vector<96x128xf32> to vector<8x128xf32>
    %c0_109 = arith.constant 0 : index
    %c8_110 = arith.constant 8 : index
    %c0_111 = arith.constant 0 : index
    %127 = vector.load %arg8[%c0_109, %c8_110, %c0_111] : memref<1x64x128xf32, #tpu.memory_space<vmem>>, vector<1x8x128xf32>
    %128 = vector.shape_cast %127 : vector<1x8x128xf32> to vector<8x128xf32>
    %129 = arith.addf %126, %128 : vector<8x128xf32>
    %c0_112 = arith.constant 0 : index
    %c8_113 = arith.constant 8 : index
    %c0_114 = arith.constant 0 : index
    %130 = vector.load %arg9[%c0_112, %c8_113, %c0_114] : memref<1x64x128xf32, #tpu.memory_space<vmem>>, vector<1x8x128xf32>
    %131 = vector.shape_cast %130 : vector<1x8x128xf32> to vector<8x128xf32>
    %132 = vector.shape_cast %129 : vector<8x128xf32> to vector<1x8x128xf32>
    tpu.vector_store %arg9[%c0_112, %c8_113, %c0_114], %132 {strides = array<i32>} : memref<1x64x128xf32, #tpu.memory_space<vmem>>, vector<1x8x128xf32>,
    %133 = vector.extract_strided_slice %118 {offsets = [24, 0], sizes = [8, 128], strides = [1, 1]} : vector<96x128xf32> to vector<8x128xf32>
    %c0_115 = arith.constant 0 : index
    %c16 = arith.constant 16 : index
    %c0_116 = arith.constant 0 : index
    %134 = vector.load %arg8[%c0_115, %c16, %c0_116] : memref<1x64x128xf32, #tpu.memory_space<vmem>>, vector<1x8x128xf32>
    %135 = vector.shape_cast %134 : vector<1x8x128xf32> to vector<8x128xf32>
    %136 = arith.addf %133, %135 : vector<8x128xf32>
    %c0_117 = arith.constant 0 : index
    %c16_118 = arith.constant 16 : index
    %c0_119 = arith.constant 0 : index
    %137 = vector.load %arg9[%c0_117, %c16_118, %c0_119] : memref<1x64x128xf32, #tpu.memory_space<vmem>>, vector<1x8x128xf32>
    %138 = vector.shape_cast %137 : vector<1x8x128xf32> to vector<8x128xf32>
    %139 = vector.shape_cast %136 : vector<8x128xf32> to vector<1x8x128xf32>
    tpu.vector_store %arg9[%c0_117, %c16_118, %c0_119], %139 {strides = array<i32>} : memref<1x64x128xf32, #tpu.memory_space<vmem>>, vector<1x8x128xf32>,
    %140 = vector.extract_strided_slice %118 {offsets = [36, 0], sizes = [8, 128], strides = [1, 1]} : vector<96x128xf32> to vector<8x128xf32>
    %c0_120 = arith.constant 0 : index
    %c24_121 = arith.constant 24 : index
    %c0_122 = arith.constant 0 : index
    %141 = vector.load %arg8[%c0_120, %c24_121, %c0_122] : memref<1x64x128xf32, #tpu.memory_space<vmem>>, vector<1x8x128xf32>
    %142 = vector.shape_cast %141 : vector<1x8x128xf32> to vector<8x128xf32>
    %143 = arith.addf %140, %142 : vector<8x128xf32>
    %c0_123 = arith.constant 0 : index
    %c24_124 = arith.constant 24 : index
    %c0_125 = arith.constant 0 : index
    %144 = vector.load %arg9[%c0_123, %c24_124, %c0_125] : memref<1x64x128xf32, #tpu.memory_space<vmem>>, vector<1x8x128xf32>
    %145 = vector.shape_cast %144 : vector<1x8x128xf32> to vector<8x128xf32>
    %146 = vector.shape_cast %143 : vector<8x128xf32> to vector<1x8x128xf32>
    tpu.vector_store %arg9[%c0_123, %c24_124, %c0_125], %146 {strides = array<i32>} : memref<1x64x128xf32, #tpu.memory_space<vmem>>, vector<1x8x128xf32>,
    %147 = vector.extract_strided_slice %118 {offsets = [48, 0], sizes = [8, 128], strides = [1, 1]} : vector<96x128xf32> to vector<8x128xf32>
    %c0_126 = arith.constant 0 : index
    %c32 = arith.constant 32 : index
    %c0_127 = arith.constant 0 : index
    %148 = vector.load %arg8[%c0_126, %c32, %c0_127] : memref<1x64x128xf32, #tpu.memory_space<vmem>>, vector<1x8x128xf32>
    %149 = vector.shape_cast %148 : vector<1x8x128xf32> to vector<8x128xf32>
    %150 = arith.addf %147, %149 : vector<8x128xf32>
    %c0_128 = arith.constant 0 : index
    %c32_129 = arith.constant 32 : index
    %c0_130 = arith.constant 0 : index
    %151 = vector.load %arg9[%c0_128, %c32_129, %c0_130] : memref<1x64x128xf32, #tpu.memory_space<vmem>>, vector<1x8x128xf32>
    %152 = vector.shape_cast %151 : vector<1x8x128xf32> to vector<8x128xf32>
    %153 = vector.shape_cast %150 : vector<8x128xf32> to vector<1x8x128xf32>
    tpu.vector_store %arg9[%c0_128, %c32_129, %c0_130], %153 {strides = array<i32>} : memref<1x64x128xf32, #tpu.memory_space<vmem>>, vector<1x8x128xf32>,
    %154 = vector.extract_strided_slice %118 {offsets = [60, 0], sizes = [8, 128], strides = [1, 1]} : vector<96x128xf32> to vector<8x128xf32>
    %c0_131 = arith.constant 0 : index
    %c40 = arith.constant 40 : index
    %c0_132 = arith.constant 0 : index
    %155 = vector.load %arg8[%c0_131, %c40, %c0_132] : memref<1x64x128xf32, #tpu.memory_space<vmem>>, vector<1x8x128xf32>
    %156 = vector.shape_cast %155 : vector<1x8x128xf32> to vector<8x128xf32>
    %157 = arith.addf %154, %156 : vector<8x128xf32>
    %c0_133 = arith.constant 0 : index
    %c40_134 = arith.constant 40 : index
    %c0_135 = arith.constant 0 : index
    %158 = vector.load %arg9[%c0_133, %c40_134, %c0_135] : memref<1x64x128xf32, #tpu.memory_space<vmem>>, vector<1x8x128xf32>
    %159 = vector.shape_cast %158 : vector<1x8x128xf32> to vector<8x128xf32>
    %160 = vector.shape_cast %157 : vector<8x128xf32> to vector<1x8x128xf32>
    tpu.vector_store %arg9[%c0_133, %c40_134, %c0_135], %160 {strides = array<i32>} : memref<1x64x128xf32, #tpu.memory_space<vmem>>, vector<1x8x128xf32>,
    %161 = vector.extract_strided_slice %118 {offsets = [72, 0], sizes = [8, 128], strides = [1, 1]} : vector<96x128xf32> to vector<8x128xf32>
    %c0_136 = arith.constant 0 : index
    %c48 = arith.constant 48 : index
    %c0_137 = arith.constant 0 : index
    %162 = vector.load %arg8[%c0_136, %c48, %c0_137] : memref<1x64x128xf32, #tpu.memory_space<vmem>>, vector<1x8x128xf32>
    %163 = vector.shape_cast %162 : vector<1x8x128xf32> to vector<8x128xf32>
    %164 = arith.addf %161, %163 : vector<8x128xf32>
    %c0_138 = arith.constant 0 : index
    %c48_139 = arith.constant 48 : index
    %c0_140 = arith.constant 0 : index
    %165 = vector.load %arg9[%c0_138, %c48_139, %c0_140] : memref<1x64x128xf32, #tpu.memory_space<vmem>>, vector<1x8x128xf32>
    %166 = vector.shape_cast %165 : vector<1x8x128xf32> to vector<8x128xf32>
    %167 = vector.shape_cast %164 : vector<8x128xf32> to vector<1x8x128xf32>
    tpu.vector_store %arg9[%c0_138, %c48_139, %c0_140], %167 {strides = array<i32>} : memref<1x64x128xf32, #tpu.memory_space<vmem>>, vector<1x8x128xf32>,
    %168 = vector.extract_strided_slice %118 {offsets = [84, 0], sizes = [8, 128], strides = [1, 1]} : vector<96x128xf32> to vector<8x128xf32>
    %c0_141 = arith.constant 0 : index
    %c56 = arith.constant 56 : index
    %c0_142 = arith.constant 0 : index
    %169 = vector.load %arg8[%c0_141, %c56, %c0_142] : memref<1x64x128xf32, #tpu.memory_space<vmem>>, vector<1x8x128xf32>
    %170 = vector.shape_cast %169 : vector<1x8x128xf32> to vector<8x128xf32>
    %171 = arith.addf %168, %170 : vector<8x128xf32>
    %c0_143 = arith.constant 0 : index
    %c56_144 = arith.constant 56 : index
    %c0_145 = arith.constant 0 : index
    %172 = vector.load %arg9[%c0_143, %c56_144, %c0_145] : memref<1x64x128xf32, #tpu.memory_space<vmem>>, vector<1x8x128xf32>
    %173 = vector.shape_cast %172 : vector<1x8x128xf32> to vector<8x128xf32>
    %174 = vector.shape_cast %171 : vector<8x128xf32> to vector<1x8x128xf32>
    tpu.vector_store %arg9[%c0_143, %c56_144, %c0_145], %174 {strides = array<i32>} : memref<1x64x128xf32, #tpu.memory_space<vmem>>, vector<1x8x128xf32>,
    return
  }
  func.func @transform_0(%arg0: i32, %arg1: i32) -> (i32, i32, i32, i32) {
    %c0_i32 = arith.constant 0 : i32
    %c0_i32_0 = arith.constant 0 : i32
    %c0_i32_1 = arith.constant 0 : i32
    return %arg0, %arg1, %c0_i32, %c0_i32_0 : i32, i32, i32, i32
  }
  func.func @transform_1(%arg0: i32, %arg1: i32) -> (i32, i32, i32) {
    %c0_i32 = arith.constant 0 : i32
    %c0_i32_0 = arith.constant 0 : i32
    %c0_i32_1 = arith.constant 0 : i32
    %c0_i32_2 = arith.constant 0 : i32
    return %c0_i32, %c0_i32_0, %c0_i32_1 : i32, i32, i32
  }
  func.func @transform_2(%arg0: i32, %arg1: i32) -> (i32, i32) {
    %c0_i32 = arith.constant 0 : i32
    %c0_i32_0 = arith.constant 0 : i32
    %c0_i32_1 = arith.constant 0 : i32
    return %c0_i32, %c0_i32_0 : i32, i32
  }
  func.func @transform_3(%arg0: i32, %arg1: i32) -> (i32, i32, i32) {
    %c0_i32 = arith.constant 0 : i32
    %c0_i32_0 = arith.constant 0 : i32
    %c0_i32_1 = arith.constant 0 : i32
    %c0_i32_2 = arith.constant 0 : i32
    return %c0_i32, %c0_i32_0, %c0_i32_1 : i32, i32, i32
  }
  func.func @transform_4(%arg0: i32, %arg1: i32) -> (i32, i32) {
    %c0_i32 = arith.constant 0 : i32
    %c0_i32_0 = arith.constant 0 : i32
    %c0_i32_1 = arith.constant 0 : i32
    return %c0_i32, %c0_i32_0 : i32, i32
  }
  func.func @transform_5(%arg0: i32, %arg1: i32) -> (i32, i32, i32) {
    %c0_i32 = arith.constant 0 : i32
    %c0_i32_0 = arith.constant 0 : i32
    %c0_i32_1 = arith.constant 0 : i32
    return %arg1, %c0_i32, %c0_i32_0 : i32, i32, i32
  }
  func.func @transform_6(%arg0: i32, %arg1: i32) -> (i32, i32, i32) {
    %c0_i32 = arith.constant 0 : i32
    %c0_i32_0 = arith.constant 0 : i32
    return %arg0, %arg1, %c0_i32 : i32, i32, i32
  }
  func.func @transform_7(%arg0: i32, %arg1: i32) -> (i32, i32, i32) {
    %c0_i32 = arith.constant 0 : i32
    %c0_i32_0 = arith.constant 0 : i32
    return %arg0, %arg1, %c0_i32 : i32, i32, i32
  }
}

</mosaic_0001>

<llo_original>
// kernel: tile.13
$region0: #{tile.13}
  #allocation0 [shape = 's32[1]{0}', space=sflag, size = 0x4, scoped, tag = 'scoped memory for tile.13']
  %s0 = inlined_call_operand.vmem [shape: f32[16], index: 0, kind: input, shape index: {}]
  %s1 = inlined_call_operand.vmem [shape: f32[10,16], index: 1, kind: output, shape index: {}]
  // Predicated region
  $region2: #{tile.13} parent=0 // pred_check
    _
  $region3: #{tile.13} parent=0 // pred_check_branch
    %3 = sbr.rel (0) target = $region5
  $region4: #{tile.13} parent=0 // pred_region
    _
  $region5: #{tile.13} parent=0 // pred_fallthru
    _
  %v4 = vld [vmem:[%s0] ss:$0 sm:$0xff]
  %5 = vst [vmem:[%s1] sm:$0xff] %v4
  %s6 = scalar_lea.vmem %s1, 8
  %7 = vst [vmem:[%s6] sm:$0xff] %v4

// kernel: tile.14
$region0: #{tile.14}
  %s0 = inlined_call_operand.vmem [shape: f32[10,16], index: 0, kind: input, shape index: {}]
  %s1 = inlined_call_operand.vmem [shape: f32[1,160], index: 1, kind: output, shape index: {}]
  $region1: #{tile.14} parent=0
    #allocation0 [shape = 'u8[8192]{0}', space=vmem, size = 0x2000, scoped, tag = 'scoped mem for output reshape']
    %s2 = smov 3
    %v3 = vld [vmem:[%s0] ss:$8 sm:%s2]
    %vm4 = vcmask 130048
    %5 = vst.msk [vmem:[#allocation0] ss:$8 sm:$0x3] %vm4, %v3
    %s6 = scalar_lea.vmem %s0, 7
    %v7 = vld [vmem:[%s6] sm:$0x1]
    %8 = vrot.lane.b32.xlu0 %v7, 112
    %v9 = vpop.permute.xlu0 %8
    %vm10 = vcmask 1048448
    %11 = vst.msk [vmem:[#allocation0] sm:$0x1] %vm10, %v9
    %s12 = scalar_lea.vmem %s0, 6
    %v13 = vld [vmem:[%s12] sm:$0x1]
    %14 = vrot.lane.b32.xlu0 %v13, 96
    %v15 = vpop.permute.xlu0 %14
    %vm16 = vcmask 917248
    %17 = vst.msk [vmem:[#allocation0] sm:$0x1] %vm16, %v15
    %s18 = scalar_lea.vmem %s0, 5
    %v19 = vld [vmem:[%s18] sm:$0x1]
    %20 = vrot.lane.b32.xlu0 %v19, 80
    %v21 = vpop.permute.xlu0 %20
    %vm22 = vcmask 786048
    %23 = vst.msk [vmem:[#allocation0] sm:$0x1] %vm22, %v21
    %s24 = scalar_lea.vmem %s0, 4
    %v25 = vld [vmem:[%s24] sm:$0x1]
    %26 = vrot.lane.b32.xlu0 %v25, 64
    %v27 = vpop.permute.xlu0 %26
    %vm28 = vcmask 654848
    %29 = vst.msk [vmem:[#allocation0] sm:$0x1] %vm28, %v27
    %s30 = scalar_lea.vmem %s0, 3
    %v31 = vld [vmem:[%s30] sm:$0x1]
    %32 = vrot.lane.b32.xlu0 %v31, 48
    %v33 = vpop.permute.xlu0 %32
    %vm34 = vcmask 523648
    %35 = vst.msk [vmem:[#allocation0] sm:$0x1] %vm34, %v33
    %s36 = scalar_lea.vmem %s0, 2
    %v37 = vld [vmem:[%s36] sm:$0x1]
    %38 = vrot.lane.b32.xlu0 %v37, 32
    %v39 = vpop.permute.xlu0 %38
    %vm40 = vcmask 392448
    %41 = vst.msk [vmem:[#allocation0] sm:$0x1] %vm40, %v39
    %s42 = scalar_lea.vmem %s0, 1
    %s43 = smov 3
    %v44 = vld [vmem:[%s42] ss:$8 sm:%s43]
    %45 = vrot.lane.b32.xlu0 %v44, 16
    %v46 = vpop.permute.xlu0 %45
    %vm47 = vcmask 261248
    %48 = vst.msk [vmem:[#allocation0] ss:$8 sm:$0x3] %vm47, %v46
    %s50 = sshllo.u32 0, 1
    %v52 = vld [vmem:[#allocation0] sm:%s50]
    %s53 = sshllo.u32 0, 1
    %54 = vst [vmem:[%s1] sm:%s53] %v52
    %s55 = scalar_lea.vmem [#allocation0], 8
    %v56 = vld [vmem:[%s55] sm:%s50]
    %s57 = sshllo.u32 0, 1
    %s58 = scalar_lea.vmem %s1, 1
    %59 = vst [vmem:[%s58] sm:%s57] %v56

// kernel: tile.18
$region0: #{tile.18}
  #allocation0 [shape = 's32[1]{0}', space=sflag, size = 0x4, scoped, tag = 'scoped memory for tile.18']
  %s0 = inlined_call_operand.vmem [shape: f32[16], index: 0, kind: input, shape index: {}]
  %s1 = inlined_call_operand.vmem [shape: f32[8,16], index: 1, kind: output, shape index: {}]
  // Predicated region
  $region2: #{tile.18} parent=0 // pred_check
    _
  $region3: #{tile.18} parent=0 // pred_check_branch
    %3 = sbr.rel (0) target = $region5
  $region4: #{tile.18} parent=0 // pred_region
    _
  $region5: #{tile.18} parent=0 // pred_fallthru
    _
  %v4 = vld [vmem:[%s0] ss:$0 sm:$0xff]
  %5 = vst [vmem:[%s1] sm:$0xff] %v4

// kernel: tile.19
$region0: #{tile.19}
  %s0 = inlined_call_operand.vmem [shape: f32[8,16], index: 0, kind: input, shape index: {}]
  %s1 = inlined_call_operand.vmem [shape: f32[1,128], index: 1, kind: output, shape index: {}]
  $region1: #{tile.19} parent=0
    #allocation0 [shape = 'u8[4096]{0}', space=vmem, size = 0x1000, scoped, tag = 'scoped mem for output reshape']
    %v2 = vld [vmem:[%s0] sm:$0x1]
    %vm3 = vcmask 130048
    %4 = vst.msk [vmem:[#allocation0] sm:$0x1] %vm3, %v2
    %s5 = scalar_lea.vmem %s0, 7
    %v6 = vld [vmem:[%s5] sm:$0x1]
    %7 = vrot.lane.b32.xlu0 %v6, 112
    %v8 = vpop.permute.xlu0 %7
    %vm9 = vcmask 1048448
    %10 = vst.msk [vmem:[#allocation0] sm:$0x1] %vm9, %v8
    %s11 = scalar_lea.vmem %s0, 6
    %v12 = vld [vmem:[%s11] sm:$0x1]
    %13 = vrot.lane.b32.xlu0 %v12, 96
    %v14 = vpop.permute.xlu0 %13
    %vm15 = vcmask 917248
    %16 = vst.msk [vmem:[#allocation0] sm:$0x1] %vm15, %v14
    %s17 = scalar_lea.vmem %s0, 5
    %v18 = vld [vmem:[%s17] sm:$0x1]
    %19 = vrot.lane.b32.xlu0 %v18, 80
    %v20 = vpop.permute.xlu0 %19
    %vm21 = vcmask 786048
    %22 = vst.msk [vmem:[#allocation0] sm:$0x1] %vm21, %v20
    %s23 = scalar_lea.vmem %s0, 4
    %v24 = vld [vmem:[%s23] sm:$0x1]
    %25 = vrot.lane.b32.xlu0 %v24, 64
    %v26 = vpop.permute.xlu0 %25
    %vm27 = vcmask 654848
    %28 = vst.msk [vmem:[#allocation0] sm:$0x1] %vm27, %v26
    %s29 = scalar_lea.vmem %s0, 3
    %v30 = vld [vmem:[%s29] sm:$0x1]
    %31 = vrot.lane.b32.xlu0 %v30, 48
    %v32 = vpop.permute.xlu0 %31
    %vm33 = vcmask 523648
    %34 = vst.msk [vmem:[#allocation0] sm:$0x1] %vm33, %v32
    %s35 = scalar_lea.vmem %s0, 2
    %v36 = vld [vmem:[%s35] sm:$0x1]
    %37 = vrot.lane.b32.xlu0 %v36, 32
    %v38 = vpop.permute.xlu0 %37
    %vm39 = vcmask 392448
    %40 = vst.msk [vmem:[#allocation0] sm:$0x1] %vm39, %v38
    %s41 = scalar_lea.vmem %s0, 1
    %v42 = vld [vmem:[%s41] sm:$0x1]
    %43 = vrot.lane.b32.xlu0 %v42, 16
    %v44 = vpop.permute.xlu0 %43
    %vm45 = vcmask 261248
    %46 = vst.msk [vmem:[#allocation0] sm:$0x1] %vm45, %v44
    %s48 = sshllo.u32 0, 1
    %v50 = vld [vmem:[#allocation0] sm:%s48]
    %s51 = sshllo.u32 0, 1
    %52 = vst [vmem:[%s1] sm:%s51] %v50

// kernel: resblock_up_forward.1
$region0: #{resblock_up_forward.1}
  #allocation0 [shape = 'u32[]', space=smem, size = 0x4, offset = 0x4, fixed_abs, tag = 'smem constant byte address 0x4 - core index']
  #allocation1 [shape = 'u32[144,128]{1,0:T(1,128)}', space=vmem, size = 0x12000, scoped, tag = 'internal scratch']
  %s0 = inlined_call_operand.vmem [shape: f32[2,1,148,192], index: 0, kind: input, shape index: {}]
  %s1 = inlined_call_operand.vmem [shape: f32[9,192,160], index: 1, kind: input, shape index: {}]
  %s2 = inlined_call_operand.vmem [shape: f32[1,160], index: 2, kind: input, shape index: {}]
  %s3 = inlined_call_operand.vmem [shape: f32[9,160,128], index: 3, kind: input, shape index: {}]
  %s4 = inlined_call_operand.vmem [shape: f32[1,128], index: 4, kind: input, shape index: {}]
  %s5 = inlined_call_operand.vmem [shape: f32[1,122,1], index: 5, kind: input, shape index: {}]
  %s6 = inlined_call_operand.vmem [shape: f32[2,64,128], index: 6, kind: input, shape index: {}]
  %s7 = inlined_call_operand.vmem [shape: f32[2,64,128], index: 7, kind: output, shape index: {}]
  %s8 = sld [smem:[#allocation0]]
  $region61: #{resblock_up_forward.1} parent=0
    _
  %s10 = ssub.s32 1, %s8
  %s11 = scalar_select 0, %s10, %s8
  loop: start=0, step=1, limit=4
  $region2: #{resblock_up_forward.1} parent=0 // loop_pre_header
    _
  $region3: #{resblock_up_forward.1} parent=0 // loop_header
    %s13 = sphi 0, %s17
    %p14 = scmp.ge.s32.totalorder %s13, 4
    %s20 = sphi 0, %s32
    %s21 = sphi 0, %s28
    %s22 = sphi 0, %s20
    %s23 = sphi 0, %s21
    %s24 = sphi 0, %s22
    %s25 = sphi 0, %s23
    %s37 = sphi 0, %s39
    %s40 = sphi 0, %s37
    %s41 = sphi 0, %s40
    %s57 = sphi 0, %s41
    %s61 = sphi 0, %s61
    %s63 = sphi 0, %s61
    %s64 = sphi 0, %s63
    %s78 = sphi 0, %s64
    %s82 = sphi 0, %s82
    %s84 = sphi 0, %s82
    %s85 = sphi 0, %s84
    %s99 = sphi 0, %s85
    %s103 = sphi 0, %s103
    %s105 = sphi 0, %s103
    %s106 = sphi 0, %s105
    %s120 = sphi 0, %s106
    %s124 = sphi 0, %s124
    %s126 = sphi 0, %s124
    %s127 = sphi 0, %s126
    %s141 = sphi 0, %s127
    %s147 = sphi 0, %s149
    %s150 = sphi 0, %s147
    %s151 = sphi 0, %s150
    %s167 = sphi 0, %s151
    %s175 = sphi 0, %s177
    %s178 = sphi 0, %s175
    %s179 = sphi 0, %s178
    %s195 = sphi 0, %s179
    %s203 = sphi 0, %s205
    %s206 = sphi 0, %s203
    %s207 = sphi 0, %s206
    %s223 = sphi 0, %s207
  $region4: #{resblock_up_forward.1} parent=0 // loop_header_branch
    %16 = sbr.rel (%p14) target = $region8
  $region5: #{resblock_up_forward.1} parent=0 // loop_body
    %s18 = ssub.s32 %s13, 1
    %s19 = ssub.s32 %s13, 2
    %s26 = sadd.s32 1, %s21
    %p27 = scmp.ge.s32.totalorder %s26, 1
    %s28 = scalar_select %p27, 0, %s26
    %s29 = sadd.s32 1, %s20
    %s30 = scalar_select %p27, %s29, %s20
    %p31 = scmp.ge.s32.totalorder %s30, 2
    %s32 = scalar_select %p31, 0, %s30
    %s33 = ssub.s32 %s20, %s32
    %s34 = ssub.s32 %s21, %s28
    %s35 = sor.u32 %s33, %s34
    %p36 = scmp.eq.s32.totalorder %s35, 0
    %s38 = sadd.s32 %s37, 1
    %s39 = scalar_select %p36, %s37, %s38
    %p42 = pneg %p36
    %p43 = scmp.eq.s32.totalorder %s13, 1
    %p44 = por %p42, %p43
    %p45 = scmp.ne.s32.totalorder %s37, %s40
    %p46 = scmp.eq.s32.totalorder %s13, 0
    %p47 = por %p45, %p46
    %p48 = scmp.ne.s32.totalorder %s37, %s40
    %p49 = scmp.eq.s32.totalorder %s18, 1
    %p50 = por %p48, %p49
    %p51 = scmp.ne.s32.totalorder %s40, %s41
    %p52 = scmp.eq.s32.totalorder %s18, 0
    %p53 = por %p51, %p52
    %p54 = scmp.ne.s32.totalorder %s40, %s41
    %p55 = scmp.eq.s32.totalorder %s19, 1
    %p56 = por %p54, %p55
    %p58 = scmp.ne.s32.totalorder %s41, %s57
    %p59 = scmp.eq.s32.totalorder %s19, 0
    %p60 = por %p58, %p59
    %s62 = sadd.s32 %s61, 1
    %p65 = scmp.eq.s32.totalorder %s13, 1
    %p66 = scmp.ne.s32.totalorder %s61, %s63
    %p67 = scmp.eq.s32.totalorder %s13, 0
    %p68 = por %p66, %p67
    %p69 = scmp.ne.s32.totalorder %s61, %s63
    %p70 = scmp.eq.s32.totalorder %s18, 1
    %p71 = por %p69, %p70
    %p72 = scmp.ne.s32.totalorder %s63, %s64
    %p73 = scmp.eq.s32.totalorder %s18, 0
    %p74 = por %p72, %p73
    %p75 = scmp.ne.s32.totalorder %s63, %s64
    %p76 = scmp.eq.s32.totalorder %s19, 1
    %p77 = por %p75, %p76
    %p79 = scmp.ne.s32.totalorder %s64, %s78
    %p80 = scmp.eq.s32.totalorder %s19, 0
    %p81 = por %p79, %p80
    %s83 = sadd.s32 %s82, 1
    %p86 = scmp.eq.s32.totalorder %s13, 1
    %p87 = scmp.ne.s32.totalorder %s82, %s84
    %p88 = scmp.eq.s32.totalorder %s13, 0
    %p89 = por %p87, %p88
    %p90 = scmp.ne.s32.totalorder %s82, %s84
    %p91 = scmp.eq.s32.totalorder %s18, 1
    %p92 = por %p90, %p91
    %p93 = scmp.ne.s32.totalorder %s84, %s85
    %p94 = scmp.eq.s32.totalorder %s18, 0
    %p95 = por %p93, %p94
    %p96 = scmp.ne.s32.totalorder %s84, %s85
    %p97 = scmp.eq.s32.totalorder %s19, 1
    %p98 = por %p96, %p97
    %p100 = scmp.ne.s32.totalorder %s85, %s99
    %p101 = scmp.eq.s32.totalorder %s19, 0
    %p102 = por %p100, %p101
    %s104 = sadd.s32 %s103, 1
    %p107 = scmp.eq.s32.totalorder %s13, 1
    %p108 = scmp.ne.s32.totalorder %s103, %s105
    %p109 = scmp.eq.s32.totalorder %s13, 0
    %p110 = por %p108, %p109
    %p111 = scmp.ne.s32.totalorder %s103, %s105
    %p112 = scmp.eq.s32.totalorder %s18, 1
    %p113 = por %p111, %p112
    %p114 = scmp.ne.s32.totalorder %s105, %s106
    %p115 = scmp.eq.s32.totalorder %s18, 0
    %p116 = por %p114, %p115
    %p117 = scmp.ne.s32.totalorder %s105, %s106
    %p118 = scmp.eq.s32.totalorder %s19, 1
    %p119 = por %p117, %p118
    %p121 = scmp.ne.s32.totalorder %s106, %s120
    %p122 = scmp.eq.s32.totalorder %s19, 0
    %p123 = por %p121, %p122
    %s125 = sadd.s32 %s124, 1
    %p128 = scmp.eq.s32.totalorder %s13, 1
    %p129 = scmp.ne.s32.totalorder %s124, %s126
    %p130 = scmp.eq.s32.totalorder %s13, 0
    %p131 = por %p129, %p130
    %p132 = scmp.ne.s32.totalorder %s124, %s126
    %p133 = scmp.eq.s32.totalorder %s18, 1
    %p134 = por %p132, %p133
    %p135 = scmp.ne.s32.totalorder %s126, %s127
    %p136 = scmp.eq.s32.totalorder %s18, 0
    %p137 = por %p135, %p136
    %p138 = scmp.ne.s32.totalorder %s126, %s127
    %p139 = scmp.eq.s32.totalorder %s19, 1
    %p140 = por %p138, %p139
    %p142 = scmp.ne.s32.totalorder %s127, %s141
    %p143 = scmp.eq.s32.totalorder %s19, 0
    %p144 = por %p142, %p143
    %s145 = ssub.s32 %s21, %s28
    %p146 = scmp.eq.s32.totalorder %s145, 0
    %s148 = sadd.s32 %s147, 1
    %s149 = scalar_select %p146, %s147, %s148
    %p152 = pneg %p146
    %p153 = scmp.eq.s32.totalorder %s13, 1
    %p154 = por %p152, %p153
    %p155 = scmp.ne.s32.totalorder %s147, %s150
    %p156 = scmp.eq.s32.totalorder %s13, 0
    %p157 = por %p155, %p156
    %p158 = scmp.ne.s32.totalorder %s147, %s150
    %p159 = scmp.eq.s32.totalorder %s18, 1
    %p160 = por %p158, %p159
    %p161 = scmp.ne.s32.totalorder %s150, %s151
    %p162 = scmp.eq.s32.totalorder %s18, 0
    %p163 = por %p161, %p162
    %p164 = scmp.ne.s32.totalorder %s150, %s151
    %p165 = scmp.eq.s32.totalorder %s19, 1
    %p166 = por %p164, %p165
    %p168 = scmp.ne.s32.totalorder %s151, %s167
    %p169 = scmp.eq.s32.totalorder %s19, 0
    %p170 = por %p168, %p169
    %s171 = ssub.s32 %s20, %s32
    %s172 = ssub.s32 %s21, %s28
    %s173 = sor.u32 %s171, %s172
    %p174 = scmp.eq.s32.totalorder %s173, 0
    %s176 = sadd.s32 %s175, 1
    %s177 = scalar_select %p174, %s175, %s176
    %p180 = pneg %p174
    %p181 = scmp.eq.s32.totalorder %s13, 1
    %p182 = por %p180, %p181
    %p183 = scmp.ne.s32.totalorder %s175, %s178
    %p184 = scmp.eq.s32.totalorder %s13, 0
    %p185 = por %p183, %p184
    %p186 = scmp.ne.s32.totalorder %s175, %s178
    %p187 = scmp.eq.s32.totalorder %s18, 1
    %p188 = por %p186, %p187
    %p189 = scmp.ne.s32.totalorder %s178, %s179
    %p190 = scmp.eq.s32.totalorder %s18, 0
    %p191 = por %p189, %p190
    %p192 = scmp.ne.s32.totalorder %s178, %s179
    %p193 = scmp.eq.s32.totalorder %s19, 1
    %p194 = por %p192, %p193
    %p196 = scmp.ne.s32.totalorder %s179, %s195
    %p197 = scmp.eq.s32.totalorder %s19, 0
    %p198 = por %p196, %p197
    %s199 = ssub.s32 %s20, %s32
    %s200 = ssub.s32 %s21, %s28
    %s201 = sor.u32 %s199, %s200
    %p202 = scmp.eq.s32.totalorder %s201, 0
    %s204 = sadd.s32 %s203, 1
    %s205 = scalar_select %p202, %s203, %s204
    %p208 = pneg %p202
    %p209 = scmp.eq.s32.totalorder %s13, 1
    %p210 = por %p208, %p209
    %p211 = scmp.ne.s32.totalorder %s203, %s206
    %p212 = scmp.eq.s32.totalorder %s13, 0
    %p213 = por %p211, %p212
    %p214 = scmp.ne.s32.totalorder %s203, %s206
    %p215 = scmp.eq.s32.totalorder %s18, 1
    %p216 = por %p214, %p215
    %p217 = scmp.ne.s32.totalorder %s206, %s207
    %p218 = scmp.eq.s32.totalorder %s18, 0
    %p219 = por %p217, %p218
    %p220 = scmp.ne.s32.totalorder %s206, %s207
    %p221 = scmp.eq.s32.totalorder %s19, 1
    %p222 = por %p220, %p221
    %p224 = scmp.ne.s32.totalorder %s207, %s223
    %p225 = scmp.eq.s32.totalorder %s19, 0
    %p226 = por %p224, %p225
    %p227 = scmp.le.s32.totalorder 1, %s13
    %p228 = scmp.lt.s32.totalorder %s13, 3
    %p229 = pnand %p227, %p228
    %p230 = pneg %p229
    // Predicated region
    $region9: #{resblock_up_forward.1} parent=5 // pred_check
      _
    $region10: #{resblock_up_forward.1} parent=5 // pred_check_branch
      %232 = sbr.rel (%p229) target = $region12
    $region11: #{resblock_up_forward.1} parent=5 // pred_region
      %s233 = ssub.s32 %s13, 1
      // Predicated region
      $region13: #{resblock_up_forward.1} parent=11 // pred_check
        %p234 = pneg %p74
      $region14: #{resblock_up_forward.1} parent=11 // pred_check_branch
        %236 = sbr.rel (%p234) target = $region16
      $region15: #{resblock_up_forward.1} parent=11 // pred_region
        _
      $region16: #{resblock_up_forward.1} parent=11 // pred_fallthru
        _
      // Predicated region
      $region17: #{resblock_up_forward.1} parent=11 // pred_check
        %p237 = pneg %p95
      $region18: #{resblock_up_forward.1} parent=11 // pred_check_branch
        %239 = sbr.rel (%p237) target = $region20
      $region19: #{resblock_up_forward.1} parent=11 // pred_region
        _
      $region20: #{resblock_up_forward.1} parent=11 // pred_fallthru
        _
      // Predicated region
      $region21: #{resblock_up_forward.1} parent=11 // pred_check
        %p240 = pneg %p116
      $region22: #{resblock_up_forward.1} parent=11 // pred_check_branch
        %242 = sbr.rel (%p240) target = $region24
      $region23: #{resblock_up_forward.1} parent=11 // pred_region
        _
      $region24: #{resblock_up_forward.1} parent=11 // pred_fallthru
        _
      // Predicated region
      $region25: #{resblock_up_forward.1} parent=11 // pred_check
        %p243 = pneg %p137
      $region26: #{resblock_up_forward.1} parent=11 // pred_check_branch
        %245 = sbr.rel (%p243) target = $region28
      $region27: #{resblock_up_forward.1} parent=11 // pred_region
        _
      $region28: #{resblock_up_forward.1} parent=11 // pred_fallthru
        _
      // Predicated region
      $region29: #{resblock_up_forward.1} parent=11 // pred_check
        %p246 = pneg %p163
      $region30: #{resblock_up_forward.1} parent=11 // pred_check_branch
        %248 = sbr.rel (%p246) target = $region32
      $region31: #{resblock_up_forward.1} parent=11 // pred_region
        %p249 = scmp.lt.s32.totalorder %s23, 0
        %s250 = scalar_select %p249, %s23, 0
        %s251 = smul.addr %s250, 16
        %s252 = smul.addr %s251, 8
        %s253 = scalar_lea.vmem %s5, %s252
      $region32: #{resblock_up_forward.1} parent=11 // pred_fallthru
        _
    $region12: #{resblock_up_forward.1} parent=5 // pred_fallthru
      _
    %p254 = scmp.lt.s32.totalorder %s13, 2
    // Predicated region
    $region33: #{resblock_up_forward.1} parent=5 // pred_check
      %p255 = pneg %p254
    $region34: #{resblock_up_forward.1} parent=5 // pred_check_branch
      %257 = sbr.rel (%p255) target = $region36
    $region35: #{resblock_up_forward.1} parent=5 // pred_region
      // Predicated region
      $region37: #{resblock_up_forward.1} parent=35 // pred_check
        %p258 = pneg %p47
      $region38: #{resblock_up_forward.1} parent=35 // pred_check_branch
        %260 = sbr.rel (%p258) target = $region40
      $region39: #{resblock_up_forward.1} parent=35 // pred_region
        %p261 = scmp.lt.s32.totalorder %s20, 1
        %s262 = scalar_select %p261, %s20, 1
        %p263 = scmp.lt.s32.totalorder %s21, 0
        %s264 = scalar_select %p263, %s21, 0
        %s265 = smul.addr %s264, 38
        %s266 = smul.addr %s262, 38
        %s267 = sadd.s32 %s265, %s266
        %s268 = smul.addr %s267, 8
        %s269 = scalar_lea.vmem %s0, %s268
      $region40: #{resblock_up_forward.1} parent=35 // pred_fallthru
        _
      // Predicated region
      $region41: #{resblock_up_forward.1} parent=35 // pred_check
        %p270 = pneg %p185
      $region42: #{resblock_up_forward.1} parent=35 // pred_check_branch
        %272 = sbr.rel (%p270) target = $region44
      $region43: #{resblock_up_forward.1} parent=35 // pred_region
        %s273 = smul.u32 8, %s21
        %p274 = scmp.lt.s32.totalorder %s20, 1
        %s275 = scalar_select %p274, %s20, 1
        %p276 = scmp.lt.s32.totalorder %s273, 7
        %s277 = scalar_select %p276, %s273, 7
        %s278 = smul.addr %s275, 8
        %s279 = sadd.s32 %s277, %s278
        %s280 = smul.addr %s279, 8
        %s281 = scalar_lea.vmem %s6, %s280
        %s282 = smul.u32 8, %s21
      $region44: #{resblock_up_forward.1} parent=35 // pred_fallthru
        _
    $region36: #{resblock_up_forward.1} parent=5 // pred_fallthru
      _
    %p283 = scmp.le.s32.totalorder 1, %s13
    %p284 = scmp.lt.s32.totalorder %s13, 3
    %p285 = pnand %p283, %p284
    %p286 = pneg %p285
    // Predicated region
    $region45: #{resblock_up_forward.1} parent=5 // pred_check
      _
    $region46: #{resblock_up_forward.1} parent=5 // pred_check_branch
      %288 = sbr.rel (%p285) target = $region48
    $region47: #{resblock_up_forward.1} parent=5 // pred_region
      %s289 = ssub.s32 %s13, 1
      %p290 = scmp.lt.s32.totalorder %s22, 1
      %s291 = scalar_select %p290, %s22, 1
      %p292 = scmp.lt.s32.totalorder %s23, 0
      %s293 = scalar_select %p292, %s23, 0
      %s294 = smul.addr %s293, 38
      %s295 = smul.addr %s291, 38
      %s296 = sadd.s32 %s294, %s295
      %s297 = smul.addr %s296, 8
      %s298 = scalar_lea.vmem %s0, %s297
      %p299 = pneg %p53
      %p300 = pneg %p50
      %p301 = pneg %p74
      %p302 = pneg %p71
      %p303 = pneg %p95
      %p304 = pneg %p92
      %p305 = pneg %p116
      %p306 = pneg %p113
      %p307 = pneg %p137
      %p308 = pneg %p134
      %p309 = scmp.lt.s32.totalorder %s23, 0
      %s310 = scalar_select %p309, %s23, 0
      %s311 = smul.addr %s310, 16
      %s312 = smul.addr %s311, 8
      %s313 = scalar_lea.vmem %s5, %s312
      %p314 = pneg %p163
      %p315 = pneg %p160
      %s316 = smul.u32 8, %s23
      %p317 = scmp.lt.s32.totalorder %s22, 1
      %s318 = scalar_select %p317, %s22, 1
      %p319 = scmp.lt.s32.totalorder %s316, 7
      %s320 = scalar_select %p319, %s316, 7
      %s321 = smul.addr %s318, 8
      %s322 = sadd.s32 %s320, %s321
      %s323 = smul.addr %s322, 8
      %s324 = scalar_lea.vmem %s6, %s323
      %p325 = pneg %p191
      %p326 = pneg %p188
      %p327 = pneg %p219
      %p328 = pneg %p216
      %s329 = smul.u32 8, %s23
      %p330 = scmp.lt.s32.totalorder %s22, 1
      %s331 = scalar_select %p330, %s22, 1
      %p332 = scmp.lt.s32.totalorder %s329, 7
      %s333 = scalar_select %p332, %s329, 7
      %s334 = smul.addr %s331, 8
      %s335 = sadd.s32 %s333, %s334
      %s336 = smul.addr %s335, 8
      %s337 = scalar_lea.vmem %s7, %s336
      %p338 = scmp.lt.s32.totalorder %s22, 1
      %s339 = scalar_select %p338, %s22, 1
      %p340 = scmp.lt.s32.totalorder %s23, 0
      %s341 = scalar_select %p340, %s23, 0
      %s342 = smul.addr %s341, 38
      %s343 = smul.addr %s339, 38
      %s344 = sadd.s32 %s342, %s343
      %s345 = smul.addr %s344, 8
      %s346 = scalar_lea.vmem %s0, %s345
      %p347 = scmp.lt.s32.totalorder %s23, 0
      %s348 = scalar_select %p347, %s23, 0
      %s349 = smul.addr %s348, 16
      %s350 = smul.addr %s349, 8
      %s351 = scalar_lea.vmem %s5, %s350
      %s352 = smul.u32 8, %s23
      %p353 = scmp.lt.s32.totalorder %s22, 1
      %s354 = scalar_select %p353, %s22, 1
      %p355 = scmp.lt.s32.totalorder %s352, 7
      %s356 = scalar_select %p355, %s352, 7
      %s357 = smul.addr %s354, 8
      %s358 = sadd.s32 %s356, %s357
      %s359 = smul.addr %s358, 8
      %s360 = scalar_lea.vmem %s6, %s359
      %s361 = smul.u32 8, %s23
      %s362 = smul.u32 8, %s23
      %p363 = scmp.lt.s32.totalorder %s22, 1
      %s364 = scalar_select %p363, %s22, 1
      %p365 = scmp.lt.s32.totalorder %s362, 7
      %s366 = scalar_select %p365, %s362, 7
      %s367 = smul.addr %s364, 8
      %s368 = sadd.s32 %s366, %s367
      %s369 = smul.addr %s368, 8
      %s370 = scalar_lea.vmem %s7, %s369
      %s371 = smul.u32 8, %s23
      %v372 = vld [vmem:[%s346] sm:$0xff]
      %v373 = vld [vmem:[%s346 + $0x8] sm:$0xff]
      %v374 = vld [vmem:[%s346 + $0x10] sm:$0xff]
      %v375 = vld [vmem:[%s346 + $0x18] sm:$0xff]
      %v376 = vld [vmem:[%s346 + $0x20] sm:$0xff]
      %v377 = vld [vmem:[%s346 + $0x28] sm:$0xff]
      %v378 = vld [vmem:[%s346 + $0x30] sm:$0xff]
      %v379 = vld [vmem:[%s346 + $0x38] sm:$0xff]
      %v380 = vld [vmem:[%s346 + $0x40] sm:$0xff]
      %v381 = vld [vmem:[%s346 + $0x48] sm:$0xff]
      %v382 = vld [vmem:[%s346 + $0x50] sm:$0xff]
      %v383 = vld [vmem:[%s346 + $0x58] sm:$0xff]
      %v384 = vld [vmem:[%s346 + $0x60] sm:$0xff]
      %v385 = vld [vmem:[%s346 + $0x68] sm:$0xff]
      %v386 = vld [vmem:[%s346 + $0x70] sm:$0xff]
      %v387 = vld [vmem:[%s346 + $0x78] sm:$0xff]
      %v388 = vld [vmem:[%s346 + $0x80] sm:$0xff]
      %v389 = vld [vmem:[%s346 + $0x88] sm:$0xff]
      %v390 = vld [vmem:[%s346 + $0x90] sm:$0xff]
      %v391 = vld [vmem:[%s346 + $0x98] sm:$0xff]
      %v392 = vld [vmem:[%s346 + $0xa0] sm:$0xff]
      %v393 = vld [vmem:[%s346 + $0xa8] sm:$0xff]
      %v394 = vld [vmem:[%s346 + $0xb0] sm:$0xff]
      %v395 = vld [vmem:[%s346 + $0xb8] sm:$0xff]
      %v396 = vld [vmem:[%s346 + $0xc0] sm:$0xff]
      %v397 = vld [vmem:[%s346 + $0xc8] sm:$0xff]
      %v398 = vld [vmem:[%s346 + $0xd0] sm:$0xff]
      %v399 = vld [vmem:[%s346 + $0xd8] sm:$0xff]
      %v400 = vld [vmem:[%s346 + $0xe0] sm:$0xff]
      %v401 = vld [vmem:[%s346 + $0xe8] sm:$0xff]
      %v402 = vld [vmem:[%s346 + $0xf0] sm:$0x3]
      %v403 = vld [vmem:[%s346 + $0xf8] sm:$0x3]
      %v404 = vld [vmem:[%s1] sm:$0xff]
      %v405 = vld [vmem:[%s1 + $0x8] sm:$0xff]
      %v406 = vld [vmem:[%s1 + $0x10] sm:$0xff]
      %v407 = vld [vmem:[%s1 + $0x18] sm:$0xff]
      %v408 = vld [vmem:[%s1 + $0x20] sm:$0xff]
      %v409 = vld [vmem:[%s1 + $0x28] sm:$0xff]
      %v410 = vld [vmem:[%s1 + $0x30] sm:$0xff]
      %v411 = vld [vmem:[%s1 + $0x38] sm:$0xff]
      %v412 = vld [vmem:[%s1 + $0x40] sm:$0xff]
      %v413 = vld [vmem:[%s1 + $0x48] sm:$0xff]
      %v414 = vld [vmem:[%s1 + $0x50] sm:$0xff]
      %v415 = vld [vmem:[%s1 + $0x58] sm:$0xff]
      %v416 = vld [vmem:[%s1 + $0x60] sm:$0xff]
      %v417 = vld [vmem:[%s1 + $0x68] sm:$0xff]
      %v418 = vld [vmem:[%s1 + $0x70] sm:$0xff]
      %v419 = vld [vmem:[%s1 + $0x78] sm:$0xff]
      %v420 = vld [vmem:[%s1 + $0x80] sm:$0xff]
      %v421 = vld [vmem:[%s1 + $0x88] sm:$0xff]
      %v422 = vld [vmem:[%s1 + $0x90] sm:$0xff]
      %v423 = vld [vmem:[%s1 + $0x98] sm:$0xff]
      %v424 = vld [vmem:[%s1 + $0xa0] sm:$0xff]
      %v425 = vld [vmem:[%s1 + $0xa8] sm:$0xff]
      %v426 = vld [vmem:[%s1 + $0xb0] sm:$0xff]
      %v427 = vld [vmem:[%s1 + $0xb8] sm:$0xff]
      %v428 = vld [vmem:[%s1 + $0xc0] sm:$0xff]
      %v429 = vld [vmem:[%s1 + $0xc8] sm:$0xff]
      %v430 = vld [vmem:[%s1 + $0xd0] sm:$0xff]
      %v431 = vld [vmem:[%s1 + $0xd8] sm:$0xff]
      %v432 = vld [vmem:[%s1 + $0xe0] sm:$0xff]
      %v433 = vld [vmem:[%s1 + $0xe8] sm:$0xff]
      %v434 = vld [vmem:[%s1 + $0xf0] sm:$0xff]
      %v435 = vld [vmem:[%s1 + $0xf8] sm:$0xff]
      %v436 = vld [vmem:[%s1 + $0x100] sm:$0xff]
      %v437 = vld [vmem:[%s1 + $0x108] sm:$0xff]
      %v438 = vld [vmem:[%s1 + $0x110] sm:$0xff]
      %v439 = vld [vmem:[%s1 + $0x118] sm:$0xff]
      %v440 = vld [vmem:[%s1 + $0x120] sm:$0xff]
      %v441 = vld [vmem:[%s1 + $0x128] sm:$0xff]
      %v442 = vld [vmem:[%s1 + $0x130] sm:$0xff]
      %v443 = vld [vmem:[%s1 + $0x138] sm:$0xff]
      %v444 = vld [vmem:[%s1 + $0x140] sm:$0xff]
      %v445 = vld [vmem:[%s1 + $0x148] sm:$0xff]
      %v446 = vld [vmem:[%s1 + $0x150] sm:$0xff]
      %v447 = vld [vmem:[%s1 + $0x158] sm:$0xff]
      %v448 = vld [vmem:[%s1 + $0x160] sm:$0xff]
      %v449 = vld [vmem:[%s1 + $0x168] sm:$0xff]
      %v450 = vld [vmem:[%s1 + $0x170] sm:$0xff]
      %v451 = vld [vmem:[%s1 + $0x178] sm:$0xff]
      %v452 = vld [vmem:[%s346] sm:$0xfe]
      %v453 = vld [vmem:[%s346 + $0x8] sm:$0xfe]
      %v454 = vld [vmem:[%s346 + $0xf0] sm:$0x7]
      %v455 = vld [vmem:[%s346 + $0xf8] sm:$0x7]
      %s456 = scalar_lea.vmem %s1, 384
      %v457 = vld [vmem:[%s456] sm:$0xff]
      %v458 = vld [vmem:[%s456 + $0x8] sm:$0xff]
      %v459 = vld [vmem:[%s456 + $0x10] sm:$0xff]
      %v460 = vld [vmem:[%s456 + $0x18] sm:$0xff]
      %v461 = vld [vmem:[%s456 + $0x20] sm:$0xff]
      %v462 = vld [vmem:[%s456 + $0x28] sm:$0xff]
      %v463 = vld [vmem:[%s456 + $0x30] sm:$0xff]
      %v464 = vld [vmem:[%s456 + $0x38] sm:$0xff]
      %v465 = vld [vmem:[%s456 + $0x40] sm:$0xff]
      %v466 = vld [vmem:[%s456 + $0x48] sm:$0xff]
      %v467 = vld [vmem:[%s456 + $0x50] sm:$0xff]
      %v468 = vld [vmem:[%s456 + $0x58] sm:$0xff]
      %v469 = vld [vmem:[%s456 + $0x60] sm:$0xff]
      %v470 = vld [vmem:[%s456 + $0x68] sm:$0xff]
      %v471 = vld [vmem:[%s456 + $0x70] sm:$0xff]
      %v472 = vld [vmem:[%s456 + $0x78] sm:$0xff]
      %v473 = vld [vmem:[%s456 + $0x80] sm:$0xff]
      %v474 = vld [vmem:[%s456 + $0x88] sm:$0xff]
      %v475 = vld [vmem:[%s456 + $0x90] sm:$0xff]
      %v476 = vld [vmem:[%s456 + $0x98] sm:$0xff]
      %v477 = vld [vmem:[%s456 + $0xa0] sm:$0xff]
      %v478 = vld [vmem:[%s456 + $0xa8] sm:$0xff]
      %v479 = vld [vmem:[%s456 + $0xb0] sm:$0xff]
      %v480 = vld [vmem:[%s456 + $0xb8] sm:$0xff]
      %v481 = vld [vmem:[%s456 + $0xc0] sm:$0xff]
      %v482 = vld [vmem:[%s456 + $0xc8] sm:$0xff]
      %v483 = vld [vmem:[%s456 + $0xd0] sm:$0xff]
      %v484 = vld [vmem:[%s456 + $0xd8] sm:$0xff]
      %v485 = vld [vmem:[%s456 + $0xe0] sm:$0xff]
      %v486 = vld [vmem:[%s456 + $0xe8] sm:$0xff]
      %v487 = vld [vmem:[%s456 + $0xf0] sm:$0xff]
      %v488 = vld [vmem:[%s456 + $0xf8] sm:$0xff]
      %v489 = vld [vmem:[%s456 + $0x100] sm:$0xff]
      %v490 = vld [vmem:[%s456 + $0x108] sm:$0xff]
      %v491 = vld [vmem:[%s456 + $0x110] sm:$0xff]
      %v492 = vld [vmem:[%s456 + $0x118] sm:$0xff]
      %v493 = vld [vmem:[%s456 + $0x120] sm:$0xff]
      %v494 = vld [vmem:[%s456 + $0x128] sm:$0xff]
      %v495 = vld [vmem:[%s456 + $0x130] sm:$0xff]
      %v496 = vld [vmem:[%s456 + $0x138] sm:$0xff]
      %v497 = vld [vmem:[%s456 + $0x140] sm:$0xff]
      %v498 = vld [vmem:[%s456 + $0x148] sm:$0xff]
      %v499 = vld [vmem:[%s456 + $0x150] sm:$0xff]
      %v500 = vld [vmem:[%s456 + $0x158] sm:$0xff]
      %v501 = vld [vmem:[%s456 + $0x160] sm:$0xff]
      %v502 = vld [vmem:[%s456 + $0x168] sm:$0xff]
      %v503 = vld [vmem:[%s456 + $0x170] sm:$0xff]
      %v504 = vld [vmem:[%s456 + $0x178] sm:$0xff]
      %vm537 = vcmask 1046528
      %v538 = vrot.slane %v452, 1
      %v539 = vrot.slane %v374, 1
      %v540 = vsel %vm537, %v538, %v539
      %v541 = vrot.slane %v453, 1
      %v542 = vrot.slane %v375, 1
      %v543 = vsel %vm537, %v541, %v542
      %v544 = vrot.slane %v376, 1
      %v545 = vsel %vm537, %v539, %v544
      %v546 = vrot.slane %v377, 1
      %v547 = vsel %vm537, %v542, %v546
      %v548 = vrot.slane %v378, 1
      %v549 = vsel %vm537, %v544, %v548
      %v550 = vrot.slane %v379, 1
      %v551 = vsel %vm537, %v546, %v550
      %v552 = vrot.slane %v380, 1
      %v553 = vsel %vm537, %v548, %v552
      %v554 = vrot.slane %v381, 1
      %v555 = vsel %vm537, %v550, %v554
      %v556 = vrot.slane %v382, 1
      %v557 = vsel %vm537, %v552, %v556
      %v558 = vrot.slane %v383, 1
      %v559 = vsel %vm537, %v554, %v558
      %v560 = vrot.slane %v384, 1
      %v561 = vsel %vm537, %v556, %v560
      %v562 = vrot.slane %v385, 1
      %v563 = vsel %vm537, %v558, %v562
      %v564 = vrot.slane %v386, 1
      %v565 = vsel %vm537, %v560, %v564
      %v566 = vrot.slane %v387, 1
      %v567 = vsel %vm537, %v562, %v566
      %v568 = vrot.slane %v388, 1
      %v569 = vsel %vm537, %v564, %v568
      %v570 = vrot.slane %v389, 1
      %v571 = vsel %vm537, %v566, %v570
      %v572 = vrot.slane %v390, 1
      %v573 = vsel %vm537, %v568, %v572
      %v574 = vrot.slane %v391, 1
      %v575 = vsel %vm537, %v570, %v574
      %v576 = vrot.slane %v392, 1
      %v577 = vsel %vm537, %v572, %v576
      %v578 = vrot.slane %v393, 1
      %v579 = vsel %vm537, %v574, %v578
      %v580 = vrot.slane %v394, 1
      %v581 = vsel %vm537, %v576, %v580
      %v582 = vrot.slane %v395, 1
      %v583 = vsel %vm537, %v578, %v582
      %v584 = vrot.slane %v396, 1
      %v585 = vsel %vm537, %v580, %v584
      %v586 = vrot.slane %v397, 1
      %v587 = vsel %vm537, %v582, %v586
      %v588 = vrot.slane %v398, 1
      %v589 = vsel %vm537, %v584, %v588
      %v590 = vrot.slane %v399, 1
      %v591 = vsel %vm537, %v586, %v590
      %v592 = vrot.slane %v400, 1
      %v593 = vsel %vm537, %v588, %v592
      %v594 = vrot.slane %v401, 1
      %v595 = vsel %vm537, %v590, %v594
      %v596 = vrot.slane %v454, 1
      %v597 = vsel %vm537, %v592, %v596
      %v598 = vrot.slane %v455, 1
      %v599 = vsel %vm537, %v594, %v598
      %vm616 = vcmask 523264
      %v617 = vsel %vm616, %v543, 0
      %v619 = vsel %vm616, %v547, 0
      %v621 = vsel %vm616, %v551, 0
      %v623 = vsel %vm616, %v555, 0
      %v625 = vsel %vm616, %v559, 0
      %v627 = vsel %vm616, %v563, 0
      %v629 = vsel %vm616, %v567, 0
      %v631 = vsel %vm616, %v571, 0
      %v633 = vsel %vm616, %v575, 0
      %v635 = vsel %vm616, %v579, 0
      %v637 = vsel %vm616, %v583, 0
      %v639 = vsel %vm616, %v587, 0
      %v641 = vsel %vm616, %v591, 0
      %v643 = vsel %vm616, %v595, 0
      %v645 = vsel %vm616, %v599, 0
      %v647 = vsel %vm616, %v598, 0
      %649 = vmatprep.subr.mxu0 %v458
      %650 = vmatpush1.msra.mxu0 %v457
      %651 = vmatprep.subr.mxu0 %v460
      %652 = vmatpush1.msra.mxu0 %v459
      %653 = vmatprep.subr.mxu0 %v462
      %654 = vmatpush1.msra.mxu0 %v461
      %655 = vmatprep.subr.mxu0 %v464
      %656 = vmatpush1.msra.mxu0 %v463
      %657 = vmatprep.subr.mxu0 %v466
      %658 = vmatpush1.msra.mxu0 %v465
      %659 = vmatprep.subr.mxu0 %v468
      %660 = vmatpush1.msra.mxu0 %v467
      %661 = vmatprep.subr.mxu0 %v470
      %662 = vmatpush1.msra.mxu0 %v469
      %663 = vmatprep.subr.mxu0 %v472
      %664 = vmatpush1.msra.mxu0 %v471
      %665 = vmatprep.subr.mxu0 %v474
      %666 = vmatpush1.msra.mxu0 %v473
      %667 = vmatprep.subr.mxu0 %v476
      %668 = vmatpush1.msra.mxu0 %v475
      %669 = vmatprep.subr.mxu0 %v478
      %670 = vmatpush1.msra.mxu0 %v477
      %671 = vmatprep.subr.mxu0 %v480
      %672 = vmatpush1.msra.mxu0 %v479
      %673 = vmatprep.subr.mxu0 %v482
      %674 = vmatpush1.msra.mxu0 %v481
      %675 = vmatprep.subr.mxu0 %v484
      %676 = vmatpush1.msra.mxu0 %v483
      %677 = vmatprep.subr.mxu0 %v486
      %678 = vmatpush1.msra.mxu0 %v485
      %679 = vmatprep.subr.mxu0 %v488
      %680 = vmatpush1.msra.mxu0 %v487
      %681 = vmatprep.subr.mxu0 %v490
      %682 = vmatpush1.msra.mxu0 %v489
      %683 = vmatprep.subr.mxu0 %v492
      %684 = vmatpush1.msra.mxu0 %v491
      %685 = vmatprep.subr.mxu0 %v494
      %686 = vmatpush1.msra.mxu0 %v493
      %687 = vmatprep.subr.mxu0 %v496
      %688 = vmatpush1.msra.mxu0 %v495
      %689 = vmatprep.subr.mxu0 %v498
      %690 = vmatpush1.msra.mxu0 %v497
      %691 = vmatprep.subr.mxu0 %v500
      %692 = vmatpush1.msra.mxu0 %v499
      %693 = vmatprep.subr.mxu0 %v502
      %694 = vmatpush1.msra.mxu0 %v501
      %695 = vmatprep.subr.mxu0 %v504
      %696 = vmatpush1.msra.mxu0 %v503
      %697 = vmatprep.subr.mxu0 0.0
      %698 = vmatpush1.msra.mxu0 0.0
      %699 = vmatprep.subr.mxu0 0.0
      %700 = vmatpush1.msra.mxu0 0.0
      %701 = vmatprep.subr.mxu0 0.0
      %702 = vmatpush1.msra.mxu0 0.0
      %703 = vmatprep.subr.mxu0 0.0
      %704 = vmatpush1.msra.mxu0 0.0
      %705 = vmatprep.subr.mxu0 0.0
      %706 = vmatpush1.msra.mxu0 0.0
      %707 = vmatprep.subr.mxu0 0.0
      %708 = vmatpush1.msra.mxu0 0.0
      %709 = vmatprep.subr.mxu0 0.0
      %710 = vmatpush1.msra.mxu0 0.0
      %711 = vmatprep.subr.mxu0 0.0
      %712 = vmatpush1.msra.mxu0 0.0
      %713 = vmatprep.mubr.f32.mxu0 %v617
      %714 = vmatmul.mubr.f32.gmra.mrb[0].mxu0 %v540
      %v715 = vpop.f32.mrb[0].mxu0
      %v716 = vadd.f32 0.0, %v715
      %v717 = vpop.f32.mrb[0].mxu0
      %v718 = vadd.f32 0.0, %v717
      %719 = vmatprep.mubr.f32.mxu0 %v619
      %720 = vmatmul.mubr.f32.gmra.mrb[0].mxu0 %v545
      %v721 = vpop.f32.mrb[0].mxu0
      %v722 = vadd.f32 0.0, %v721
      %v723 = vpop.f32.mrb[0].mxu0
      %v724 = vadd.f32 0.0, %v723
      %725 = vmatprep.mubr.f32.mxu0 %v621
      %726 = vmatmul.mubr.f32.gmra.mrb[0].mxu0 %v549
      %v727 = vpop.f32.mrb[0].mxu0
      %v728 = vadd.f32 0.0, %v727
      %v729 = vpop.f32.mrb[0].mxu0
      %v730 = vadd.f32 0.0, %v729
      %731 = vmatprep.mubr.f32.mxu0 %v623
      %732 = vmatmul.mubr.f32.gmra.mrb[0].mxu0 %v553
      %v733 = vpop.f32.mrb[0].mxu0
      %v734 = vadd.f32 0.0, %v733
      %v735 = vpop.f32.mrb[0].mxu0
      %v736 = vadd.f32 0.0, %v735
      %737 = vmatprep.mubr.f32.mxu0 %v625
      %738 = vmatmul.mubr.f32.gmra.mrb[0].mxu0 %v557
      %v739 = vpop.f32.mrb[0].mxu0
      %v740 = vadd.f32 0.0, %v739
      %v741 = vpop.f32.mrb[0].mxu0
      %v742 = vadd.f32 0.0, %v741
      %743 = vmatprep.mubr.f32.mxu0 %v627
      %744 = vmatmul.mubr.f32.gmra.mrb[0].mxu0 %v561
      %v745 = vpop.f32.mrb[0].mxu0
      %v746 = vadd.f32 0.0, %v745
      %v747 = vpop.f32.mrb[0].mxu0
      %v748 = vadd.f32 0.0, %v747
      %749 = vmatprep.mubr.f32.mxu0 %v629
      %750 = vmatmul.mubr.f32.gmra.mrb[0].mxu0 %v565
      %v751 = vpop.f32.mrb[0].mxu0
      %v752 = vadd.f32 0.0, %v751
      %v753 = vpop.f32.mrb[0].mxu0
      %v754 = vadd.f32 0.0, %v753
      %755 = vmatprep.mubr.f32.mxu0 %v631
      %756 = vmatmul.mubr.f32.gmra.mrb[0].mxu0 %v569
      %v757 = vpop.f32.mrb[0].mxu0
      %v758 = vadd.f32 0.0, %v757
      %v759 = vpop.f32.mrb[0].mxu0
      %v760 = vadd.f32 0.0, %v759
      %761 = vmatprep.mubr.f32.mxu0 %v633
      %762 = vmatmul.mubr.f32.gmra.mrb[0].mxu0 %v573
      %v763 = vpop.f32.mrb[0].mxu0
      %v764 = vadd.f32 0.0, %v763
      %v765 = vpop.f32.mrb[0].mxu0
      %v766 = vadd.f32 0.0, %v765
      %767 = vmatprep.mubr.f32.mxu0 %v635
      %768 = vmatmul.mubr.f32.gmra.mrb[0].mxu0 %v577
      %v769 = vpop.f32.mrb[0].mxu0
      %v770 = vadd.f32 0.0, %v769
      %v771 = vpop.f32.mrb[0].mxu0
      %v772 = vadd.f32 0.0, %v771
      %773 = vmatprep.mubr.f32.mxu0 %v637
      %774 = vmatmul.mubr.f32.gmra.mrb[0].mxu0 %v581
      %v775 = vpop.f32.mrb[0].mxu0
      %v776 = vadd.f32 0.0, %v775
      %v777 = vpop.f32.mrb[0].mxu0
      %v778 = vadd.f32 0.0, %v777
      %779 = vmatprep.mubr.f32.mxu0 %v639
      %780 = vmatmul.mubr.f32.gmra.mrb[0].mxu0 %v585
      %v781 = vpop.f32.mrb[0].mxu0
      %v782 = vadd.f32 0.0, %v781
      %v783 = vpop.f32.mrb[0].mxu0
      %v784 = vadd.f32 0.0, %v783
      %785 = vmatprep.mubr.f32.mxu0 %v641
      %786 = vmatmul.mubr.f32.gmra.mrb[0].mxu0 %v589
      %v787 = vpop.f32.mrb[0].mxu0
      %v788 = vadd.f32 0.0, %v787
      %v789 = vpop.f32.mrb[0].mxu0
      %v790 = vadd.f32 0.0, %v789
      %791 = vmatprep.mubr.f32.mxu0 %v643
      %792 = vmatmul.mubr.f32.gmra.mrb[0].mxu0 %v593
      %v793 = vpop.f32.mrb[0].mxu0
      %v794 = vadd.f32 0.0, %v793
      %v795 = vpop.f32.mrb[0].mxu0
      %v796 = vadd.f32 0.0, %v795
      %797 = vmatprep.mubr.f32.mxu0 %v645
      %798 = vmatmul.mubr.f32.gmra.mrb[0].mxu0 %v597
      %v799 = vpop.f32.mrb[0].mxu0
      %v800 = vadd.f32 0.0, %v799
      %v801 = vpop.f32.mrb[0].mxu0
      %v802 = vadd.f32 0.0, %v801
      %803 = vmatprep.mubr.f32.mxu0 %v647
      %804 = vmatmul.mubr.f32.gmra.mrb[0].mxu0 %v596
      %v805 = vpop.f32.mrb[0].mxu0
      %v806 = vadd.f32 0.0, %v805
      %v807 = vpop.f32.mrb[0].mxu0
      %v808 = vadd.f32 0.0, %v807
      %809 = vdwg.mxu0
      %v811 = vsel %vm616, %v373, 0
      %v813 = vsel %vm616, %v375, 0
      %v815 = vsel %vm616, %v377, 0
      %v817 = vsel %vm616, %v379, 0
      %v819 = vsel %vm616, %v381, 0
      %v821 = vsel %vm616, %v383, 0
      %v823 = vsel %vm616, %v385, 0
      %v825 = vsel %vm616, %v387, 0
      %v827 = vsel %vm616, %v389, 0
      %v829 = vsel %vm616, %v391, 0
      %v831 = vsel %vm616, %v393, 0
      %v833 = vsel %vm616, %v395, 0
      %v835 = vsel %vm616, %v397, 0
      %v837 = vsel %vm616, %v399, 0
      %v839 = vsel %vm616, %v401, 0
      %v842 = vsel %vm616, %v403, 0
      %844 = vmatprep.subr.mxu0 %v405
      %845 = vmatpush1.msra.mxu0 %v404
      %846 = vmatprep.subr.mxu0 %v407
      %847 = vmatpush1.msra.mxu0 %v406
      %848 = vmatprep.subr.mxu0 %v409
      %849 = vmatpush1.msra.mxu0 %v408
      %850 = vmatprep.subr.mxu0 %v411
      %851 = vmatpush1.msra.mxu0 %v410
      %852 = vmatprep.subr.mxu0 %v413
      %853 = vmatpush1.msra.mxu0 %v412
      %854 = vmatprep.subr.mxu0 %v415
      %855 = vmatpush1.msra.mxu0 %v414
      %856 = vmatprep.subr.mxu0 %v417
      %857 = vmatpush1.msra.mxu0 %v416
      %858 = vmatprep.subr.mxu0 %v419
      %859 = vmatpush1.msra.mxu0 %v418
      %860 = vmatprep.subr.mxu0 %v421
      %861 = vmatpush1.msra.mxu0 %v420
      %862 = vmatprep.subr.mxu0 %v423
      %863 = vmatpush1.msra.mxu0 %v422
      %864 = vmatprep.subr.mxu0 %v425
      %865 = vmatpush1.msra.mxu0 %v424
      %866 = vmatprep.subr.mxu0 %v427
      %867 = vmatpush1.msra.mxu0 %v426
      %868 = vmatprep.subr.mxu0 %v429
      %869 = vmatpush1.msra.mxu0 %v428
      %870 = vmatprep.subr.mxu0 %v431
      %871 = vmatpush1.msra.mxu0 %v430
      %872 = vmatprep.subr.mxu0 %v433
      %873 = vmatpush1.msra.mxu0 %v432
      %874 = vmatprep.subr.mxu0 %v435
      %875 = vmatpush1.msra.mxu0 %v434
      %876 = vmatprep.subr.mxu0 %v437
      %877 = vmatpush1.msra.mxu0 %v436
      %878 = vmatprep.subr.mxu0 %v439
      %879 = vmatpush1.msra.mxu0 %v438
      %880 = vmatprep.subr.mxu0 %v441
      %881 = vmatpush1.msra.mxu0 %v440
      %882 = vmatprep.subr.mxu0 %v443
      %883 = vmatpush1.msra.mxu0 %v442
      %884 = vmatprep.subr.mxu0 %v445
      %885 = vmatpush1.msra.mxu0 %v444
      %886 = vmatprep.subr.mxu0 %v447
      %887 = vmatpush1.msra.mxu0 %v446
      %888 = vmatprep.subr.mxu0 %v449
      %889 = vmatpush1.msra.mxu0 %v448
      %890 = vmatprep.subr.mxu0 %v451
      %891 = vmatpush1.msra.mxu0 %v450
      %892 = vmatprep.subr.mxu0 0.0
      %893 = vmatpush1.msra.mxu0 0.0
      %894 = vmatprep.subr.mxu0 0.0
      %895 = vmatpush1.msra.mxu0 0.0
      %896 = vmatprep.subr.mxu0 0.0
      %897 = vmatpush1.msra.mxu0 0.0
      %898 = vmatprep.subr.mxu0 0.0
      %899 = vmatpush1.msra.mxu0 0.0
      %900 = vmatprep.subr.mxu0 0.0
      %901 = vmatpush1.msra.mxu0 0.0
      %902 = vmatprep.subr.mxu0 0.0
      %903 = vmatpush1.msra.mxu0 0.0
      %904 = vmatprep.subr.mxu0 0.0
      %905 = vmatpush1.msra.mxu0 0.0
      %906 = vmatprep.subr.mxu0 0.0
      %907 = vmatpush1.msra.mxu0 0.0
      %908 = vmatprep.mubr.f32.mxu0 %v811
      %909 = vmatmul.mubr.f32.gmra.mrb[0].mxu0 %v372
      %v910 = vpop.f32.mrb[0].mxu0
      %v911 = vadd.f32 %v716, %v910
      %v912 = vpop.f32.mrb[0].mxu0
      %v913 = vadd.f32 %v718, %v912
      %914 = vmatprep.mubr.f32.mxu0 %v813
      %915 = vmatmul.mubr.f32.gmra.mrb[0].mxu0 %v374
      %v916 = vpop.f32.mrb[0].mxu0
      %v917 = vadd.f32 %v722, %v916
      %v918 = vpop.f32.mrb[0].mxu0
      %v919 = vadd.f32 %v724, %v918
      %920 = vmatprep.mubr.f32.mxu0 %v815
      %921 = vmatmul.mubr.f32.gmra.mrb[0].mxu0 %v376
      %v922 = vpop.f32.mrb[0].mxu0
      %v923 = vadd.f32 %v728, %v922
      %v924 = vpop.f32.mrb[0].mxu0
      %v925 = vadd.f32 %v730, %v924
      %926 = vmatprep.mubr.f32.mxu0 %v817
      %927 = vmatmul.mubr.f32.gmra.mrb[0].mxu0 %v378
      %v928 = vpop.f32.mrb[0].mxu0
      %v929 = vadd.f32 %v734, %v928
      %v930 = vpop.f32.mrb[0].mxu0
      %v931 = vadd.f32 %v736, %v930
      %932 = vmatprep.mubr.f32.mxu0 %v819
      %933 = vmatmul.mubr.f32.gmra.mrb[0].mxu0 %v380
      %v934 = vpop.f32.mrb[0].mxu0
      %v935 = vadd.f32 %v740, %v934
      %v936 = vpop.f32.mrb[0].mxu0
      %v937 = vadd.f32 %v742, %v936
      %938 = vmatprep.mubr.f32.mxu0 %v821
      %939 = vmatmul.mubr.f32.gmra.mrb[0].mxu0 %v382
      %v940 = vpop.f32.mrb[0].mxu0
      %v941 = vadd.f32 %v746, %v940
      %v942 = vpop.f32.mrb[0].mxu0
      %v943 = vadd.f32 %v748, %v942
      %944 = vmatprep.mubr.f32.mxu0 %v823
      %945 = vmatmul.mubr.f32.gmra.mrb[0].mxu0 %v384
      %v946 = vpop.f32.mrb[0].mxu0
      %v947 = vadd.f32 %v752, %v946
      %v948 = vpop.f32.mrb[0].mxu0
      %v949 = vadd.f32 %v754, %v948
      %950 = vmatprep.mubr.f32.mxu0 %v825
      %951 = vmatmul.mubr.f32.gmra.mrb[0].mxu0 %v386
      %v952 = vpop.f32.mrb[0].mxu0
      %v953 = vadd.f32 %v758, %v952
      %v954 = vpop.f32.mrb[0].mxu0
      %v955 = vadd.f32 %v760, %v954
      %956 = vmatprep.mubr.f32.mxu0 %v827
      %957 = vmatmul.mubr.f32.gmra.mrb[0].mxu0 %v388
      %v958 = vpop.f32.mrb[0].mxu0
      %v959 = vadd.f32 %v764, %v958
      %v960 = vpop.f32.mrb[0].mxu0
      %v961 = vadd.f32 %v766, %v960
      %962 = vmatprep.mubr.f32.mxu0 %v829
      %963 = vmatmul.mubr.f32.gmra.mrb[0].mxu0 %v390
      %v964 = vpop.f32.mrb[0].mxu0
      %v965 = vadd.f32 %v770, %v964
      %v966 = vpop.f32.mrb[0].mxu0
      %v967 = vadd.f32 %v772, %v966
      %968 = vmatprep.mubr.f32.mxu0 %v831
      %969 = vmatmul.mubr.f32.gmra.mrb[0].mxu0 %v392
      %v970 = vpop.f32.mrb[0].mxu0
      %v971 = vadd.f32 %v776, %v970
      %v972 = vpop.f32.mrb[0].mxu0
      %v973 = vadd.f32 %v778, %v972
      %974 = vmatprep.mubr.f32.mxu0 %v833
      %975 = vmatmul.mubr.f32.gmra.mrb[0].mxu0 %v394
      %v976 = vpop.f32.mrb[0].mxu0
      %v977 = vadd.f32 %v782, %v976
      %v978 = vpop.f32.mrb[0].mxu0
      %v979 = vadd.f32 %v784, %v978
      %980 = vmatprep.mubr.f32.mxu0 %v835
      %981 = vmatmul.mubr.f32.gmra.mrb[0].mxu0 %v396
      %v982 = vpop.f32.mrb[0].mxu0
      %v983 = vadd.f32 %v788, %v982
      %v984 = vpop.f32.mrb[0].mxu0
      %v985 = vadd.f32 %v790, %v984
      %986 = vmatprep.mubr.f32.mxu0 %v837
      %987 = vmatmul.mubr.f32.gmra.mrb[0].mxu0 %v398
      %v988 = vpop.f32.mrb[0].mxu0
      %v989 = vadd.f32 %v794, %v988
      %v990 = vpop.f32.mrb[0].mxu0
      %v991 = vadd.f32 %v796, %v990
      %992 = vmatprep.mubr.f32.mxu0 %v839
      %993 = vmatmul.mubr.f32.gmra.mrb[0].mxu0 %v400
      %v994 = vpop.f32.mrb[0].mxu0
      %v995 = vadd.f32 %v800, %v994
      %v996 = vpop.f32.mrb[0].mxu0
      %v997 = vadd.f32 %v802, %v996
      %998 = vmatprep.mubr.f32.mxu0 %v842
      %999 = vmatmul.mubr.f32.gmra.mrb[0].mxu0 %v402
      %v1000 = vpop.f32.mrb[0].mxu0
      %v1001 = vadd.f32 %v806, %v1000
      %v1002 = vpop.f32.mrb[0].mxu0
      %v1003 = vadd.f32 %v808, %v1002
      %1004 = vdwg.mxu0
      %v1005 = vld [vmem:[%s346] sm:$0xfc]
      %v1006 = vld [vmem:[%s346 + $0x8] sm:$0xfc]
      %v1007 = vld [vmem:[%s346 + $0xf0] sm:$0xf]
      %v1008 = vld [vmem:[%s346 + $0xf8] sm:$0xf]
      %s1009 = scalar_lea.vmem %s1, 768
      %v1010 = vld [vmem:[%s1009] sm:$0xff]
      %v1011 = vld [vmem:[%s1009 + $0x8] sm:$0xff]
      %v1012 = vld [vmem:[%s1009 + $0x10] sm:$0xff]
      %v1013 = vld [vmem:[%s1009 + $0x18] sm:$0xff]
      %v1014 = vld [vmem:[%s1009 + $0x20] sm:$0xff]
      %v1015 = vld [vmem:[%s1009 + $0x28] sm:$0xff]
      %v1016 = vld [vmem:[%s1009 + $0x30] sm:$0xff]
      %v1017 = vld [vmem:[%s1009 + $0x38] sm:$0xff]
      %v1018 = vld [vmem:[%s1009 + $0x40] sm:$0xff]
      %v1019 = vld [vmem:[%s1009 + $0x48] sm:$0xff]
      %v1020 = vld [vmem:[%s1009 + $0x50] sm:$0xff]
      %v1021 = vld [vmem:[%s1009 + $0x58] sm:$0xff]
      %v1022 = vld [vmem:[%s1009 + $0x60] sm:$0xff]
      %v1023 = vld [vmem:[%s1009 + $0x68] sm:$0xff]
      %v1024 = vld [vmem:[%s1009 + $0x70] sm:$0xff]
      %v1025 = vld [vmem:[%s1009 + $0x78] sm:$0xff]
      %v1026 = vld [vmem:[%s1009 + $0x80] sm:$0xff]
      %v1027 = vld [vmem:[%s1009 + $0x88] sm:$0xff]
      %v1028 = vld [vmem:[%s1009 + $0x90] sm:$0xff]
      %v1029 = vld [vmem:[%s1009 + $0x98] sm:$0xff]
      %v1030 = vld [vmem:[%s1009 + $0xa0] sm:$0xff]
      %v1031 = vld [vmem:[%s1009 + $0xa8] sm:$0xff]
      %v1032 = vld [vmem:[%s1009 + $0xb0] sm:$0xff]
      %v1033 = vld [vmem:[%s1009 + $0xb8] sm:$0xff]
      %v1034 = vld [vmem:[%s1009 + $0xc0] sm:$0xff]
      %v1035 = vld [vmem:[%s1009 + $0xc8] sm:$0xff]
      %v1036 = vld [vmem:[%s1009 + $0xd0] sm:$0xff]
      %v1037 = vld [vmem:[%s1009 + $0xd8] sm:$0xff]
      %v1038 = vld [vmem:[%s1009 + $0xe0] sm:$0xff]
      %v1039 = vld [vmem:[%s1009 + $0xe8] sm:$0xff]
      %v1040 = vld [vmem:[%s1009 + $0xf0] sm:$0xff]
      %v1041 = vld [vmem:[%s1009 + $0xf8] sm:$0xff]
      %v1042 = vld [vmem:[%s1009 + $0x100] sm:$0xff]
      %v1043 = vld [vmem:[%s1009 + $0x108] sm:$0xff]
      %v1044 = vld [vmem:[%s1009 + $0x110] sm:$0xff]
      %v1045 = vld [vmem:[%s1009 + $0x118] sm:$0xff]
      %v1046 = vld [vmem:[%s1009 + $0x120] sm:$0xff]
      %v1047 = vld [vmem:[%s1009 + $0x128] sm:$0xff]
      %v1048 = vld [vmem:[%s1009 + $0x130] sm:$0xff]
      %v1049 = vld [vmem:[%s1009 + $0x138] sm:$0xff]
      %v1050 = vld [vmem:[%s1009 + $0x140] sm:$0xff]
      %v1051 = vld [vmem:[%s1009 + $0x148] sm:$0xff]
      %v1052 = vld [vmem:[%s1009 + $0x150] sm:$0xff]
      %v1053 = vld [vmem:[%s1009 + $0x158] sm:$0xff]
      %v1054 = vld [vmem:[%s1009 + $0x160] sm:$0xff]
      %v1055 = vld [vmem:[%s1009 + $0x168] sm:$0xff]
      %v1056 = vld [vmem:[%s1009 + $0x170] sm:$0xff]
      %v1057 = vld [vmem:[%s1009 + $0x178] sm:$0xff]
      %vm1062 = vcmask 1045504
      %v1063 = vrot.slane %v1005, 2
      %v1064 = vrot.slane %v374, 2
      %v1065 = vsel %vm1062, %v1063, %v1064
      %v1066 = vrot.slane %v1006, 2
      %v1067 = vrot.slane %v375, 2
      %v1068 = vsel %vm1062, %v1066, %v1067
      %v1069 = vrot.slane %v376, 2
      %v1070 = vsel %vm1062, %v1064, %v1069
      %v1071 = vrot.slane %v377, 2
      %v1072 = vsel %vm1062, %v1067, %v1071
      %v1073 = vrot.slane %v378, 2
      %v1074 = vsel %vm1062, %v1069, %v1073
      %v1075 = vrot.slane %v379, 2
      %v1076 = vsel %vm1062, %v1071, %v1075
      %v1077 = vrot.slane %v380, 2
      %v1078 = vsel %vm1062, %v1073, %v1077
      %v1079 = vrot.slane %v381, 2
      %v1080 = vsel %vm1062, %v1075, %v1079
      %v1081 = vrot.slane %v382, 2
      %v1082 = vsel %vm1062, %v1077, %v1081
      %v1083 = vrot.slane %v383, 2
      %v1084 = vsel %vm1062, %v1079, %v1083
      %v1085 = vrot.slane %v384, 2
      %v1086 = vsel %vm1062, %v1081, %v1085
      %v1087 = vrot.slane %v385, 2
      %v1088 = vsel %vm1062, %v1083, %v1087
      %v1089 = vrot.slane %v386, 2
      %v1090 = vsel %vm1062, %v1085, %v1089
      %v1091 = vrot.slane %v387, 2
      %v1092 = vsel %vm1062, %v1087, %v1091
      %v1093 = vrot.slane %v388, 2
      %v1094 = vsel %vm1062, %v1089, %v1093
      %v1095 = vrot.slane %v389, 2
      %v1096 = vsel %vm1062, %v1091, %v1095
      %v1097 = vrot.slane %v390, 2
      %v1098 = vsel %vm1062, %v1093, %v1097
      %v1099 = vrot.slane %v391, 2
      %v1100 = vsel %vm1062, %v1095, %v1099
      %v1101 = vrot.slane %v392, 2
      %v1102 = vsel %vm1062, %v1097, %v1101
      %v1103 = vrot.slane %v393, 2
      %v1104 = vsel %vm1062, %v1099, %v1103
      %v1105 = vrot.slane %v394, 2
      %v1106 = vsel %vm1062, %v1101, %v1105
      %v1107 = vrot.slane %v395, 2
      %v1108 = vsel %vm1062, %v1103, %v1107
      %v1109 = vrot.slane %v396, 2
      %v1110 = vsel %vm1062, %v1105, %v1109
      %v1111 = vrot.slane %v397, 2
      %v1112 = vsel %vm1062, %v1107, %v1111
      %v1113 = vrot.slane %v398, 2
      %v1114 = vsel %vm1062, %v1109, %v1113
      %v1115 = vrot.slane %v399, 2
      %v1116 = vsel %vm1062, %v1111, %v1115
      %v1117 = vrot.slane %v400, 2
      %v1118 = vsel %vm1062, %v1113, %v1117
      %v1119 = vrot.slane %v401, 2
      %v1120 = vsel %vm1062, %v1115, %v1119
      %v1121 = vrot.slane %v1007, 2
      %v1122 = vsel %vm1062, %v1117, %v1121
      %v1123 = vrot.slane %v1008, 2
      %v1124 = vsel %vm1062, %v1119, %v1123
      %v1141 = vsel %vm616, %v1068, 0
      %v1143 = vsel %vm616, %v1072, 0
      %v1145 = vsel %vm616, %v1076, 0
      %v1147 = vsel %vm616, %v1080, 0
      %v1149 = vsel %vm616, %v1084, 0
      %v1151 = vsel %vm616, %v1088, 0
      %v1153 = vsel %vm616, %v1092, 0
      %v1155 = vsel %vm616, %v1096, 0
      %v1157 = vsel %vm616, %v1100, 0
      %v1159 = vsel %vm616, %v1104, 0
      %v1161 = vsel %vm616, %v1108, 0
      %v1163 = vsel %vm616, %v1112, 0
      %v1165 = vsel %vm616, %v1116, 0
      %v1167 = vsel %vm616, %v1120, 0
      %v1169 = vsel %vm616, %v1124, 0
      %v1171 = vsel %vm616, %v1123, 0
      %1173 = vmatprep.subr.mxu0 %v1011
      %1174 = vmatpush1.msra.mxu0 %v1010
      %1175 = vmatprep.subr.mxu0 %v1013
      %1176 = vmatpush1.msra.mxu0 %v1012
      %1177 = vmatprep.subr.mxu0 %v1015
      %1178 = vmatpush1.msra.mxu0 %v1014
      %1179 = vmatprep.subr.mxu0 %v1017
      %1180 = vmatpush1.msra.mxu0 %v1016
      %1181 = vmatprep.subr.mxu0 %v1019
      %1182 = vmatpush1.msra.mxu0 %v1018
      %1183 = vmatprep.subr.mxu0 %v1021
      %1184 = vmatpush1.msra.mxu0 %v1020
      %1185 = vmatprep.subr.mxu0 %v1023
      %1186 = vmatpush1.msra.mxu0 %v1022
      %1187 = vmatprep.subr.mxu0 %v1025
      %1188 = vmatpush1.msra.mxu0 %v1024
      %1189 = vmatprep.subr.mxu0 %v1027
      %1190 = vmatpush1.msra.mxu0 %v1026
      %1191 = vmatprep.subr.mxu0 %v1029
      %1192 = vmatpush1.msra.mxu0 %v1028
      %1193 = vmatprep.subr.mxu0 %v1031
      %1194 = vmatpush1.msra.mxu0 %v1030
      %1195 = vmatprep.subr.mxu0 %v1033
      %1196 = vmatpush1.msra.mxu0 %v1032
      %1197 = vmatprep.subr.mxu0 %v1035
      %1198 = vmatpush1.msra.mxu0 %v1034
      %1199 = vmatprep.subr.mxu0 %v1037
      %1200 = vmatpush1.msra.mxu0 %v1036
      %1201 = vmatprep.subr.mxu0 %v1039
      %1202 = vmatpush1.msra.mxu0 %v1038
      %1203 = vmatprep.subr.mxu0 %v1041
      %1204 = vmatpush1.msra.mxu0 %v1040
      %1205 = vmatprep.subr.mxu0 %v1043
      %1206 = vmatpush1.msra.mxu0 %v1042
      %1207 = vmatprep.subr.mxu0 %v1045
      %1208 = vmatpush1.msra.mxu0 %v1044
      %1209 = vmatprep.subr.mxu0 %v1047
      %1210 = vmatpush1.msra.mxu0 %v1046
      %1211 = vmatprep.subr.mxu0 %v1049
      %1212 = vmatpush1.msra.mxu0 %v1048
      %1213 = vmatprep.subr.mxu0 %v1051
      %1214 = vmatpush1.msra.mxu0 %v1050
      %1215 = vmatprep.subr.mxu0 %v1053
      %1216 = vmatpush1.msra.mxu0 %v1052
      %1217 = vmatprep.subr.mxu0 %v1055
      %1218 = vmatpush1.msra.mxu0 %v1054
      %1219 = vmatprep.subr.mxu0 %v1057
      %1220 = vmatpush1.msra.mxu0 %v1056
      %1221 = vmatprep.subr.mxu0 0.0
      %1222 = vmatpush1.msra.mxu0 0.0
      %1223 = vmatprep.subr.mxu0 0.0
      %1224 = vmatpush1.msra.mxu0 0.0
      %1225 = vmatprep.subr.mxu0 0.0
      %1226 = vmatpush1.msra.mxu0 0.0
      %1227 = vmatprep.subr.mxu0 0.0
      %1228 = vmatpush1.msra.mxu0 0.0
      %1229 = vmatprep.subr.mxu0 0.0
      %1230 = vmatpush1.msra.mxu0 0.0
      %1231 = vmatprep.subr.mxu0 0.0
      %1232 = vmatpush1.msra.mxu0 0.0
      %1233 = vmatprep.subr.mxu0 0.0
      %1234 = vmatpush1.msra.mxu0 0.0
      %1235 = vmatprep.subr.mxu0 0.0
      %1236 = vmatpush1.msra.mxu0 0.0
      %1237 = vmatprep.mubr.f32.mxu0 %v1141
      %1238 = vmatmul.mubr.f32.gmra.mrb[0].mxu0 %v1065
      %v1239 = vpop.f32.mrb[0].mxu0
      %v1240 = vadd.f32 0.0, %v1239
      %v1241 = vpop.f32.mrb[0].mxu0
      %v1242 = vadd.f32 0.0, %v1241
      %1243 = vmatprep.mubr.f32.mxu0 %v1143
      %1244 = vmatmul.mubr.f32.gmra.mrb[0].mxu0 %v1070
      %v1245 = vpop.f32.mrb[0].mxu0
      %v1246 = vadd.f32 0.0, %v1245
      %v1247 = vpop.f32.mrb[0].mxu0
      %v1248 = vadd.f32 0.0, %v1247
      %1249 = vmatprep.mubr.f32.mxu0 %v1145
      %1250 = vmatmul.mubr.f32.gmra.mrb[0].mxu0 %v1074
      %v1251 = vpop.f32.mrb[0].mxu0
      %v1252 = vadd.f32 0.0, %v1251
      %v1253 = vpop.f32.mrb[0].mxu0
      %v1254 = vadd.f32 0.0, %v1253
      %1255 = vmatprep.mubr.f32.mxu0 %v1147
      %1256 = vmatmul.mubr.f32.gmra.mrb[0].mxu0 %v1078
      %v1257 = vpop.f32.mrb[0].mxu0
      %v1258 = vadd.f32 0.0, %v1257
      %v1259 = vpop.f32.mrb[0].mxu0
      %v1260 = vadd.f32 0.0, %v1259
      %1261 = vmatprep.mubr.f32.mxu0 %v1149
      %1262 = vmatmul.mubr.f32.gmra.mrb[0].mxu0 %v1082
      %v1263 = vpop.f32.mrb[0].mxu0
      %v1264 = vadd.f32 0.0, %v1263
      %v1265 = vpop.f32.mrb[0].mxu0
      %v1266 = vadd.f32 0.0, %v1265
      %1267 = vmatprep.mubr.f32.mxu0 %v1151
      %1268 = vmatmul.mubr.f32.gmra.mrb[0].mxu0 %v1086
      %v1269 = vpop.f32.mrb[0].mxu0
      %v1270 = vadd.f32 0.0, %v1269
      %v1271 = vpop.f32.mrb[0].mxu0
      %v1272 = vadd.f32 0.0, %v1271
      %1273 = vmatprep.mubr.f32.mxu0 %v1153
      %1274 = vmatmul.mubr.f32.gmra.mrb[0].mxu0 %v1090
      %v1275 = vpop.f32.mrb[0].mxu0
      %v1276 = vadd.f32 0.0, %v1275
      %v1277 = vpop.f32.mrb[0].mxu0
      %v1278 = vadd.f32 0.0, %v1277
      %1279 = vmatprep.mubr.f32.mxu0 %v1155
      %1280 = vmatmul.mubr.f32.gmra.mrb[0].mxu0 %v1094
      %v1281 = vpop.f32.mrb[0].mxu0
      %v1282 = vadd.f32 0.0, %v1281
      %v1283 = vpop.f32.mrb[0].mxu0
      %v1284 = vadd.f32 0.0, %v1283
      %1285 = vmatprep.mubr.f32.mxu0 %v1157
      %1286 = vmatmul.mubr.f32.gmra.mrb[0].mxu0 %v1098
      %v1287 = vpop.f32.mrb[0].mxu0
      %v1288 = vadd.f32 0.0, %v1287
      %v1289 = vpop.f32.mrb[0].mxu0
      %v1290 = vadd.f32 0.0, %v1289
      %1291 = vmatprep.mubr.f32.mxu0 %v1159
      %1292 = vmatmul.mubr.f32.gmra.mrb[0].mxu0 %v1102
      %v1293 = vpop.f32.mrb[0].mxu0
      %v1294 = vadd.f32 0.0, %v1293
      %v1295 = vpop.f32.mrb[0].mxu0
      %v1296 = vadd.f32 0.0, %v1295
      %1297 = vmatprep.mubr.f32.mxu0 %v1161
      %1298 = vmatmul.mubr.f32.gmra.mrb[0].mxu0 %v1106
      %v1299 = vpop.f32.mrb[0].mxu0
      %v1300 = vadd.f32 0.0, %v1299
      %v1301 = vpop.f32.mrb[0].mxu0
      %v1302 = vadd.f32 0.0, %v1301
      %1303 = vmatprep.mubr.f32.mxu0 %v1163
      %1304 = vmatmul.mubr.f32.gmra.mrb[0].mxu0 %v1110
      %v1305 = vpop.f32.mrb[0].mxu0
      %v1306 = vadd.f32 0.0, %v1305
      %v1307 = vpop.f32.mrb[0].mxu0
      %v1308 = vadd.f32 0.0, %v1307
      %1309 = vmatprep.mubr.f32.mxu0 %v1165
      %1310 = vmatmul.mubr.f32.gmra.mrb[0].mxu0 %v1114
      %v1311 = vpop.f32.mrb[0].mxu0
      %v1312 = vadd.f32 0.0, %v1311
      %v1313 = vpop.f32.mrb[0].mxu0
      %v1314 = vadd.f32 0.0, %v1313
      %1315 = vmatprep.mubr.f32.mxu0 %v1167
      %1316 = vmatmul.mubr.f32.gmra.mrb[0].mxu0 %v1118
      %v1317 = vpop.f32.mrb[0].mxu0
      %v1318 = vadd.f32 0.0, %v1317
      %v1319 = vpop.f32.mrb[0].mxu0
      %v1320 = vadd.f32 0.0, %v1319
      %1321 = vmatprep.mubr.f32.mxu0 %v1169
      %1322 = vmatmul.mubr.f32.gmra.mrb[0].mxu0 %v1122
      %v1323 = vpop.f32.mrb[0].mxu0
      %v1324 = vadd.f32 0.0, %v1323
      %v1325 = vpop.f32.mrb[0].mxu0
      %v1326 = vadd.f32 0.0, %v1325
      %1327 = vmatprep.mubr.f32.mxu0 %v1171
      %1328 = vmatmul.mubr.f32.gmra.mrb[0].mxu0 %v1121
      %v1329 = vpop.f32.mrb[0].mxu0
      %v1330 = vadd.f32 0.0, %v1329
      %v1331 = vpop.f32.mrb[0].mxu0
      %v1332 = vadd.f32 0.0, %v1331
      %1333 = vdwg.mxu0
      %v1334 = vadd.f32 %v911, %v1240
      %v1335 = vadd.f32 %v913, %v1242
      %v1336 = vadd.f32 %v917, %v1246
      %v1337 = vadd.f32 %v919, %v1248
      %v1338 = vadd.f32 %v923, %v1252
      %v1339 = vadd.f32 %v925, %v1254
      %v1340 = vadd.f32 %v929, %v1258
      %v1341 = vadd.f32 %v931, %v1260
      %v1342 = vadd.f32 %v935, %v1264
      %v1343 = vadd.f32 %v937, %v1266
      %v1344 = vadd.f32 %v941, %v1270
      %v1345 = vadd.f32 %v943, %v1272
      %v1346 = vadd.f32 %v947, %v1276
      %v1347 = vadd.f32 %v949, %v1278
      %v1348 = vadd.f32 %v953, %v1282
      %v1349 = vadd.f32 %v955, %v1284
      %v1350 = vadd.f32 %v959, %v1288
      %v1351 = vadd.f32 %v961, %v1290
      %v1352 = vadd.f32 %v965, %v1294
      %v1353 = vadd.f32 %v967, %v1296
      %v1354 = vadd.f32 %v971, %v1300
      %v1355 = vadd.f32 %v973, %v1302
      %v1356 = vadd.f32 %v977, %v1306
      %v1357 = vadd.f32 %v979, %v1308
      %v1358 = vadd.f32 %v983, %v1312
      %v1359 = vadd.f32 %v985, %v1314
      %v1360 = vadd.f32 %v989, %v1318
      %v1361 = vadd.f32 %v991, %v1320
      %v1362 = vadd.f32 %v995, %v1324
      %v1363 = vadd.f32 %v997, %v1326
      %v1364 = vadd.f32 %v1001, %v1330
      %v1365 = vadd.f32 %v1003, %v1332
      %v1366 = vld [vmem:[%s346 + $0x10] sm:$0xf0]
      %v1367 = vld [vmem:[%s346 + $0x18] sm:$0xf0]
      %v1368 = vld [vmem:[%s346 + $0x20] sm:$0xff]
      %v1369 = vld [vmem:[%s346 + $0x28] sm:$0xff]
      %v1370 = vld [vmem:[%s346 + $0x30] sm:$0xff]
      %v1371 = vld [vmem:[%s346 + $0x38] sm:$0xff]
      %v1372 = vld [vmem:[%s346 + $0x40] sm:$0xff]
      %v1373 = vld [vmem:[%s346 + $0x48] sm:$0xff]
      %v1374 = vld [vmem:[%s346 + $0x50] sm:$0xff]
      %v1375 = vld [vmem:[%s346 + $0x58] sm:$0xff]
      %v1376 = vld [vmem:[%s346 + $0x60] sm:$0xff]
      %v1377 = vld [vmem:[%s346 + $0x68] sm:$0xff]
      %v1378 = vld [vmem:[%s346 + $0x70] sm:$0xff]
      %v1379 = vld [vmem:[%s346 + $0x78] sm:$0xff]
      %v1380 = vld [vmem:[%s346 + $0x80] sm:$0xff]
      %v1381 = vld [vmem:[%s346 + $0x88] sm:$0xff]
      %v1382 = vld [vmem:[%s346 + $0x90] sm:$0xff]
      %v1383 = vld [vmem:[%s346 + $0x98] sm:$0xff]
      %v1384 = vld [vmem:[%s346 + $0xa0] sm:$0xff]
      %v1385 = vld [vmem:[%s346 + $0xa8] sm:$0xff]
      %v1386 = vld [vmem:[%s346 + $0xb0] sm:$0xff]
      %v1387 = vld [vmem:[%s346 + $0xb8] sm:$0xff]
      %v1388 = vld [vmem:[%s346 + $0xc0] sm:$0xff]
      %v1389 = vld [vmem:[%s346 + $0xc8] sm:$0xff]
      %v1390 = vld [vmem:[%s346 + $0xd0] sm:$0xff]
      %v1391 = vld [vmem:[%s346 + $0xd8] sm:$0xff]
      %v1392 = vld [vmem:[%s346 + $0xe0] sm:$0xff]
      %v1393 = vld [vmem:[%s346 + $0xe8] sm:$0xff]
      %v1394 = vld [vmem:[%s346 + $0xf0] sm:$0xff]
      %v1395 = vld [vmem:[%s346 + $0xf8] sm:$0xff]
      %v1396 = vld [vmem:[%s346 + $0x100] sm:$0x3f]
      %v1397 = vld [vmem:[%s346 + $0x108] sm:$0x3f]
      %s1398 = scalar_lea.vmem %s1, 1152
      %v1399 = vld [vmem:[%s1398] sm:$0xff]
      %v1400 = vld [vmem:[%s1398 + $0x8] sm:$0xff]
      %v1401 = vld [vmem:[%s1398 + $0x10] sm:$0xff]
      %v1402 = vld [vmem:[%s1398 + $0x18] sm:$0xff]
      %v1403 = vld [vmem:[%s1398 + $0x20] sm:$0xff]
      %v1404 = vld [vmem:[%s1398 + $0x28] sm:$0xff]
      %v1405 = vld [vmem:[%s1398 + $0x30] sm:$0xff]
      %v1406 = vld [vmem:[%s1398 + $0x38] sm:$0xff]
      %v1407 = vld [vmem:[%s1398 + $0x40] sm:$0xff]
      %v1408 = vld [vmem:[%s1398 + $0x48] sm:$0xff]
      %v1409 = vld [vmem:[%s1398 + $0x50] sm:$0xff]
      %v1410 = vld [vmem:[%s1398 + $0x58] sm:$0xff]
      %v1411 = vld [vmem:[%s1398 + $0x60] sm:$0xff]
      %v1412 = vld [vmem:[%s1398 + $0x68] sm:$0xff]
      %v1413 = vld [vmem:[%s1398 + $0x70] sm:$0xff]
      %v1414 = vld [vmem:[%s1398 + $0x78] sm:$0xff]
      %v1415 = vld [vmem:[%s1398 + $0x80] sm:$0xff]
      %v1416 = vld [vmem:[%s1398 + $0x88] sm:$0xff]
      %v1417 = vld [vmem:[%s1398 + $0x90] sm:$0xff]
      %v1418 = vld [vmem:[%s1398 + $0x98] sm:$0xff]
      %v1419 = vld [vmem:[%s1398 + $0xa0] sm:$0xff]
      %v1420 = vld [vmem:[%s1398 + $0xa8] sm:$0xff]
      %v1421 = vld [vmem:[%s1398 + $0xb0] sm:$0xff]
      %v1422 = vld [vmem:[%s1398 + $0xb8] sm:$0xff]
      %v1423 = vld [vmem:[%s1398 + $0xc0] sm:$0xff]
      %v1424 = vld [vmem:[%s1398 + $0xc8] sm:$0xff]
      %v1425 = vld [vmem:[%s1398 + $0xd0] sm:$0xff]
      %v1426 = vld [vmem:[%s1398 + $0xd8] sm:$0xff]
      %v1427 = vld [vmem:[%s1398 + $0xe0] sm:$0xff]
      %v1428 = vld [vmem:[%s1398 + $0xe8] sm:$0xff]
      %v1429 = vld [vmem:[%s1398 + $0xf0] sm:$0xff]
      %v1430 = vld [vmem:[%s1398 + $0xf8] sm:$0xff]
      %v1431 = vld [vmem:[%s1398 + $0x100] sm:$0xff]
      %v1432 = vld [vmem:[%s1398 + $0x108] sm:$0xff]
      %v1433 = vld [vmem:[%s1398 + $0x110] sm:$0xff]
      %v1434 = vld [vmem:[%s1398 + $0x118] sm:$0xff]
      %v1435 = vld [vmem:[%s1398 + $0x120] sm:$0xff]
      %v1436 = vld [vmem:[%s1398 + $0x128] sm:$0xff]
      %v1437 = vld [vmem:[%s1398 + $0x130] sm:$0xff]
      %v1438 = vld [vmem:[%s1398 + $0x138] sm:$0xff]
      %v1439 = vld [vmem:[%s1398 + $0x140] sm:$0xff]
      %v1440 = vld [vmem:[%s1398 + $0x148] sm:$0xff]
      %v1441 = vld [vmem:[%s1398 + $0x150] sm:$0xff]
      %v1442 = vld [vmem:[%s1398 + $0x158] sm:$0xff]
      %v1443 = vld [vmem:[%s1398 + $0x160] sm:$0xff]
      %v1444 = vld [vmem:[%s1398 + $0x168] sm:$0xff]
      %v1445 = vld [vmem:[%s1398 + $0x170] sm:$0xff]
      %v1446 = vld [vmem:[%s1398 + $0x178] sm:$0xff]
      %vm1479 = vcmask 1043456
      %v1480 = vrot.slane %v1366, 4
      %v1481 = vrot.slane %v1368, 4
      %v1482 = vsel %vm1479, %v1480, %v1481
      %v1483 = vrot.slane %v1367, 4
      %v1484 = vrot.slane %v1369, 4
      %v1485 = vsel %vm1479, %v1483, %v1484
      %v1486 = vrot.slane %v1370, 4
      %v1487 = vsel %vm1479, %v1481, %v1486
      %v1488 = vrot.slane %v1371, 4
      %v1489 = vsel %vm1479, %v1484, %v1488
      %v1490 = vrot.slane %v1372, 4
      %v1491 = vsel %vm1479, %v1486, %v1490
      %v1492 = vrot.slane %v1373, 4
      %v1493 = vsel %vm1479, %v1488, %v1492
      %v1494 = vrot.slane %v1374, 4
      %v1495 = vsel %vm1479, %v1490, %v1494
      %v1496 = vrot.slane %v1375, 4
      %v1497 = vsel %vm1479, %v1492, %v1496
      %v1498 = vrot.slane %v1376, 4
      %v1499 = vsel %vm1479, %v1494, %v1498
      %v1500 = vrot.slane %v1377, 4
      %v1501 = vsel %vm1479, %v1496, %v1500
      %v1502 = vrot.slane %v1378, 4
      %v1503 = vsel %vm1479, %v1498, %v1502
      %v1504 = vrot.slane %v1379, 4
      %v1505 = vsel %vm1479, %v1500, %v1504
      %v1506 = vrot.slane %v1380, 4
      %v1507 = vsel %vm1479, %v1502, %v1506
      %v1508 = vrot.slane %v1381, 4
      %v1509 = vsel %vm1479, %v1504, %v1508
      %v1510 = vrot.slane %v1382, 4
      %v1511 = vsel %vm1479, %v1506, %v1510
      %v1512 = vrot.slane %v1383, 4
      %v1513 = vsel %vm1479, %v1508, %v1512
      %v1514 = vrot.slane %v1384, 4
      %v1515 = vsel %vm1479, %v1510, %v1514
      %v1516 = vrot.slane %v1385, 4
      %v1517 = vsel %vm1479, %v1512, %v1516
      %v1518 = vrot.slane %v1386, 4
      %v1519 = vsel %vm1479, %v1514, %v1518
      %v1520 = vrot.slane %v1387, 4
      %v1521 = vsel %vm1479, %v1516, %v1520
      %v1522 = vrot.slane %v1388, 4
      %v1523 = vsel %vm1479, %v1518, %v1522
      %v1524 = vrot.slane %v1389, 4
      %v1525 = vsel %vm1479, %v1520, %v1524
      %v1526 = vrot.slane %v1390, 4
      %v1527 = vsel %vm1479, %v1522, %v1526
      %v1528 = vrot.slane %v1391, 4
      %v1529 = vsel %vm1479, %v1524, %v1528
      %v1530 = vrot.slane %v1392, 4
      %v1531 = vsel %vm1479, %v1526, %v1530
      %v1532 = vrot.slane %v1393, 4
      %v1533 = vsel %vm1479, %v1528, %v1532
      %v1534 = vrot.slane %v1394, 4
      %v1535 = vsel %vm1479, %v1530, %v1534
      %v1536 = vrot.slane %v1395, 4
      %v1537 = vsel %vm1479, %v1532, %v1536
      %v1538 = vrot.slane %v1396, 4
      %v1539 = vsel %vm1479, %v1534, %v1538
      %v1540 = vrot.slane %v1397, 4
      %v1541 = vsel %vm1479, %v1536, %v1540
      %v1558 = vsel %vm616, %v1485, 0
      %v1560 = vsel %vm616, %v1489, 0
      %v1562 = vsel %vm616, %v1493, 0
      %v1564 = vsel %vm616, %v1497, 0
      %v1566 = vsel %vm616, %v1501, 0
      %v1568 = vsel %vm616, %v1505, 0
      %v1570 = vsel %vm616, %v1509, 0
      %v1572 = vsel %vm616, %v1513, 0
      %v1574 = vsel %vm616, %v1517, 0
      %v1576 = vsel %vm616, %v1521, 0
      %v1578 = vsel %vm616, %v1525, 0
      %v1580 = vsel %vm616, %v1529, 0
      %v1582 = vsel %vm616, %v1533, 0
      %v1584 = vsel %vm616, %v1537, 0
      %v1586 = vsel %vm616, %v1541, 0
      %v1588 = vsel %vm616, %v1540, 0
      %1590 = vmatprep.subr.mxu0 %v1400
      %1591 = vmatpush1.msra.mxu0 %v1399
      %1592 = vmatprep.subr.mxu0 %v1402
      %1593 = vmatpush1.msra.mxu0 %v1401
      %1594 = vmatprep.subr.mxu0 %v1404
      %1595 = vmatpush1.msra.mxu0 %v1403
      %1596 = vmatprep.subr.mxu0 %v1406
      %1597 = vmatpush1.msra.mxu0 %v1405
      %1598 = vmatprep.subr.mxu0 %v1408
      %1599 = vmatpush1.msra.mxu0 %v1407
      %1600 = vmatprep.subr.mxu0 %v1410
      %1601 = vmatpush1.msra.mxu0 %v1409
      %1602 = vmatprep.subr.mxu0 %v1412
      %1603 = vmatpush1.msra.mxu0 %v1411
      %1604 = vmatprep.subr.mxu0 %v1414
      %1605 = vmatpush1.msra.mxu0 %v1413
      %1606 = vmatprep.subr.mxu0 %v1416
      %1607 = vmatpush1.msra.mxu0 %v1415
      %1608 = vmatprep.subr.mxu0 %v1418
      %1609 = vmatpush1.msra.mxu0 %v1417
      %1610 = vmatprep.subr.mxu0 %v1420
      %1611 = vmatpush1.msra.mxu0 %v1419
      %1612 = vmatprep.subr.mxu0 %v1422
      %1613 = vmatpush1.msra.mxu0 %v1421
      %1614 = vmatprep.subr.mxu0 %v1424
      %1615 = vmatpush1.msra.mxu0 %v1423
      %1616 = vmatprep.subr.mxu0 %v1426
      %1617 = vmatpush1.msra.mxu0 %v1425
      %1618 = vmatprep.subr.mxu0 %v1428
      %1619 = vmatpush1.msra.mxu0 %v1427
      %1620 = vmatprep.subr.mxu0 %v1430
      %1621 = vmatpush1.msra.mxu0 %v1429
      %1622 = vmatprep.subr.mxu0 %v1432
      %1623 = vmatpush1.msra.mxu0 %v1431
      %1624 = vmatprep.subr.mxu0 %v1434
      %1625 = vmatpush1.msra.mxu0 %v1433
      %1626 = vmatprep.subr.mxu0 %v1436
      %1627 = vmatpush1.msra.mxu0 %v1435
      %1628 = vmatprep.subr.mxu0 %v1438
      %1629 = vmatpush1.msra.mxu0 %v1437
      %1630 = vmatprep.subr.mxu0 %v1440
      %1631 = vmatpush1.msra.mxu0 %v1439
      %1632 = vmatprep.subr.mxu0 %v1442
      %1633 = vmatpush1.msra.mxu0 %v1441
      %1634 = vmatprep.subr.mxu0 %v1444
      %1635 = vmatpush1.msra.mxu0 %v1443
      %1636 = vmatprep.subr.mxu0 %v1446
      %1637 = vmatpush1.msra.mxu0 %v1445
      %1638 = vmatprep.subr.mxu0 0.0
      %1639 = vmatpush1.msra.mxu0 0.0
      %1640 = vmatprep.subr.mxu0 0.0
      %1641 = vmatpush1.msra.mxu0 0.0
      %1642 = vmatprep.subr.mxu0 0.0
      %1643 = vmatpush1.msra.mxu0 0.0
      %1644 = vmatprep.subr.mxu0 0.0
      %1645 = vmatpush1.msra.mxu0 0.0
      %1646 = vmatprep.subr.mxu0 0.0
      %1647 = vmatpush1.msra.mxu0 0.0
      %1648 = vmatprep.subr.mxu0 0.0
      %1649 = vmatpush1.msra.mxu0 0.0
      %1650 = vmatprep.subr.mxu0 0.0
      %1651 = vmatpush1.msra.mxu0 0.0
      %1652 = vmatprep.subr.mxu0 0.0
      %1653 = vmatpush1.msra.mxu0 0.0
      %1654 = vmatprep.mubr.f32.mxu0 %v1558
      %1655 = vmatmul.mubr.f32.gmra.mrb[0].mxu0 %v1482
      %v1656 = vpop.f32.mrb[0].mxu0
      %v1657 = vadd.f32 0.0, %v1656
      %v1658 = vpop.f32.mrb[0].mxu0
      %v1659 = vadd.f32 0.0, %v1658
      %1660 = vmatprep.mubr.f32.mxu0 %v1560
      %1661 = vmatmul.mubr.f32.gmra.mrb[0].mxu0 %v1487
      %v1662 = vpop.f32.mrb[0].mxu0
      %v1663 = vadd.f32 0.0, %v1662
      %v1664 = vpop.f32.mrb[0].mxu0
      %v1665 = vadd.f32 0.0, %v1664
      %1666 = vmatprep.mubr.f32.mxu0 %v1562
      %1667 = vmatmul.mubr.f32.gmra.mrb[0].mxu0 %v1491
      %v1668 = vpop.f32.mrb[0].mxu0
      %v1669 = vadd.f32 0.0, %v1668
      %v1670 = vpop.f32.mrb[0].mxu0
      %v1671 = vadd.f32 0.0, %v1670
      %1672 = vmatprep.mubr.f32.mxu0 %v1564
      %1673 = vmatmul.mubr.f32.gmra.mrb[0].mxu0 %v1495
      %v1674 = vpop.f32.mrb[0].mxu0
      %v1675 = vadd.f32 0.0, %v1674
      %v1676 = vpop.f32.mrb[0].mxu0
      %v1677 = vadd.f32 0.0, %v1676
      %1678 = vmatprep.mubr.f32.mxu0 %v1566
      %1679 = vmatmul.mubr.f32.gmra.mrb[0].mxu0 %v1499
      %v1680 = vpop.f32.mrb[0].mxu0
      %v1681 = vadd.f32 0.0, %v1680
      %v1682 = vpop.f32.mrb[0].mxu0
      %v1683 = vadd.f32 0.0, %v1682
      %1684 = vmatprep.mubr.f32.mxu0 %v1568
      %1685 = vmatmul.mubr.f32.gmra.mrb[0].mxu0 %v1503
      %v1686 = vpop.f32.mrb[0].mxu0
      %v1687 = vadd.f32 0.0, %v1686
      %v1688 = vpop.f32.mrb[0].mxu0
      %v1689 = vadd.f32 0.0, %v1688
      %1690 = vmatprep.mubr.f32.mxu0 %v1570
      %1691 = vmatmul.mubr.f32.gmra.mrb[0].mxu0 %v1507
      %v1692 = vpop.f32.mrb[0].mxu0
      %v1693 = vadd.f32 0.0, %v1692
      %v1694 = vpop.f32.mrb[0].mxu0
      %v1695 = vadd.f32 0.0, %v1694
      %1696 = vmatprep.mubr.f32.mxu0 %v1572
      %1697 = vmatmul.mubr.f32.gmra.mrb[0].mxu0 %v1511
      %v1698 = vpop.f32.mrb[0].mxu0
      %v1699 = vadd.f32 0.0, %v1698
      %v1700 = vpop.f32.mrb[0].mxu0
      %v1701 = vadd.f32 0.0, %v1700
      %1702 = vmatprep.mubr.f32.mxu0 %v1574
      %1703 = vmatmul.mubr.f32.gmra.mrb[0].mxu0 %v1515
      %v1704 = vpop.f32.mrb[0].mxu0
      %v1705 = vadd.f32 0.0, %v1704
      %v1706 = vpop.f32.mrb[0].mxu0
      %v1707 = vadd.f32 0.0, %v1706
      %1708 = vmatprep.mubr.f32.mxu0 %v1576
      %1709 = vmatmul.mubr.f32.gmra.mrb[0].mxu0 %v1519
      %v1710 = vpop.f32.mrb[0].mxu0
      %v1711 = vadd.f32 0.0, %v1710
      %v1712 = vpop.f32.mrb[0].mxu0
      %v1713 = vadd.f32 0.0, %v1712
      %1714 = vmatprep.mubr.f32.mxu0 %v1578
      %1715 = vmatmul.mubr.f32.gmra.mrb[0].mxu0 %v1523
      %v1716 = vpop.f32.mrb[0].mxu0
      %v1717 = vadd.f32 0.0, %v1716
      %v1718 = vpop.f32.mrb[0].mxu0
      %v1719 = vadd.f32 0.0, %v1718
      %1720 = vmatprep.mubr.f32.mxu0 %v1580
      %1721 = vmatmul.mubr.f32.gmra.mrb[0].mxu0 %v1527
      %v1722 = vpop.f32.mrb[0].mxu0
      %v1723 = vadd.f32 0.0, %v1722
      %v1724 = vpop.f32.mrb[0].mxu0
      %v1725 = vadd.f32 0.0, %v1724
      %1726 = vmatprep.mubr.f32.mxu0 %v1582
      %1727 = vmatmul.mubr.f32.gmra.mrb[0].mxu0 %v1531
      %v1728 = vpop.f32.mrb[0].mxu0
      %v1729 = vadd.f32 0.0, %v1728
      %v1730 = vpop.f32.mrb[0].mxu0
      %v1731 = vadd.f32 0.0, %v1730
      %1732 = vmatprep.mubr.f32.mxu0 %v1584
      %1733 = vmatmul.mubr.f32.gmra.mrb[0].mxu0 %v1535
      %v1734 = vpop.f32.mrb[0].mxu0
      %v1735 = vadd.f32 0.0, %v1734
      %v1736 = vpop.f32.mrb[0].mxu0
      %v1737 = vadd.f32 0.0, %v1736
      %1738 = vmatprep.mubr.f32.mxu0 %v1586
      %1739 = vmatmul.mubr.f32.gmra.mrb[0].mxu0 %v1539
      %v1740 = vpop.f32.mrb[0].mxu0
      %v1741 = vadd.f32 0.0, %v1740
      %v1742 = vpop.f32.mrb[0].mxu0
      %v1743 = vadd.f32 0.0, %v1742
      %1744 = vmatprep.mubr.f32.mxu0 %v1588
      %1745 = vmatmul.mubr.f32.gmra.mrb[0].mxu0 %v1538
      %v1746 = vpop.f32.mrb[0].mxu0
      %v1747 = vadd.f32 0.0, %v1746
      %v1748 = vpop.f32.mrb[0].mxu0
      %v1749 = vadd.f32 0.0, %v1748
      %1750 = vdwg.mxu0
      %v1751 = vadd.f32 %v1334, %v1657
      %v1752 = vadd.f32 %v1335, %v1659
      %v1753 = vadd.f32 %v1336, %v1663
      %v1754 = vadd.f32 %v1337, %v1665
      %v1755 = vadd.f32 %v1338, %v1669
      %v1756 = vadd.f32 %v1339, %v1671
      %v1757 = vadd.f32 %v1340, %v1675
      %v1758 = vadd.f32 %v1341, %v1677
      %v1759 = vadd.f32 %v1342, %v1681
      %v1760 = vadd.f32 %v1343, %v1683
      %v1761 = vadd.f32 %v1344, %v1687
      %v1762 = vadd.f32 %v1345, %v1689
      %v1763 = vadd.f32 %v1346, %v1693
      %v1764 = vadd.f32 %v1347, %v1695
      %v1765 = vadd.f32 %v1348, %v1699
      %v1766 = vadd.f32 %v1349, %v1701
      %v1767 = vadd.f32 %v1350, %v1705
      %v1768 = vadd.f32 %v1351, %v1707
      %v1769 = vadd.f32 %v1352, %v1711
      %v1770 = vadd.f32 %v1353, %v1713
      %v1771 = vadd.f32 %v1354, %v1717
      %v1772 = vadd.f32 %v1355, %v1719
      %v1773 = vadd.f32 %v1356, %v1723
      %v1774 = vadd.f32 %v1357, %v1725
      %v1775 = vadd.f32 %v1358, %v1729
      %v1776 = vadd.f32 %v1359, %v1731
      %v1777 = vadd.f32 %v1360, %v1735
      %v1778 = vadd.f32 %v1361, %v1737
      %v1779 = vadd.f32 %v1362, %v1741
      %v1780 = vadd.f32 %v1363, %v1743
      %v1781 = vadd.f32 %v1364, %v1747
      %v1782 = vadd.f32 %v1365, %v1749
      %v1783 = vld [vmem:[%s346 + $0x10] sm:$0xe0]
      %v1784 = vld [vmem:[%s346 + $0x18] sm:$0xe0]
      %v1785 = vld [vmem:[%s346 + $0x100] sm:$0x7f]
      %v1786 = vld [vmem:[%s346 + $0x108] sm:$0x7f]
      %s1787 = scalar_lea.vmem %s1, 1536
      %v1788 = vld [vmem:[%s1787] sm:$0xff]
      %v1789 = vld [vmem:[%s1787 + $0x8] sm:$0xff]
      %v1790 = vld [vmem:[%s1787 + $0x10] sm:$0xff]
      %v1791 = vld [vmem:[%s1787 + $0x18] sm:$0xff]
      %v1792 = vld [vmem:[%s1787 + $0x20] sm:$0xff]
      %v1793 = vld [vmem:[%s1787 + $0x28] sm:$0xff]
      %v1794 = vld [vmem:[%s1787 + $0x30] sm:$0xff]
      %v1795 = vld [vmem:[%s1787 + $0x38] sm:$0xff]
      %v1796 = vld [vmem:[%s1787 + $0x40] sm:$0xff]
      %v1797 = vld [vmem:[%s1787 + $0x48] sm:$0xff]
      %v1798 = vld [vmem:[%s1787 + $0x50] sm:$0xff]
      %v1799 = vld [vmem:[%s1787 + $0x58] sm:$0xff]
      %v1800 = vld [vmem:[%s1787 + $0x60] sm:$0xff]
      %v1801 = vld [vmem:[%s1787 + $0x68] sm:$0xff]
      %v1802 = vld [vmem:[%s1787 + $0x70] sm:$0xff]
      %v1803 = vld [vmem:[%s1787 + $0x78] sm:$0xff]
      %v1804 = vld [vmem:[%s1787 + $0x80] sm:$0xff]
      %v1805 = vld [vmem:[%s1787 + $0x88] sm:$0xff]
      %v1806 = vld [vmem:[%s1787 + $0x90] sm:$0xff]
      %v1807 = vld [vmem:[%s1787 + $0x98] sm:$0xff]
      %v1808 = vld [vmem:[%s1787 + $0xa0] sm:$0xff]
      %v1809 = vld [vmem:[%s1787 + $0xa8] sm:$0xff]
      %v1810 = vld [vmem:[%s1787 + $0xb0] sm:$0xff]
      %v1811 = vld [vmem:[%s1787 + $0xb8] sm:$0xff]
      %v1812 = vld [vmem:[%s1787 + $0xc0] sm:$0xff]
      %v1813 = vld [vmem:[%s1787 + $0xc8] sm:$0xff]
      %v1814 = vld [vmem:[%s1787 + $0xd0] sm:$0xff]
      %v1815 = vld [vmem:[%s1787 + $0xd8] sm:$0xff]
      %v1816 = vld [vmem:[%s1787 + $0xe0] sm:$0xff]
      %v1817 = vld [vmem:[%s1787 + $0xe8] sm:$0xff]
      %v1818 = vld [vmem:[%s1787 + $0xf0] sm:$0xff]
      %v1819 = vld [vmem:[%s1787 + $0xf8] sm:$0xff]
      %v1820 = vld [vmem:[%s1787 + $0x100] sm:$0xff]
      %v1821 = vld [vmem:[%s1787 + $0x108] sm:$0xff]
      %v1822 = vld [vmem:[%s1787 + $0x110] sm:$0xff]
      %v1823 = vld [vmem:[%s1787 + $0x118] sm:$0xff]
      %v1824 = vld [vmem:[%s1787 + $0x120] sm:$0xff]
      %v1825 = vld [vmem:[%s1787 + $0x128] sm:$0xff]
      %v1826 = vld [vmem:[%s1787 + $0x130] sm:$0xff]
      %v1827 = vld [vmem:[%s1787 + $0x138] sm:$0xff]
      %v1828 = vld [vmem:[%s1787 + $0x140] sm:$0xff]
      %v1829 = vld [vmem:[%s1787 + $0x148] sm:$0xff]
      %v1830 = vld [vmem:[%s1787 + $0x150] sm:$0xff]
      %v1831 = vld [vmem:[%s1787 + $0x158] sm:$0xff]
      %v1832 = vld [vmem:[%s1787 + $0x160] sm:$0xff]
      %v1833 = vld [vmem:[%s1787 + $0x168] sm:$0xff]
      %v1834 = vld [vmem:[%s1787 + $0x170] sm:$0xff]
      %v1835 = vld [vmem:[%s1787 + $0x178] sm:$0xff]
      %vm1840 = vcmask 1042432
      %v1841 = vrot.slane %v1783, 5
      %v1842 = vrot.slane %v1368, 5
      %v1843 = vsel %vm1840, %v1841, %v1842
      %v1844 = vrot.slane %v1784, 5
      %v1845 = vrot.slane %v1369, 5
      %v1846 = vsel %vm1840, %v1844, %v1845
      %v1847 = vrot.slane %v1370, 5
      %v1848 = vsel %vm1840, %v1842, %v1847
      %v1849 = vrot.slane %v1371, 5
      %v1850 = vsel %vm1840, %v1845, %v1849
      %v1851 = vrot.slane %v1372, 5
      %v1852 = vsel %vm1840, %v1847, %v1851
      %v1853 = vrot.slane %v1373, 5
      %v1854 = vsel %vm1840, %v1849, %v1853
      %v1855 = vrot.slane %v1374, 5
      %v1856 = vsel %vm1840, %v1851, %v1855
      %v1857 = vrot.slane %v1375, 5
      %v1858 = vsel %vm1840, %v1853, %v1857
      %v1859 = vrot.slane %v1376, 5
      %v1860 = vsel %vm1840, %v1855, %v1859
      %v1861 = vrot.slane %v1377, 5
      %v1862 = vsel %vm1840, %v1857, %v1861
      %v1863 = vrot.slane %v1378, 5
      %v1864 = vsel %vm1840, %v1859, %v1863
      %v1865 = vrot.slane %v1379, 5
      %v1866 = vsel %vm1840, %v1861, %v1865
      %v1867 = vrot.slane %v1380, 5
      %v1868 = vsel %vm1840, %v1863, %v1867
      %v1869 = vrot.slane %v1381, 5
      %v1870 = vsel %vm1840, %v1865, %v1869
      %v1871 = vrot.slane %v1382, 5
      %v1872 = vsel %vm1840, %v1867, %v1871
      %v1873 = vrot.slane %v1383, 5
      %v1874 = vsel %vm1840, %v1869, %v1873
      %v1875 = vrot.slane %v1384, 5
      %v1876 = vsel %vm1840, %v1871, %v1875
      %v1877 = vrot.slane %v1385, 5
      %v1878 = vsel %vm1840, %v1873, %v1877
      %v1879 = vrot.slane %v1386, 5
      %v1880 = vsel %vm1840, %v1875, %v1879
      %v1881 = vrot.slane %v1387, 5
      %v1882 = vsel %vm1840, %v1877, %v1881
      %v1883 = vrot.slane %v1388, 5
      %v1884 = vsel %vm1840, %v1879, %v1883
      %v1885 = vrot.slane %v1389, 5
      %v1886 = vsel %vm1840, %v1881, %v1885
      %v1887 = vrot.slane %v1390, 5
      %v1888 = vsel %vm1840, %v1883, %v1887
      %v1889 = vrot.slane %v1391, 5
      %v1890 = vsel %vm1840, %v1885, %v1889
      %v1891 = vrot.slane %v1392, 5
      %v1892 = vsel %vm1840, %v1887, %v1891
      %v1893 = vrot.slane %v1393, 5
      %v1894 = vsel %vm1840, %v1889, %v1893
      %v1895 = vrot.slane %v1394, 5
      %v1896 = vsel %vm1840, %v1891, %v1895
      %v1897 = vrot.slane %v1395, 5
      %v1898 = vsel %vm1840, %v1893, %v1897
      %v1899 = vrot.slane %v1785, 5
      %v1900 = vsel %vm1840, %v1895, %v1899
      %v1901 = vrot.slane %v1786, 5
      %v1902 = vsel %vm1840, %v1897, %v1901
      %v1919 = vsel %vm616, %v1846, 0
      %v1921 = vsel %vm616, %v1850, 0
      %v1923 = vsel %vm616, %v1854, 0
      %v1925 = vsel %vm616, %v1858, 0
      %v1927 = vsel %vm616, %v1862, 0
      %v1929 = vsel %vm616, %v1866, 0
      %v1931 = vsel %vm616, %v1870, 0
      %v1933 = vsel %vm616, %v1874, 0
      %v1935 = vsel %vm616, %v1878, 0
      %v1937 = vsel %vm616, %v1882, 0
      %v1939 = vsel %vm616, %v1886, 0
      %v1941 = vsel %vm616, %v1890, 0
      %v1943 = vsel %vm616, %v1894, 0
      %v1945 = vsel %vm616, %v1898, 0
      %v1947 = vsel %vm616, %v1902, 0
      %v1949 = vsel %vm616, %v1901, 0
      %1951 = vmatprep.subr.mxu0 %v1789
      %1952 = vmatpush1.msra.mxu0 %v1788
      %1953 = vmatprep.subr.mxu0 %v1791
      %1954 = vmatpush1.msra.mxu0 %v1790
      %1955 = vmatprep.subr.mxu0 %v1793
      %1956 = vmatpush1.msra.mxu0 %v1792
      %1957 = vmatprep.subr.mxu0 %v1795
      %1958 = vmatpush1.msra.mxu0 %v1794
      %1959 = vmatprep.subr.mxu0 %v1797
      %1960 = vmatpush1.msra.mxu0 %v1796
      %1961 = vmatprep.subr.mxu0 %v1799
      %1962 = vmatpush1.msra.mxu0 %v1798
      %1963 = vmatprep.subr.mxu0 %v1801
      %1964 = vmatpush1.msra.mxu0 %v1800
      %1965 = vmatprep.subr.mxu0 %v1803
      %1966 = vmatpush1.msra.mxu0 %v1802
      %1967 = vmatprep.subr.mxu0 %v1805
      %1968 = vmatpush1.msra.mxu0 %v1804
      %1969 = vmatprep.subr.mxu0 %v1807
      %1970 = vmatpush1.msra.mxu0 %v1806
      %1971 = vmatprep.subr.mxu0 %v1809
      %1972 = vmatpush1.msra.mxu0 %v1808
      %1973 = vmatprep.subr.mxu0 %v1811
      %1974 = vmatpush1.msra.mxu0 %v1810
      %1975 = vmatprep.subr.mxu0 %v1813
      %1976 = vmatpush1.msra.mxu0 %v1812
      %1977 = vmatprep.subr.mxu0 %v1815
      %1978 = vmatpush1.msra.mxu0 %v1814
      %1979 = vmatprep.subr.mxu0 %v1817
      %1980 = vmatpush1.msra.mxu0 %v1816
      %1981 = vmatprep.subr.mxu0 %v1819
      %1982 = vmatpush1.msra.mxu0 %v1818
      %1983 = vmatprep.subr.mxu0 %v1821
      %1984 = vmatpush1.msra.mxu0 %v1820
      %1985 = vmatprep.subr.mxu0 %v1823
      %1986 = vmatpush1.msra.mxu0 %v1822
      %1987 = vmatprep.subr.mxu0 %v1825
      %1988 = vmatpush1.msra.mxu0 %v1824
      %1989 = vmatprep.subr.mxu0 %v1827
      %1990 = vmatpush1.msra.mxu0 %v1826
      %1991 = vmatprep.subr.mxu0 %v1829
      %1992 = vmatpush1.msra.mxu0 %v1828
      %1993 = vmatprep.subr.mxu0 %v1831
      %1994 = vmatpush1.msra.mxu0 %v1830
      %1995 = vmatprep.subr.mxu0 %v1833
      %1996 = vmatpush1.msra.mxu0 %v1832
      %1997 = vmatprep.subr.mxu0 %v1835
      %1998 = vmatpush1.msra.mxu0 %v1834
      %1999 = vmatprep.subr.mxu0 0.0
      %2000 = vmatpush1.msra.mxu0 0.0
      %2001 = vmatprep.subr.mxu0 0.0
      %2002 = vmatpush1.msra.mxu0 0.0
      %2003 = vmatprep.subr.mxu0 0.0
      %2004 = vmatpush1.msra.mxu0 0.0
      %2005 = vmatprep.subr.mxu0 0.0
      %2006 = vmatpush1.msra.mxu0 0.0
      %2007 = vmatprep.subr.mxu0 0.0
      %2008 = vmatpush1.msra.mxu0 0.0
      %2009 = vmatprep.subr.mxu0 0.0
      %2010 = vmatpush1.msra.mxu0 0.0
      %2011 = vmatprep.subr.mxu0 0.0
      %2012 = vmatpush1.msra.mxu0 0.0
      %2013 = vmatprep.subr.mxu0 0.0
      %2014 = vmatpush1.msra.mxu0 0.0
      %2015 = vmatprep.mubr.f32.mxu0 %v1919
      %2016 = vmatmul.mubr.f32.gmra.mrb[0].mxu0 %v1843
      %v2017 = vpop.f32.mrb[0].mxu0
      %v2018 = vadd.f32 0.0, %v2017
      %v2019 = vpop.f32.mrb[0].mxu0
      %v2020 = vadd.f32 0.0, %v2019
      %2021 = vmatprep.mubr.f32.mxu0 %v1921
      %2022 = vmatmul.mubr.f32.gmra.mrb[0].mxu0 %v1848
      %v2023 = vpop.f32.mrb[0].mxu0
      %v2024 = vadd.f32 0.0, %v2023
      %v2025 = vpop.f32.mrb[0].mxu0
      %v2026 = vadd.f32 0.0, %v2025
      %2027 = vmatprep.mubr.f32.mxu0 %v1923
      %2028 = vmatmul.mubr.f32.gmra.mrb[0].mxu0 %v1852
      %v2029 = vpop.f32.mrb[0].mxu0
      %v2030 = vadd.f32 0.0, %v2029
      %v2031 = vpop.f32.mrb[0].mxu0
      %v2032 = vadd.f32 0.0, %v2031
      %2033 = vmatprep.mubr.f32.mxu0 %v1925
      %2034 = vmatmul.mubr.f32.gmra.mrb[0].mxu0 %v1856
      %v2035 = vpop.f32.mrb[0].mxu0
      %v2036 = vadd.f32 0.0, %v2035
      %v2037 = vpop.f32.mrb[0].mxu0
      %v2038 = vadd.f32 0.0, %v2037
      %2039 = vmatprep.mubr.f32.mxu0 %v1927
      %2040 = vmatmul.mubr.f32.gmra.mrb[0].mxu0 %v1860
      %v2041 = vpop.f32.mrb[0].mxu0
      %v2042 = vadd.f32 0.0, %v2041
      %v2043 = vpop.f32.mrb[0].mxu0
      %v2044 = vadd.f32 0.0, %v2043
      %2045 = vmatprep.mubr.f32.mxu0 %v1929
      %2046 = vmatmul.mubr.f32.gmra.mrb[0].mxu0 %v1864
      %v2047 = vpop.f32.mrb[0].mxu0
      %v2048 = vadd.f32 0.0, %v2047
      %v2049 = vpop.f32.mrb[0].mxu0
      %v2050 = vadd.f32 0.0, %v2049
      %2051 = vmatprep.mubr.f32.mxu0 %v1931
      %2052 = vmatmul.mubr.f32.gmra.mrb[0].mxu0 %v1868
      %v2053 = vpop.f32.mrb[0].mxu0
      %v2054 = vadd.f32 0.0, %v2053
      %v2055 = vpop.f32.mrb[0].mxu0
      %v2056 = vadd.f32 0.0, %v2055
      %2057 = vmatprep.mubr.f32.mxu0 %v1933
      %2058 = vmatmul.mubr.f32.gmra.mrb[0].mxu0 %v1872
      %v2059 = vpop.f32.mrb[0].mxu0
      %v2060 = vadd.f32 0.0, %v2059
      %v2061 = vpop.f32.mrb[0].mxu0
      %v2062 = vadd.f32 0.0, %v2061
      %2063 = vmatprep.mubr.f32.mxu0 %v1935
      %2064 = vmatmul.mubr.f32.gmra.mrb[0].mxu0 %v1876
      %v2065 = vpop.f32.mrb[0].mxu0
      %v2066 = vadd.f32 0.0, %v2065
      %v2067 = vpop.f32.mrb[0].mxu0
      %v2068 = vadd.f32 0.0, %v2067
      %2069 = vmatprep.mubr.f32.mxu0 %v1937
      %2070 = vmatmul.mubr.f32.gmra.mrb[0].mxu0 %v1880
      %v2071 = vpop.f32.mrb[0].mxu0
      %v2072 = vadd.f32 0.0, %v2071
      %v2073 = vpop.f32.mrb[0].mxu0
      %v2074 = vadd.f32 0.0, %v2073
      %2075 = vmatprep.mubr.f32.mxu0 %v1939
      %2076 = vmatmul.mubr.f32.gmra.mrb[0].mxu0 %v1884
      %v2077 = vpop.f32.mrb[0].mxu0
      %v2078 = vadd.f32 0.0, %v2077
      %v2079 = vpop.f32.mrb[0].mxu0
      %v2080 = vadd.f32 0.0, %v2079
      %2081 = vmatprep.mubr.f32.mxu0 %v1941
      %2082 = vmatmul.mubr.f32.gmra.mrb[0].mxu0 %v1888
      %v2083 = vpop.f32.mrb[0].mxu0
      %v2084 = vadd.f32 0.0, %v2083
      %v2085 = vpop.f32.mrb[0].mxu0
      %v2086 = vadd.f32 0.0, %v2085
      %2087 = vmatprep.mubr.f32.mxu0 %v1943
      %2088 = vmatmul.mubr.f32.gmra.mrb[0].mxu0 %v1892
      %v2089 = vpop.f32.mrb[0].mxu0
      %v2090 = vadd.f32 0.0, %v2089
      %v2091 = vpop.f32.mrb[0].mxu0
      %v2092 = vadd.f32 0.0, %v2091
      %2093 = vmatprep.mubr.f32.mxu0 %v1945
      %2094 = vmatmul.mubr.f32.gmra.mrb[0].mxu0 %v1896
      %v2095 = vpop.f32.mrb[0].mxu0
      %v2096 = vadd.f32 0.0, %v2095
      %v2097 = vpop.f32.mrb[0].mxu0
      %v2098 = vadd.f32 0.0, %v2097
      %2099 = vmatprep.mubr.f32.mxu0 %v1947
      %2100 = vmatmul.mubr.f32.gmra.mrb[0].mxu0 %v1900
      %v2101 = vpop.f32.mrb[0].mxu0
      %v2102 = vadd.f32 0.0, %v2101
      %v2103 = vpop.f32.mrb[0].mxu0
      %v2104 = vadd.f32 0.0, %v2103
      %2105 = vmatprep.mubr.f32.mxu0 %v1949
      %2106 = vmatmul.mubr.f32.gmra.mrb[0].mxu0 %v1899
      %v2107 = vpop.f32.mrb[0].mxu0
      %v2108 = vadd.f32 0.0, %v2107
      %v2109 = vpop.f32.mrb[0].mxu0
      %v2110 = vadd.f32 0.0, %v2109
      %2111 = vdwg.mxu0
      %v2112 = vadd.f32 %v1751, %v2018
      %v2113 = vadd.f32 %v1752, %v2020
      %v2114 = vadd.f32 %v1753, %v2024
      %v2115 = vadd.f32 %v1754, %v2026
      %v2116 = vadd.f32 %v1755, %v2030
      %v2117 = vadd.f32 %v1756, %v2032
      %v2118 = vadd.f32 %v1757, %v2036
      %v2119 = vadd.f32 %v1758, %v2038
      %v2120 = vadd.f32 %v1759, %v2042
      %v2121 = vadd.f32 %v1760, %v2044
      %v2122 = vadd.f32 %v1761, %v2048
      %v2123 = vadd.f32 %v1762, %v2050
      %v2124 = vadd.f32 %v1763, %v2054
      %v2125 = vadd.f32 %v1764, %v2056
      %v2126 = vadd.f32 %v1765, %v2060
      %v2127 = vadd.f32 %v1766, %v2062
      %v2128 = vadd.f32 %v1767, %v2066
      %v2129 = vadd.f32 %v1768, %v2068
      %v2130 = vadd.f32 %v1769, %v2072
      %v2131 = vadd.f32 %v1770, %v2074
      %v2132 = vadd.f32 %v1771, %v2078
      %v2133 = vadd.f32 %v1772, %v2080
      %v2134 = vadd.f32 %v1773, %v2084
      %v2135 = vadd.f32 %v1774, %v2086
      %v2136 = vadd.f32 %v1775, %v2090
      %v2137 = vadd.f32 %v1776, %v2092
      %v2138 = vadd.f32 %v1777, %v2096
      %v2139 = vadd.f32 %v1778, %v2098
      %v2140 = vadd.f32 %v1779, %v2102
      %v2141 = vadd.f32 %v1780, %v2104
      %v2142 = vadd.f32 %v1781, %v2108
      %v2143 = vadd.f32 %v1782, %v2110
      %v2144 = vld [vmem:[%s346 + $0x10] sm:$0xc0]
      %v2145 = vld [vmem:[%s346 + $0x18] sm:$0xc0]
      %v2146 = vld [vmem:[%s346 + $0x100] sm:$0xff]
      %v2147 = vld [vmem:[%s346 + $0x108] sm:$0xff]
      %s2148 = scalar_lea.vmem %s1, 1920
      %v2149 = vld [vmem:[%s2148] sm:$0xff]
      %v2150 = vld [vmem:[%s2148 + $0x8] sm:$0xff]
      %v2151 = vld [vmem:[%s2148 + $0x10] sm:$0xff]
      %v2152 = vld [vmem:[%s2148 + $0x18] sm:$0xff]
      %v2153 = vld [vmem:[%s2148 + $0x20] sm:$0xff]
      %v2154 = vld [vmem:[%s2148 + $0x28] sm:$0xff]
      %v2155 = vld [vmem:[%s2148 + $0x30] sm:$0xff]
      %v2156 = vld [vmem:[%s2148 + $0x38] sm:$0xff]
      %v2157 = vld [vmem:[%s2148 + $0x40] sm:$0xff]
      %v2158 = vld [vmem:[%s2148 + $0x48] sm:$0xff]
      %v2159 = vld [vmem:[%s2148 + $0x50] sm:$0xff]
      %v2160 = vld [vmem:[%s2148 + $0x58] sm:$0xff]
      %v2161 = vld [vmem:[%s2148 + $0x60] sm:$0xff]
      %v2162 = vld [vmem:[%s2148 + $0x68] sm:$0xff]
      %v2163 = vld [vmem:[%s2148 + $0x70] sm:$0xff]
      %v2164 = vld [vmem:[%s2148 + $0x78] sm:$0xff]
      %v2165 = vld [vmem:[%s2148 + $0x80] sm:$0xff]
      %v2166 = vld [vmem:[%s2148 + $0x88] sm:$0xff]
      %v2167 = vld [vmem:[%s2148 + $0x90] sm:$0xff]
      %v2168 = vld [vmem:[%s2148 + $0x98] sm:$0xff]
      %v2169 = vld [vmem:[%s2148 + $0xa0] sm:$0xff]
      %v2170 = vld [vmem:[%s2148 + $0xa8] sm:$0xff]
      %v2171 = vld [vmem:[%s2148 + $0xb0] sm:$0xff]
      %v2172 = vld [vmem:[%s2148 + $0xb8] sm:$0xff]
      %v2173 = vld [vmem:[%s2148 + $0xc0] sm:$0xff]
      %v2174 = vld [vmem:[%s2148 + $0xc8] sm:$0xff]
      %v2175 = vld [vmem:[%s2148 + $0xd0] sm:$0xff]
      %v2176 = vld [vmem:[%s2148 + $0xd8] sm:$0xff]
      %v2177 = vld [vmem:[%s2148 + $0xe0] sm:$0xff]
      %v2178 = vld [vmem:[%s2148 + $0xe8] sm:$0xff]
      %v2179 = vld [vmem:[%s2148 + $0xf0] sm:$0xff]
      %v2180 = vld [vmem:[%s2148 + $0xf8] sm:$0xff]
      %v2181 = vld [vmem:[%s2148 + $0x100] sm:$0xff]
      %v2182 = vld [vmem:[%s2148 + $0x108] sm:$0xff]
      %v2183 = vld [vmem:[%s2148 + $0x110] sm:$0xff]
      %v2184 = vld [vmem:[%s2148 + $0x118] sm:$0xff]
      %v2185 = vld [vmem:[%s2148 + $0x120] sm:$0xff]
      %v2186 = vld [vmem:[%s2148 + $0x128] sm:$0xff]
      %v2187 = vld [vmem:[%s2148 + $0x130] sm:$0xff]
      %v2188 = vld [vmem:[%s2148 + $0x138] sm:$0xff]
      %v2189 = vld [vmem:[%s2148 + $0x140] sm:$0xff]
      %v2190 = vld [vmem:[%s2148 + $0x148] sm:$0xff]
      %v2191 = vld [vmem:[%s2148 + $0x150] sm:$0xff]
      %v2192 = vld [vmem:[%s2148 + $0x158] sm:$0xff]
      %v2193 = vld [vmem:[%s2148 + $0x160] sm:$0xff]
      %v2194 = vld [vmem:[%s2148 + $0x168] sm:$0xff]
      %v2195 = vld [vmem:[%s2148 + $0x170] sm:$0xff]
      %v2196 = vld [vmem:[%s2148 + $0x178] sm:$0xff]
      %vm2201 = vcmask 1041408
      %v2202 = vrot.slane %v2144, 6
      %v2203 = vrot.slane %v1368, 6
      %v2204 = vsel %vm2201, %v2202, %v2203
      %v2205 = vrot.slane %v2145, 6
      %v2206 = vrot.slane %v1369, 6
      %v2207 = vsel %vm2201, %v2205, %v2206
      %v2208 = vrot.slane %v1370, 6
      %v2209 = vsel %vm2201, %v2203, %v2208
      %v2210 = vrot.slane %v1371, 6
      %v2211 = vsel %vm2201, %v2206, %v2210
      %v2212 = vrot.slane %v1372, 6
      %v2213 = vsel %vm2201, %v2208, %v2212
      %v2214 = vrot.slane %v1373, 6
      %v2215 = vsel %vm2201, %v2210, %v2214
      %v2216 = vrot.slane %v1374, 6
      %v2217 = vsel %vm2201, %v2212, %v2216
      %v2218 = vrot.slane %v1375, 6
      %v2219 = vsel %vm2201, %v2214, %v2218
      %v2220 = vrot.slane %v1376, 6
      %v2221 = vsel %vm2201, %v2216, %v2220
      %v2222 = vrot.slane %v1377, 6
      %v2223 = vsel %vm2201, %v2218, %v2222
      %v2224 = vrot.slane %v1378, 6
      %v2225 = vsel %vm2201, %v2220, %v2224
      %v2226 = vrot.slane %v1379, 6
      %v2227 = vsel %vm2201, %v2222, %v2226
      %v2228 = vrot.slane %v1380, 6
      %v2229 = vsel %vm2201, %v2224, %v2228
      %v2230 = vrot.slane %v1381, 6
      %v2231 = vsel %vm2201, %v2226, %v2230
      %v2232 = vrot.slane %v1382, 6
      %v2233 = vsel %vm2201, %v2228, %v2232
      %v2234 = vrot.slane %v1383, 6
      %v2235 = vsel %vm2201, %v2230, %v2234
      %v2236 = vrot.slane %v1384, 6
      %v2237 = vsel %vm2201, %v2232, %v2236
      %v2238 = vrot.slane %v1385, 6
      %v2239 = vsel %vm2201, %v2234, %v2238
      %v2240 = vrot.slane %v1386, 6
      %v2241 = vsel %vm2201, %v2236, %v2240
      %v2242 = vrot.slane %v1387, 6
      %v2243 = vsel %vm2201, %v2238, %v2242
      %v2244 = vrot.slane %v1388, 6
      %v2245 = vsel %vm2201, %v2240, %v2244
      %v2246 = vrot.slane %v1389, 6
      %v2247 = vsel %vm2201, %v2242, %v2246
      %v2248 = vrot.slane %v1390, 6
      %v2249 = vsel %vm2201, %v2244, %v2248
      %v2250 = vrot.slane %v1391, 6
      %v2251 = vsel %vm2201, %v2246, %v2250
      %v2252 = vrot.slane %v1392, 6
      %v2253 = vsel %vm2201, %v2248, %v2252
      %v2254 = vrot.slane %v1393, 6
      %v2255 = vsel %vm2201, %v2250, %v2254
      %v2256 = vrot.slane %v1394, 6
      %v2257 = vsel %vm2201, %v2252, %v2256
      %v2258 = vrot.slane %v1395, 6
      %v2259 = vsel %vm2201, %v2254, %v2258
      %v2260 = vrot.slane %v2146, 6
      %v2261 = vsel %vm2201, %v2256, %v2260
      %v2262 = vrot.slane %v2147, 6
      %v2263 = vsel %vm2201, %v2258, %v2262
      %v2280 = vsel %vm616, %v2207, 0
      %v2282 = vsel %vm616, %v2211, 0
      %v2284 = vsel %vm616, %v2215, 0
      %v2286 = vsel %vm616, %v2219, 0
      %v2288 = vsel %vm616, %v2223, 0
      %v2290 = vsel %vm616, %v2227, 0
      %v2292 = vsel %vm616, %v2231, 0
      %v2294 = vsel %vm616, %v2235, 0
      %v2296 = vsel %vm616, %v2239, 0
      %v2298 = vsel %vm616, %v2243, 0
      %v2300 = vsel %vm616, %v2247, 0
      %v2302 = vsel %vm616, %v2251, 0
      %v2304 = vsel %vm616, %v2255, 0
      %v2306 = vsel %vm616, %v2259, 0
      %v2308 = vsel %vm616, %v2263, 0
      %v2310 = vsel %vm616, %v2262, 0
      %2312 = vmatprep.subr.mxu0 %v2150
      %2313 = vmatpush1.msra.mxu0 %v2149
      %2314 = vmatprep.subr.mxu0 %v2152
      %2315 = vmatpush1.msra.mxu0 %v2151
      %2316 = vmatprep.subr.mxu0 %v2154
      %2317 = vmatpush1.msra.mxu0 %v2153
      %2318 = vmatprep.subr.mxu0 %v2156
      %2319 = vmatpush1.msra.mxu0 %v2155
      %2320 = vmatprep.subr.mxu0 %v2158
      %2321 = vmatpush1.msra.mxu0 %v2157
      %2322 = vmatprep.subr.mxu0 %v2160
      %2323 = vmatpush1.msra.mxu0 %v2159
      %2324 = vmatprep.subr.mxu0 %v2162
      %2325 = vmatpush1.msra.mxu0 %v2161
      %2326 = vmatprep.subr.mxu0 %v2164
      %2327 = vmatpush1.msra.mxu0 %v2163
      %2328 = vmatprep.subr.mxu0 %v2166
      %2329 = vmatpush1.msra.mxu0 %v2165
      %2330 = vmatprep.subr.mxu0 %v2168
      %2331 = vmatpush1.msra.mxu0 %v2167
      %2332 = vmatprep.subr.mxu0 %v2170
      %2333 = vmatpush1.msra.mxu0 %v2169
      %2334 = vmatprep.subr.mxu0 %v2172
      %2335 = vmatpush1.msra.mxu0 %v2171
      %2336 = vmatprep.subr.mxu0 %v2174
      %2337 = vmatpush1.msra.mxu0 %v2173
      %2338 = vmatprep.subr.mxu0 %v2176
      %2339 = vmatpush1.msra.mxu0 %v2175
      %2340 = vmatprep.subr.mxu0 %v2178
      %2341 = vmatpush1.msra.mxu0 %v2177
      %2342 = vmatprep.subr.mxu0 %v2180
      %2343 = vmatpush1.msra.mxu0 %v2179
      %2344 = vmatprep.subr.mxu0 %v2182
      %2345 = vmatpush1.msra.mxu0 %v2181
      %2346 = vmatprep.subr.mxu0 %v2184
      %2347 = vmatpush1.msra.mxu0 %v2183
      %2348 = vmatprep.subr.mxu0 %v2186
      %2349 = vmatpush1.msra.mxu0 %v2185
      %2350 = vmatprep.subr.mxu0 %v2188
      %2351 = vmatpush1.msra.mxu0 %v2187
      %2352 = vmatprep.subr.mxu0 %v2190
      %2353 = vmatpush1.msra.mxu0 %v2189
      %2354 = vmatprep.subr.mxu0 %v2192
      %2355 = vmatpush1.msra.mxu0 %v2191
      %2356 = vmatprep.subr.mxu0 %v2194
      %2357 = vmatpush1.msra.mxu0 %v2193
      %2358 = vmatprep.subr.mxu0 %v2196
      %2359 = vmatpush1.msra.mxu0 %v2195
      %2360 = vmatprep.subr.mxu0 0.0
      %2361 = vmatpush1.msra.mxu0 0.0
      %2362 = vmatprep.subr.mxu0 0.0
      %2363 = vmatpush1.msra.mxu0 0.0
      %2364 = vmatprep.subr.mxu0 0.0
      %2365 = vmatpush1.msra.mxu0 0.0
      %2366 = vmatprep.subr.mxu0 0.0
      %2367 = vmatpush1.msra.mxu0 0.0
      %2368 = vmatprep.subr.mxu0 0.0
      %2369 = vmatpush1.msra.mxu0 0.0
      %2370 = vmatprep.subr.mxu0 0.0
      %2371 = vmatpush1.msra.mxu0 0.0
      %2372 = vmatprep.subr.mxu0 0.0
      %2373 = vmatpush1.msra.mxu0 0.0
      %2374 = vmatprep.subr.mxu0 0.0
      %2375 = vmatpush1.msra.mxu0 0.0
      %2376 = vmatprep.mubr.f32.mxu0 %v2280
      %2377 = vmatmul.mubr.f32.gmra.mrb[0].mxu0 %v2204
      %v2378 = vpop.f32.mrb[0].mxu0
      %v2379 = vadd.f32 0.0, %v2378
      %v2380 = vpop.f32.mrb[0].mxu0
      %v2381 = vadd.f32 0.0, %v2380
      %2382 = vmatprep.mubr.f32.mxu0 %v2282
      %2383 = vmatmul.mubr.f32.gmra.mrb[0].mxu0 %v2209
      %v2384 = vpop.f32.mrb[0].mxu0
      %v2385 = vadd.f32 0.0, %v2384
      %v2386 = vpop.f32.mrb[0].mxu0
      %v2387 = vadd.f32 0.0, %v2386
      %2388 = vmatprep.mubr.f32.mxu0 %v2284
      %2389 = vmatmul.mubr.f32.gmra.mrb[0].mxu0 %v2213
      %v2390 = vpop.f32.mrb[0].mxu0
      %v2391 = vadd.f32 0.0, %v2390
      %v2392 = vpop.f32.mrb[0].mxu0
      %v2393 = vadd.f32 0.0, %v2392
      %2394 = vmatprep.mubr.f32.mxu0 %v2286
      %2395 = vmatmul.mubr.f32.gmra.mrb[0].mxu0 %v2217
      %v2396 = vpop.f32.mrb[0].mxu0
      %v2397 = vadd.f32 0.0, %v2396
      %v2398 = vpop.f32.mrb[0].mxu0
      %v2399 = vadd.f32 0.0, %v2398
      %2400 = vmatprep.mubr.f32.mxu0 %v2288
      %2401 = vmatmul.mubr.f32.gmra.mrb[0].mxu0 %v2221
      %v2402 = vpop.f32.mrb[0].mxu0
      %v2403 = vadd.f32 0.0, %v2402
      %v2404 = vpop.f32.mrb[0].mxu0
      %v2405 = vadd.f32 0.0, %v2404
      %2406 = vmatprep.mubr.f32.mxu0 %v2290
      %2407 = vmatmul.mubr.f32.gmra.mrb[0].mxu0 %v2225
      %v2408 = vpop.f32.mrb[0].mxu0
      %v2409 = vadd.f32 0.0, %v2408
      %v2410 = vpop.f32.mrb[0].mxu0
      %v2411 = vadd.f32 0.0, %v2410
      %2412 = vmatprep.mubr.f32.mxu0 %v2292
      %2413 = vmatmul.mubr.f32.gmra.mrb[0].mxu0 %v2229
      %v2414 = vpop.f32.mrb[0].mxu0
      %v2415 = vadd.f32 0.0, %v2414
      %v2416 = vpop.f32.mrb[0].mxu0
      %v2417 = vadd.f32 0.0, %v2416
      %2418 = vmatprep.mubr.f32.mxu0 %v2294
      %2419 = vmatmul.mubr.f32.gmra.mrb[0].mxu0 %v2233
      %v2420 = vpop.f32.mrb[0].mxu0
      %v2421 = vadd.f32 0.0, %v2420
      %v2422 = vpop.f32.mrb[0].mxu0
      %v2423 = vadd.f32 0.0, %v2422
      %2424 = vmatprep.mubr.f32.mxu0 %v2296
      %2425 = vmatmul.mubr.f32.gmra.mrb[0].mxu0 %v2237
      %v2426 = vpop.f32.mrb[0].mxu0
      %v2427 = vadd.f32 0.0, %v2426
      %v2428 = vpop.f32.mrb[0].mxu0
      %v2429 = vadd.f32 0.0, %v2428
      %2430 = vmatprep.mubr.f32.mxu0 %v2298
      %2431 = vmatmul.mubr.f32.gmra.mrb[0].mxu0 %v2241
      %v2432 = vpop.f32.mrb[0].mxu0
      %v2433 = vadd.f32 0.0, %v2432
      %v2434 = vpop.f32.mrb[0].mxu0
      %v2435 = vadd.f32 0.0, %v2434
      %2436 = vmatprep.mubr.f32.mxu0 %v2300
      %2437 = vmatmul.mubr.f32.gmra.mrb[0].mxu0 %v2245
      %v2438 = vpop.f32.mrb[0].mxu0
      %v2439 = vadd.f32 0.0, %v2438
      %v2440 = vpop.f32.mrb[0].mxu0
      %v2441 = vadd.f32 0.0, %v2440
      %2442 = vmatprep.mubr.f32.mxu0 %v2302
      %2443 = vmatmul.mubr.f32.gmra.mrb[0].mxu0 %v2249
      %v2444 = vpop.f32.mrb[0].mxu0
      %v2445 = vadd.f32 0.0, %v2444
      %v2446 = vpop.f32.mrb[0].mxu0
      %v2447 = vadd.f32 0.0, %v2446
      %2448 = vmatprep.mubr.f32.mxu0 %v2304
      %2449 = vmatmul.mubr.f32.gmra.mrb[0].mxu0 %v2253
      %v2450 = vpop.f32.mrb[0].mxu0
      %v2451 = vadd.f32 0.0, %v2450
      %v2452 = vpop.f32.mrb[0].mxu0
      %v2453 = vadd.f32 0.0, %v2452
      %2454 = vmatprep.mubr.f32.mxu0 %v2306
      %2455 = vmatmul.mubr.f32.gmra.mrb[0].mxu0 %v2257
      %v2456 = vpop.f32.mrb[0].mxu0
      %v2457 = vadd.f32 0.0, %v2456
      %v2458 = vpop.f32.mrb[0].mxu0
      %v2459 = vadd.f32 0.0, %v2458
      %2460 = vmatprep.mubr.f32.mxu0 %v2308
      %2461 = vmatmul.mubr.f32.gmra.mrb[0].mxu0 %v2261
      %v2462 = vpop.f32.mrb[0].mxu0
      %v2463 = vadd.f32 0.0, %v2462
      %v2464 = vpop.f32.mrb[0].mxu0
      %v2465 = vadd.f32 0.0, %v2464
      %2466 = vmatprep.mubr.f32.mxu0 %v2310
      %2467 = vmatmul.mubr.f32.gmra.mrb[0].mxu0 %v2260
      %v2468 = vpop.f32.mrb[0].mxu0
      %v2469 = vadd.f32 0.0, %v2468
      %v2470 = vpop.f32.mrb[0].mxu0
      %v2471 = vadd.f32 0.0, %v2470
      %2472 = vdwg.mxu0
      %v2473 = vadd.f32 %v2112, %v2379
      %v2474 = vadd.f32 %v2113, %v2381
      %v2475 = vadd.f32 %v2114, %v2385
      %v2476 = vadd.f32 %v2115, %v2387
      %v2477 = vadd.f32 %v2116, %v2391
      %v2478 = vadd.f32 %v2117, %v2393
      %v2479 = vadd.f32 %v2118, %v2397
      %v2480 = vadd.f32 %v2119, %v2399
      %v2481 = vadd.f32 %v2120, %v2403
      %v2482 = vadd.f32 %v2121, %v2405
      %v2483 = vadd.f32 %v2122, %v2409
      %v2484 = vadd.f32 %v2123, %v2411
      %v2485 = vadd.f32 %v2124, %v2415
      %v2486 = vadd.f32 %v2125, %v2417
      %v2487 = vadd.f32 %v2126, %v2421
      %v2488 = vadd.f32 %v2127, %v2423
      %v2489 = vadd.f32 %v2128, %v2427
      %v2490 = vadd.f32 %v2129, %v2429
      %v2491 = vadd.f32 %v2130, %v2433
      %v2492 = vadd.f32 %v2131, %v2435
      %v2493 = vadd.f32 %v2132, %v2439
      %v2494 = vadd.f32 %v2133, %v2441
      %v2495 = vadd.f32 %v2134, %v2445
      %v2496 = vadd.f32 %v2135, %v2447
      %v2497 = vadd.f32 %v2136, %v2451
      %v2498 = vadd.f32 %v2137, %v2453
      %v2499 = vadd.f32 %v2138, %v2457
      %v2500 = vadd.f32 %v2139, %v2459
      %v2501 = vadd.f32 %v2140, %v2463
      %v2502 = vadd.f32 %v2141, %v2465
      %v2503 = vadd.f32 %v2142, %v2469
      %v2504 = vadd.f32 %v2143, %v2471
      %v2505 = vld [vmem:[%s346 + $0x30] sm:$0xff]
      %v2506 = vld [vmem:[%s346 + $0x38] sm:$0xff]
      %v2507 = vld [vmem:[%s346 + $0x40] sm:$0xff]
      %v2508 = vld [vmem:[%s346 + $0x48] sm:$0xff]
      %v2509 = vld [vmem:[%s346 + $0x50] sm:$0xff]
      %v2510 = vld [vmem:[%s346 + $0x58] sm:$0xff]
      %v2511 = vld [vmem:[%s346 + $0x60] sm:$0xff]
      %v2512 = vld [vmem:[%s346 + $0x68] sm:$0xff]
      %v2513 = vld [vmem:[%s346 + $0x70] sm:$0xff]
      %v2514 = vld [vmem:[%s346 + $0x78] sm:$0xff]
      %v2515 = vld [vmem:[%s346 + $0x80] sm:$0xff]
      %v2516 = vld [vmem:[%s346 + $0x88] sm:$0xff]
      %v2517 = vld [vmem:[%s346 + $0x90] sm:$0xff]
      %v2518 = vld [vmem:[%s346 + $0x98] sm:$0xff]
      %v2519 = vld [vmem:[%s346 + $0xa0] sm:$0xff]
      %v2520 = vld [vmem:[%s346 + $0xa8] sm:$0xff]
      %v2521 = vld [vmem:[%s346 + $0xb0] sm:$0xff]
      %v2522 = vld [vmem:[%s346 + $0xb8] sm:$0xff]
      %v2523 = vld [vmem:[%s346 + $0xc0] sm:$0xff]
      %v2524 = vld [vmem:[%s346 + $0xc8] sm:$0xff]
      %v2525 = vld [vmem:[%s346 + $0xd0] sm:$0xff]
      %v2526 = vld [vmem:[%s346 + $0xd8] sm:$0xff]
      %v2527 = vld [vmem:[%s346 + $0xe0] sm:$0xff]
      %v2528 = vld [vmem:[%s346 + $0xe8] sm:$0xff]
      %v2529 = vld [vmem:[%s346 + $0xf0] sm:$0xff]
      %v2530 = vld [vmem:[%s346 + $0xf8] sm:$0xff]
      %v2531 = vld [vmem:[%s346 + $0x100] sm:$0xff]
      %v2532 = vld [vmem:[%s346 + $0x108] sm:$0xff]
      %v2533 = vld [vmem:[%s346 + $0x110] sm:$0xff]
      %v2534 = vld [vmem:[%s346 + $0x118] sm:$0xff]
      %v2535 = vld [vmem:[%s346 + $0x120] sm:$0x3]
      %v2536 = vld [vmem:[%s346 + $0x128] sm:$0x3]
      %s2537 = scalar_lea.vmem %s1, 2304
      %v2538 = vld [vmem:[%s2537] sm:$0xff]
      %v2539 = vld [vmem:[%s2537 + $0x8] sm:$0xff]
      %v2540 = vld [vmem:[%s2537 + $0x10] sm:$0xff]
      %v2541 = vld [vmem:[%s2537 + $0x18] sm:$0xff]
      %v2542 = vld [vmem:[%s2537 + $0x20] sm:$0xff]
      %v2543 = vld [vmem:[%s2537 + $0x28] sm:$0xff]
      %v2544 = vld [vmem:[%s2537 + $0x30] sm:$0xff]
      %v2545 = vld [vmem:[%s2537 + $0x38] sm:$0xff]
      %v2546 = vld [vmem:[%s2537 + $0x40] sm:$0xff]
      %v2547 = vld [vmem:[%s2537 + $0x48] sm:$0xff]
      %v2548 = vld [vmem:[%s2537 + $0x50] sm:$0xff]
      %v2549 = vld [vmem:[%s2537 + $0x58] sm:$0xff]
      %v2550 = vld [vmem:[%s2537 + $0x60] sm:$0xff]
      %v2551 = vld [vmem:[%s2537 + $0x68] sm:$0xff]
      %v2552 = vld [vmem:[%s2537 + $0x70] sm:$0xff]
      %v2553 = vld [vmem:[%s2537 + $0x78] sm:$0xff]
      %v2554 = vld [vmem:[%s2537 + $0x80] sm:$0xff]
      %v2555 = vld [vmem:[%s2537 + $0x88] sm:$0xff]
      %v2556 = vld [vmem:[%s2537 + $0x90] sm:$0xff]
      %v2557 = vld [vmem:[%s2537 + $0x98] sm:$0xff]
      %v2558 = vld [vmem:[%s2537 + $0xa0] sm:$0xff]
      %v2559 = vld [vmem:[%s2537 + $0xa8] sm:$0xff]
      %v2560 = vld [vmem:[%s2537 + $0xb0] sm:$0xff]
      %v2561 = vld [vmem:[%s2537 + $0xb8] sm:$0xff]
      %v2562 = vld [vmem:[%s2537 + $0xc0] sm:$0xff]
      %v2563 = vld [vmem:[%s2537 + $0xc8] sm:$0xff]
      %v2564 = vld [vmem:[%s2537 + $0xd0] sm:$0xff]
      %v2565 = vld [vmem:[%s2537 + $0xd8] sm:$0xff]
      %v2566 = vld [vmem:[%s2537 + $0xe0] sm:$0xff]
      %v2567 = vld [vmem:[%s2537 + $0xe8] sm:$0xff]
      %v2568 = vld [vmem:[%s2537 + $0xf0] sm:$0xff]
      %v2569 = vld [vmem:[%s2537 + $0xf8] sm:$0xff]
      %v2570 = vld [vmem:[%s2537 + $0x100] sm:$0xff]
      %v2571 = vld [vmem:[%s2537 + $0x108] sm:$0xff]
      %v2572 = vld [vmem:[%s2537 + $0x110] sm:$0xff]
      %v2573 = vld [vmem:[%s2537 + $0x118] sm:$0xff]
      %v2574 = vld [vmem:[%s2537 + $0x120] sm:$0xff]
      %v2575 = vld [vmem:[%s2537 + $0x128] sm:$0xff]
      %v2576 = vld [vmem:[%s2537 + $0x130] sm:$0xff]
      %v2577 = vld [vmem:[%s2537 + $0x138] sm:$0xff]
      %v2578 = vld [vmem:[%s2537 + $0x140] sm:$0xff]
      %v2579 = vld [vmem:[%s2537 + $0x148] sm:$0xff]
      %v2580 = vld [vmem:[%s2537 + $0x150] sm:$0xff]
      %v2581 = vld [vmem:[%s2537 + $0x158] sm:$0xff]
      %v2582 = vld [vmem:[%s2537 + $0x160] sm:$0xff]
      %v2583 = vld [vmem:[%s2537 + $0x168] sm:$0xff]
      %v2584 = vld [vmem:[%s2537 + $0x170] sm:$0xff]
      %v2585 = vld [vmem:[%s2537 + $0x178] sm:$0xff]
      %v2587 = vsel %vm616, %v2506, 0
      %v2590 = vsel %vm616, %v2508, 0
      %v2593 = vsel %vm616, %v2510, 0
      %v2596 = vsel %vm616, %v2512, 0
      %v2599 = vsel %vm616, %v2514, 0
      %v2602 = vsel %vm616, %v2516, 0
      %v2605 = vsel %vm616, %v2518, 0
      %v2608 = vsel %vm616, %v2520, 0
      %v2611 = vsel %vm616, %v2522, 0
      %v2614 = vsel %vm616, %v2524, 0
      %v2617 = vsel %vm616, %v2526, 0
      %v2620 = vsel %vm616, %v2528, 0
      %v2623 = vsel %vm616, %v2530, 0
      %v2626 = vsel %vm616, %v2532, 0
      %v2629 = vsel %vm616, %v2534, 0
      %v2632 = vsel %vm616, %v2536, 0
      %2634 = vmatprep.subr.mxu0 %v2539
      %2635 = vmatpush1.msra.mxu0 %v2538
      %2636 = vmatprep.subr.mxu0 %v2541
      %2637 = vmatpush1.msra.mxu0 %v2540
      %2638 = vmatprep.subr.mxu0 %v2543
      %2639 = vmatpush1.msra.mxu0 %v2542
      %2640 = vmatprep.subr.mxu0 %v2545
      %2641 = vmatpush1.msra.mxu0 %v2544
      %2642 = vmatprep.subr.mxu0 %v2547
      %2643 = vmatpush1.msra.mxu0 %v2546
      %2644 = vmatprep.subr.mxu0 %v2549
      %2645 = vmatpush1.msra.mxu0 %v2548
      %2646 = vmatprep.subr.mxu0 %v2551
      %2647 = vmatpush1.msra.mxu0 %v2550
      %2648 = vmatprep.subr.mxu0 %v2553
      %2649 = vmatpush1.msra.mxu0 %v2552
      %2650 = vmatprep.subr.mxu0 %v2555
      %2651 = vmatpush1.msra.mxu0 %v2554
      %2652 = vmatprep.subr.mxu0 %v2557
      %2653 = vmatpush1.msra.mxu0 %v2556
      %2654 = vmatprep.subr.mxu0 %v2559
      %2655 = vmatpush1.msra.mxu0 %v2558
      %2656 = vmatprep.subr.mxu0 %v2561
      %2657 = vmatpush1.msra.mxu0 %v2560
      %2658 = vmatprep.subr.mxu0 %v2563
      %2659 = vmatpush1.msra.mxu0 %v2562
      %2660 = vmatprep.subr.mxu0 %v2565
      %2661 = vmatpush1.msra.mxu0 %v2564
      %2662 = vmatprep.subr.mxu0 %v2567
      %2663 = vmatpush1.msra.mxu0 %v2566
      %2664 = vmatprep.subr.mxu0 %v2569
      %2665 = vmatpush1.msra.mxu0 %v2568
      %2666 = vmatprep.subr.mxu0 %v2571
      %2667 = vmatpush1.msra.mxu0 %v2570
      %2668 = vmatprep.subr.mxu0 %v2573
      %2669 = vmatpush1.msra.mxu0 %v2572
      %2670 = vmatprep.subr.mxu0 %v2575
      %2671 = vmatpush1.msra.mxu0 %v2574
      %2672 = vmatprep.subr.mxu0 %v2577
      %2673 = vmatpush1.msra.mxu0 %v2576
      %2674 = vmatprep.subr.mxu0 %v2579
      %2675 = vmatpush1.msra.mxu0 %v2578
      %2676 = vmatprep.subr.mxu0 %v2581
      %2677 = vmatpush1.msra.mxu0 %v2580
      %2678 = vmatprep.subr.mxu0 %v2583
      %2679 = vmatpush1.msra.mxu0 %v2582
      %2680 = vmatprep.subr.mxu0 %v2585
      %2681 = vmatpush1.msra.mxu0 %v2584
      %2682 = vmatprep.subr.mxu0 0.0
      %2683 = vmatpush1.msra.mxu0 0.0
      %2684 = vmatprep.subr.mxu0 0.0
      %2685 = vmatpush1.msra.mxu0 0.0
      %2686 = vmatprep.subr.mxu0 0.0
      %2687 = vmatpush1.msra.mxu0 0.0
      %2688 = vmatprep.subr.mxu0 0.0
      %2689 = vmatpush1.msra.mxu0 0.0
      %2690 = vmatprep.subr.mxu0 0.0
      %2691 = vmatpush1.msra.mxu0 0.0
      %2692 = vmatprep.subr.mxu0 0.0
      %2693 = vmatpush1.msra.mxu0 0.0
      %2694 = vmatprep.subr.mxu0 0.0
      %2695 = vmatpush1.msra.mxu0 0.0
      %2696 = vmatprep.subr.mxu0 0.0
      %2697 = vmatpush1.msra.mxu0 0.0
      %2698 = vmatprep.mubr.f32.mxu0 %v2587
      %2699 = vmatmul.mubr.f32.gmra.mrb[0].mxu0 %v2505
      %v2700 = vpop.f32.mrb[0].mxu0
      %v2701 = vadd.f32 0.0, %v2700
      %v2702 = vpop.f32.mrb[0].mxu0
      %v2703 = vadd.f32 0.0, %v2702
      %2704 = vmatprep.mubr.f32.mxu0 %v2590
      %2705 = vmatmul.mubr.f32.gmra.mrb[0].mxu0 %v2507
      %v2706 = vpop.f32.mrb[0].mxu0
      %v2707 = vadd.f32 0.0, %v2706
      %v2708 = vpop.f32.mrb[0].mxu0
      %v2709 = vadd.f32 0.0, %v2708
      %2710 = vmatprep.mubr.f32.mxu0 %v2593
      %2711 = vmatmul.mubr.f32.gmra.mrb[0].mxu0 %v2509
      %v2712 = vpop.f32.mrb[0].mxu0
      %v2713 = vadd.f32 0.0, %v2712
      %v2714 = vpop.f32.mrb[0].mxu0
      %v2715 = vadd.f32 0.0, %v2714
      %2716 = vmatprep.mubr.f32.mxu0 %v2596
      %2717 = vmatmul.mubr.f32.gmra.mrb[0].mxu0 %v2511
      %v2718 = vpop.f32.mrb[0].mxu0
      %v2719 = vadd.f32 0.0, %v2718
      %v2720 = vpop.f32.mrb[0].mxu0
      %v2721 = vadd.f32 0.0, %v2720
      %2722 = vmatprep.mubr.f32.mxu0 %v2599
      %2723 = vmatmul.mubr.f32.gmra.mrb[0].mxu0 %v2513
      %v2724 = vpop.f32.mrb[0].mxu0
      %v2725 = vadd.f32 0.0, %v2724
      %v2726 = vpop.f32.mrb[0].mxu0
      %v2727 = vadd.f32 0.0, %v2726
      %2728 = vmatprep.mubr.f32.mxu0 %v2602
      %2729 = vmatmul.mubr.f32.gmra.mrb[0].mxu0 %v2515
      %v2730 = vpop.f32.mrb[0].mxu0
      %v2731 = vadd.f32 0.0, %v2730
      %v2732 = vpop.f32.mrb[0].mxu0
      %v2733 = vadd.f32 0.0, %v2732
      %2734 = vmatprep.mubr.f32.mxu0 %v2605
      %2735 = vmatmul.mubr.f32.gmra.mrb[0].mxu0 %v2517
      %v2736 = vpop.f32.mrb[0].mxu0
      %v2737 = vadd.f32 0.0, %v2736
      %v2738 = vpop.f32.mrb[0].mxu0
      %v2739 = vadd.f32 0.0, %v2738
      %2740 = vmatprep.mubr.f32.mxu0 %v2608
      %2741 = vmatmul.mubr.f32.gmra.mrb[0].mxu0 %v2519
      %v2742 = vpop.f32.mrb[0].mxu0
      %v2743 = vadd.f32 0.0, %v2742
      %v2744 = vpop.f32.mrb[0].mxu0
      %v2745 = vadd.f32 0.0, %v2744
      %2746 = vmatprep.mubr.f32.mxu0 %v2611
      %2747 = vmatmul.mubr.f32.gmra.mrb[0].mxu0 %v2521
      %v2748 = vpop.f32.mrb[0].mxu0
      %v2749 = vadd.f32 0.0, %v2748
      %v2750 = vpop.f32.mrb[0].mxu0
      %v2751 = vadd.f32 0.0, %v2750
      %2752 = vmatprep.mubr.f32.mxu0 %v2614
      %2753 = vmatmul.mubr.f32.gmra.mrb[0].mxu0 %v2523
      %v2754 = vpop.f32.mrb[0].mxu0
      %v2755 = vadd.f32 0.0, %v2754
      %v2756 = vpop.f32.mrb[0].mxu0
      %v2757 = vadd.f32 0.0, %v2756
      %2758 = vmatprep.mubr.f32.mxu0 %v2617
      %2759 = vmatmul.mubr.f32.gmra.mrb[0].mxu0 %v2525
      %v2760 = vpop.f32.mrb[0].mxu0
      %v2761 = vadd.f32 0.0, %v2760
      %v2762 = vpop.f32.mrb[0].mxu0
      %v2763 = vadd.f32 0.0, %v2762
      %2764 = vmatprep.mubr.f32.mxu0 %v2620
      %2765 = vmatmul.mubr.f32.gmra.mrb[0].mxu0 %v2527
      %v2766 = vpop.f32.mrb[0].mxu0
      %v2767 = vadd.f32 0.0, %v2766
      %v2768 = vpop.f32.mrb[0].mxu0
      %v2769 = vadd.f32 0.0, %v2768
      %2770 = vmatprep.mubr.f32.mxu0 %v2623
      %2771 = vmatmul.mubr.f32.gmra.mrb[0].mxu0 %v2529
      %v2772 = vpop.f32.mrb[0].mxu0
      %v2773 = vadd.f32 0.0, %v2772
      %v2774 = vpop.f32.mrb[0].mxu0
      %v2775 = vadd.f32 0.0, %v2774
      %2776 = vmatprep.mubr.f32.mxu0 %v2626
      %2777 = vmatmul.mubr.f32.gmra.mrb[0].mxu0 %v2531
      %v2778 = vpop.f32.mrb[0].mxu0
      %v2779 = vadd.f32 0.0, %v2778
      %v2780 = vpop.f32.mrb[0].mxu0
      %v2781 = vadd.f32 0.0, %v2780
      %2782 = vmatprep.mubr.f32.mxu0 %v2629
      %2783 = vmatmul.mubr.f32.gmra.mrb[0].mxu0 %v2533
      %v2784 = vpop.f32.mrb[0].mxu0
      %v2785 = vadd.f32 0.0, %v2784
      %v2786 = vpop.f32.mrb[0].mxu0
      %v2787 = vadd.f32 0.0, %v2786
      %2788 = vmatprep.mubr.f32.mxu0 %v2632
      %2789 = vmatmul.mubr.f32.gmra.mrb[0].mxu0 %v2535
      %v2790 = vpop.f32.mrb[0].mxu0
      %v2791 = vadd.f32 0.0, %v2790
      %v2792 = vpop.f32.mrb[0].mxu0
      %v2793 = vadd.f32 0.0, %v2792
      %2794 = vdwg.mxu0
      %v2795 = vadd.f32 %v2473, %v2701
      %v2796 = vadd.f32 %v2474, %v2703
      %v2797 = vadd.f32 %v2475, %v2707
      %v2798 = vadd.f32 %v2476, %v2709
      %v2799 = vadd.f32 %v2477, %v2713
      %v2800 = vadd.f32 %v2478, %v2715
      %v2801 = vadd.f32 %v2479, %v2719
      %v2802 = vadd.f32 %v2480, %v2721
      %v2803 = vadd.f32 %v2481, %v2725
      %v2804 = vadd.f32 %v2482, %v2727
      %v2805 = vadd.f32 %v2483, %v2731
      %v2806 = vadd.f32 %v2484, %v2733
      %v2807 = vadd.f32 %v2485, %v2737
      %v2808 = vadd.f32 %v2486, %v2739
      %v2809 = vadd.f32 %v2487, %v2743
      %v2810 = vadd.f32 %v2488, %v2745
      %v2811 = vadd.f32 %v2489, %v2749
      %v2812 = vadd.f32 %v2490, %v2751
      %v2813 = vadd.f32 %v2491, %v2755
      %v2814 = vadd.f32 %v2492, %v2757
      %v2815 = vadd.f32 %v2493, %v2761
      %v2816 = vadd.f32 %v2494, %v2763
      %v2817 = vadd.f32 %v2495, %v2767
      %v2818 = vadd.f32 %v2496, %v2769
      %v2819 = vadd.f32 %v2497, %v2773
      %v2820 = vadd.f32 %v2498, %v2775
      %v2821 = vadd.f32 %v2499, %v2779
      %v2822 = vadd.f32 %v2500, %v2781
      %v2823 = vadd.f32 %v2501, %v2785
      %v2824 = vadd.f32 %v2502, %v2787
      %v2825 = vadd.f32 %v2503, %v2791
      %v2826 = vadd.f32 %v2504, %v2793
      %v2827 = vld [vmem:[%s346 + $0x30] sm:$0xfe]
      %v2828 = vld [vmem:[%s346 + $0x38] sm:$0xfe]
      %v2829 = vld [vmem:[%s346 + $0x120] sm:$0x7]
      %v2830 = vld [vmem:[%s346 + $0x128] sm:$0x7]
      %s2831 = scalar_lea.vmem %s1, 2688
      %v2832 = vld [vmem:[%s2831] sm:$0xff]
      %v2833 = vld [vmem:[%s2831 + $0x8] sm:$0xff]
      %v2834 = vld [vmem:[%s2831 + $0x10] sm:$0xff]
      %v2835 = vld [vmem:[%s2831 + $0x18] sm:$0xff]
      %v2836 = vld [vmem:[%s2831 + $0x20] sm:$0xff]
      %v2837 = vld [vmem:[%s2831 + $0x28] sm:$0xff]
      %v2838 = vld [vmem:[%s2831 + $0x30] sm:$0xff]
      %v2839 = vld [vmem:[%s2831 + $0x38] sm:$0xff]
      %v2840 = vld [vmem:[%s2831 + $0x40] sm:$0xff]
      %v2841 = vld [vmem:[%s2831 + $0x48] sm:$0xff]
      %v2842 = vld [vmem:[%s2831 + $0x50] sm:$0xff]
      %v2843 = vld [vmem:[%s2831 + $0x58] sm:$0xff]
      %v2844 = vld [vmem:[%s2831 + $0x60] sm:$0xff]
      %v2845 = vld [vmem:[%s2831 + $0x68] sm:$0xff]
      %v2846 = vld [vmem:[%s2831 + $0x70] sm:$0xff]
      %v2847 = vld [vmem:[%s2831 + $0x78] sm:$0xff]
      %v2848 = vld [vmem:[%s2831 + $0x80] sm:$0xff]
      %v2849 = vld [vmem:[%s2831 + $0x88] sm:$0xff]
      %v2850 = vld [vmem:[%s2831 + $0x90] sm:$0xff]
      %v2851 = vld [vmem:[%s2831 + $0x98] sm:$0xff]
      %v2852 = vld [vmem:[%s2831 + $0xa0] sm:$0xff]
      %v2853 = vld [vmem:[%s2831 + $0xa8] sm:$0xff]
      %v2854 = vld [vmem:[%s2831 + $0xb0] sm:$0xff]
      %v2855 = vld [vmem:[%s2831 + $0xb8] sm:$0xff]
      %v2856 = vld [vmem:[%s2831 + $0xc0] sm:$0xff]
      %v2857 = vld [vmem:[%s2831 + $0xc8] sm:$0xff]
      %v2858 = vld [vmem:[%s2831 + $0xd0] sm:$0xff]
      %v2859 = vld [vmem:[%s2831 + $0xd8] sm:$0xff]
      %v2860 = vld [vmem:[%s2831 + $0xe0] sm:$0xff]
      %v2861 = vld [vmem:[%s2831 + $0xe8] sm:$0xff]
      %v2862 = vld [vmem:[%s2831 + $0xf0] sm:$0xff]
      %v2863 = vld [vmem:[%s2831 + $0xf8] sm:$0xff]
      %v2864 = vld [vmem:[%s2831 + $0x100] sm:$0xff]
      %v2865 = vld [vmem:[%s2831 + $0x108] sm:$0xff]
      %v2866 = vld [vmem:[%s2831 + $0x110] sm:$0xff]
      %v2867 = vld [vmem:[%s2831 + $0x118] sm:$0xff]
      %v2868 = vld [vmem:[%s2831 + $0x120] sm:$0xff]
      %v2869 = vld [vmem:[%s2831 + $0x128] sm:$0xff]
      %v2870 = vld [vmem:[%s2831 + $0x130] sm:$0xff]
      %v2871 = vld [vmem:[%s2831 + $0x138] sm:$0xff]
      %v2872 = vld [vmem:[%s2831 + $0x140] sm:$0xff]
      %v2873 = vld [vmem:[%s2831 + $0x148] sm:$0xff]
      %v2874 = vld [vmem:[%s2831 + $0x150] sm:$0xff]
      %v2875 = vld [vmem:[%s2831 + $0x158] sm:$0xff]
      %v2876 = vld [vmem:[%s2831 + $0x160] sm:$0xff]
      %v2877 = vld [vmem:[%s2831 + $0x168] sm:$0xff]
      %v2878 = vld [vmem:[%s2831 + $0x170] sm:$0xff]
      %v2879 = vld [vmem:[%s2831 + $0x178] sm:$0xff]
      %v2898 = vrot.slane %v2827, 1
      %v2899 = vrot.slane %v2507, 1
      %v2900 = vsel %vm537, %v2898, %v2899
      %v2901 = vrot.slane %v2828, 1
      %v2902 = vrot.slane %v2508, 1
      %v2903 = vsel %vm537, %v2901, %v2902
      %v2904 = vrot.slane %v2509, 1
      %v2905 = vsel %vm537, %v2899, %v2904
      %v2906 = vrot.slane %v2510, 1
      %v2907 = vsel %vm537, %v2902, %v2906
      %v2908 = vrot.slane %v2511, 1
      %v2909 = vsel %vm537, %v2904, %v2908
      %v2910 = vrot.slane %v2512, 1
      %v2911 = vsel %vm537, %v2906, %v2910
      %v2912 = vrot.slane %v2513, 1
      %v2913 = vsel %vm537, %v2908, %v2912
      %v2914 = vrot.slane %v2514, 1
      %v2915 = vsel %vm537, %v2910, %v2914
      %v2916 = vrot.slane %v2515, 1
      %v2917 = vsel %vm537, %v2912, %v2916
      %v2918 = vrot.slane %v2516, 1
      %v2919 = vsel %vm537, %v2914, %v2918
      %v2920 = vrot.slane %v2517, 1
      %v2921 = vsel %vm537, %v2916, %v2920
      %v2922 = vrot.slane %v2518, 1
      %v2923 = vsel %vm537, %v2918, %v2922
      %v2924 = vrot.slane %v2519, 1
      %v2925 = vsel %vm537, %v2920, %v2924
      %v2926 = vrot.slane %v2520, 1
      %v2927 = vsel %vm537, %v2922, %v2926
      %v2928 = vrot.slane %v2521, 1
      %v2929 = vsel %vm537, %v2924, %v2928
      %v2930 = vrot.slane %v2522, 1
      %v2931 = vsel %vm537, %v2926, %v2930
      %v2932 = vrot.slane %v2523, 1
      %v2933 = vsel %vm537, %v2928, %v2932
      %v2934 = vrot.slane %v2524, 1
      %v2935 = vsel %vm537, %v2930, %v2934
      %v2936 = vrot.slane %v2525, 1
      %v2937 = vsel %vm537, %v2932, %v2936
      %v2938 = vrot.slane %v2526, 1
      %v2939 = vsel %vm537, %v2934, %v2938
      %v2940 = vrot.slane %v2527, 1
      %v2941 = vsel %vm537, %v2936, %v2940
      %v2942 = vrot.slane %v2528, 1
      %v2943 = vsel %vm537, %v2938, %v2942
      %v2944 = vrot.slane %v2529, 1
      %v2945 = vsel %vm537, %v2940, %v2944
      %v2946 = vrot.slane %v2530, 1
      %v2947 = vsel %vm537, %v2942, %v2946
      %v2948 = vrot.slane %v2531, 1
      %v2949 = vsel %vm537, %v2944, %v2948
      %v2950 = vrot.slane %v2532, 1
      %v2951 = vsel %vm537, %v2946, %v2950
      %v2952 = vrot.slane %v2533, 1
      %v2953 = vsel %vm537, %v2948, %v2952
      %v2954 = vrot.slane %v2534, 1
      %v2955 = vsel %vm537, %v2950, %v2954
      %v2956 = vrot.slane %v2829, 1
      %v2957 = vsel %vm537, %v2952, %v2956
      %v2958 = vrot.slane %v2830, 1
      %v2959 = vsel %vm537, %v2954, %v2958
      %v2976 = vsel %vm616, %v2903, 0
      %v2978 = vsel %vm616, %v2907, 0
      %v2980 = vsel %vm616, %v2911, 0
      %v2982 = vsel %vm616, %v2915, 0
      %v2984 = vsel %vm616, %v2919, 0
      %v2986 = vsel %vm616, %v2923, 0
      %v2988 = vsel %vm616, %v2927, 0
      %v2990 = vsel %vm616, %v2931, 0
      %v2992 = vsel %vm616, %v2935, 0
      %v2994 = vsel %vm616, %v2939, 0
      %v2996 = vsel %vm616, %v2943, 0
      %v2998 = vsel %vm616, %v2947, 0
      %v3000 = vsel %vm616, %v2951, 0
      %v3002 = vsel %vm616, %v2955, 0
      %v3004 = vsel %vm616, %v2959, 0
      %v3006 = vsel %vm616, %v2958, 0
      %3008 = vmatprep.subr.mxu0 %v2833
      %3009 = vmatpush1.msra.mxu0 %v2832
      %3010 = vmatprep.subr.mxu0 %v2835
      %3011 = vmatpush1.msra.mxu0 %v2834
      %3012 = vmatprep.subr.mxu0 %v2837
      %3013 = vmatpush1.msra.mxu0 %v2836
      %3014 = vmatprep.subr.mxu0 %v2839
      %3015 = vmatpush1.msra.mxu0 %v2838
      %3016 = vmatprep.subr.mxu0 %v2841
      %3017 = vmatpush1.msra.mxu0 %v2840
      %3018 = vmatprep.subr.mxu0 %v2843
      %3019 = vmatpush1.msra.mxu0 %v2842
      %3020 = vmatprep.subr.mxu0 %v2845
      %3021 = vmatpush1.msra.mxu0 %v2844
      %3022 = vmatprep.subr.mxu0 %v2847
      %3023 = vmatpush1.msra.mxu0 %v2846
      %3024 = vmatprep.subr.mxu0 %v2849
      %3025 = vmatpush1.msra.mxu0 %v2848
      %3026 = vmatprep.subr.mxu0 %v2851
      %3027 = vmatpush1.msra.mxu0 %v2850
      %3028 = vmatprep.subr.mxu0 %v2853
      %3029 = vmatpush1.msra.mxu0 %v2852
      %3030 = vmatprep.subr.mxu0 %v2855
      %3031 = vmatpush1.msra.mxu0 %v2854
      %3032 = vmatprep.subr.mxu0 %v2857
      %3033 = vmatpush1.msra.mxu0 %v2856
      %3034 = vmatprep.subr.mxu0 %v2859
      %3035 = vmatpush1.msra.mxu0 %v2858
      %3036 = vmatprep.subr.mxu0 %v2861
      %3037 = vmatpush1.msra.mxu0 %v2860
      %3038 = vmatprep.subr.mxu0 %v2863
      %3039 = vmatpush1.msra.mxu0 %v2862
      %3040 = vmatprep.subr.mxu0 %v2865
      %3041 = vmatpush1.msra.mxu0 %v2864
      %3042 = vmatprep.subr.mxu0 %v2867
      %3043 = vmatpush1.msra.mxu0 %v2866
      %3044 = vmatprep.subr.mxu0 %v2869
      %3045 = vmatpush1.msra.mxu0 %v2868
      %3046 = vmatprep.subr.mxu0 %v2871
      %3047 = vmatpush1.msra.mxu0 %v2870
      %3048 = vmatprep.subr.mxu0 %v2873
      %3049 = vmatpush1.msra.mxu0 %v2872
      %3050 = vmatprep.subr.mxu0 %v2875
      %3051 = vmatpush1.msra.mxu0 %v2874
      %3052 = vmatprep.subr.mxu0 %v2877
      %3053 = vmatpush1.msra.mxu0 %v2876
      %3054 = vmatprep.subr.mxu0 %v2879
      %3055 = vmatpush1.msra.mxu0 %v2878
      %3056 = vmatprep.subr.mxu0 0.0
      %3057 = vmatpush1.msra.mxu0 0.0
      %3058 = vmatprep.subr.mxu0 0.0
      %3059 = vmatpush1.msra.mxu0 0.0
      %3060 = vmatprep.subr.mxu0 0.0
      %3061 = vmatpush1.msra.mxu0 0.0
      %3062 = vmatprep.subr.mxu0 0.0
      %3063 = vmatpush1.msra.mxu0 0.0
      %3064 = vmatprep.subr.mxu0 0.0
      %3065 = vmatpush1.msra.mxu0 0.0
      %3066 = vmatprep.subr.mxu0 0.0
      %3067 = vmatpush1.msra.mxu0 0.0
      %3068 = vmatprep.subr.mxu0 0.0
      %3069 = vmatpush1.msra.mxu0 0.0
      %3070 = vmatprep.subr.mxu0 0.0
      %3071 = vmatpush1.msra.mxu0 0.0
      %3072 = vmatprep.mubr.f32.mxu0 %v2976
      %3073 = vmatmul.mubr.f32.gmra.mrb[0].mxu0 %v2900
      %v3074 = vpop.f32.mrb[0].mxu0
      %v3075 = vadd.f32 0.0, %v3074
      %v3076 = vpop.f32.mrb[0].mxu0
      %v3077 = vadd.f32 0.0, %v3076
      %3078 = vmatprep.mubr.f32.mxu0 %v2978
      %3079 = vmatmul.mubr.f32.gmra.mrb[0].mxu0 %v2905
      %v3080 = vpop.f32.mrb[0].mxu0
      %v3081 = vadd.f32 0.0, %v3080
      %v3082 = vpop.f32.mrb[0].mxu0
      %v3083 = vadd.f32 0.0, %v3082
      %3084 = vmatprep.mubr.f32.mxu0 %v2980
      %3085 = vmatmul.mubr.f32.gmra.mrb[0].mxu0 %v2909
      %v3086 = vpop.f32.mrb[0].mxu0
      %v3087 = vadd.f32 0.0, %v3086
      %v3088 = vpop.f32.mrb[0].mxu0
      %v3089 = vadd.f32 0.0, %v3088
      %3090 = vmatprep.mubr.f32.mxu0 %v2982
      %3091 = vmatmul.mubr.f32.gmra.mrb[0].mxu0 %v2913
      %v3092 = vpop.f32.mrb[0].mxu0
      %v3093 = vadd.f32 0.0, %v3092
      %v3094 = vpop.f32.mrb[0].mxu0
      %v3095 = vadd.f32 0.0, %v3094
      %3096 = vmatprep.mubr.f32.mxu0 %v2984
      %3097 = vmatmul.mubr.f32.gmra.mrb[0].mxu0 %v2917
      %v3098 = vpop.f32.mrb[0].mxu0
      %v3099 = vadd.f32 0.0, %v3098
      %v3100 = vpop.f32.mrb[0].mxu0
      %v3101 = vadd.f32 0.0, %v3100
      %3102 = vmatprep.mubr.f32.mxu0 %v2986
      %3103 = vmatmul.mubr.f32.gmra.mrb[0].mxu0 %v2921
      %v3104 = vpop.f32.mrb[0].mxu0
      %v3105 = vadd.f32 0.0, %v3104
      %v3106 = vpop.f32.mrb[0].mxu0
      %v3107 = vadd.f32 0.0, %v3106
      %3108 = vmatprep.mubr.f32.mxu0 %v2988
      %3109 = vmatmul.mubr.f32.gmra.mrb[0].mxu0 %v2925
      %v3110 = vpop.f32.mrb[0].mxu0
      %v3111 = vadd.f32 0.0, %v3110
      %v3112 = vpop.f32.mrb[0].mxu0
      %v3113 = vadd.f32 0.0, %v3112
      %3114 = vmatprep.mubr.f32.mxu0 %v2990
      %3115 = vmatmul.mubr.f32.gmra.mrb[0].mxu0 %v2929
      %v3116 = vpop.f32.mrb[0].mxu0
      %v3117 = vadd.f32 0.0, %v3116
      %v3118 = vpop.f32.mrb[0].mxu0
      %v3119 = vadd.f32 0.0, %v3118
      %3120 = vmatprep.mubr.f32.mxu0 %v2992
      %3121 = vmatmul.mubr.f32.gmra.mrb[0].mxu0 %v2933
      %v3122 = vpop.f32.mrb[0].mxu0
      %v3123 = vadd.f32 0.0, %v3122
      %v3124 = vpop.f32.mrb[0].mxu0
      %v3125 = vadd.f32 0.0, %v3124
      %3126 = vmatprep.mubr.f32.mxu0 %v2994
      %3127 = vmatmul.mubr.f32.gmra.mrb[0].mxu0 %v2937
      %v3128 = vpop.f32.mrb[0].mxu0
      %v3129 = vadd.f32 0.0, %v3128
      %v3130 = vpop.f32.mrb[0].mxu0
      %v3131 = vadd.f32 0.0, %v3130
      %3132 = vmatprep.mubr.f32.mxu0 %v2996
      %3133 = vmatmul.mubr.f32.gmra.mrb[0].mxu0 %v2941
      %v3134 = vpop.f32.mrb[0].mxu0
      %v3135 = vadd.f32 0.0, %v3134
      %v3136 = vpop.f32.mrb[0].mxu0
      %v3137 = vadd.f32 0.0, %v3136
      %3138 = vmatprep.mubr.f32.mxu0 %v2998
      %3139 = vmatmul.mubr.f32.gmra.mrb[0].mxu0 %v2945
      %v3140 = vpop.f32.mrb[0].mxu0
      %v3141 = vadd.f32 0.0, %v3140
      %v3142 = vpop.f32.mrb[0].mxu0
      %v3143 = vadd.f32 0.0, %v3142
      %3144 = vmatprep.mubr.f32.mxu0 %v3000
      %3145 = vmatmul.mubr.f32.gmra.mrb[0].mxu0 %v2949
      %v3146 = vpop.f32.mrb[0].mxu0
      %v3147 = vadd.f32 0.0, %v3146
      %v3148 = vpop.f32.mrb[0].mxu0
      %v3149 = vadd.f32 0.0, %v3148
      %3150 = vmatprep.mubr.f32.mxu0 %v3002
      %3151 = vmatmul.mubr.f32.gmra.mrb[0].mxu0 %v2953
      %v3152 = vpop.f32.mrb[0].mxu0
      %v3153 = vadd.f32 0.0, %v3152
      %v3154 = vpop.f32.mrb[0].mxu0
      %v3155 = vadd.f32 0.0, %v3154
      %3156 = vmatprep.mubr.f32.mxu0 %v3004
      %3157 = vmatmul.mubr.f32.gmra.mrb[0].mxu0 %v2957
      %v3158 = vpop.f32.mrb[0].mxu0
      %v3159 = vadd.f32 0.0, %v3158
      %v3160 = vpop.f32.mrb[0].mxu0
      %v3161 = vadd.f32 0.0, %v3160
      %3162 = vmatprep.mubr.f32.mxu0 %v3006
      %3163 = vmatmul.mubr.f32.gmra.mrb[0].mxu0 %v2956
      %v3164 = vpop.f32.mrb[0].mxu0
      %v3165 = vadd.f32 0.0, %v3164
      %v3166 = vpop.f32.mrb[0].mxu0
      %v3167 = vadd.f32 0.0, %v3166
      %3168 = vdwg.mxu0
      %v3169 = vadd.f32 %v2795, %v3075
      %v3170 = vadd.f32 %v2796, %v3077
      %v3171 = vadd.f32 %v2797, %v3081
      %v3172 = vadd.f32 %v2798, %v3083
      %v3173 = vadd.f32 %v2799, %v3087
      %v3174 = vadd.f32 %v2800, %v3089
      %v3175 = vadd.f32 %v2801, %v3093
      %v3176 = vadd.f32 %v2802, %v3095
      %v3177 = vadd.f32 %v2803, %v3099
      %v3178 = vadd.f32 %v2804, %v3101
      %v3179 = vadd.f32 %v2805, %v3105
      %v3180 = vadd.f32 %v2806, %v3107
      %v3181 = vadd.f32 %v2807, %v3111
      %v3182 = vadd.f32 %v2808, %v3113
      %v3183 = vadd.f32 %v2809, %v3117
      %v3184 = vadd.f32 %v2810, %v3119
      %v3185 = vadd.f32 %v2811, %v3123
      %v3186 = vadd.f32 %v2812, %v3125
      %v3187 = vadd.f32 %v2813, %v3129
      %v3188 = vadd.f32 %v2814, %v3131
      %v3189 = vadd.f32 %v2815, %v3135
      %v3190 = vadd.f32 %v2816, %v3137
      %v3191 = vadd.f32 %v2817, %v3141
      %v3192 = vadd.f32 %v2818, %v3143
      %v3193 = vadd.f32 %v2819, %v3147
      %v3194 = vadd.f32 %v2820, %v3149
      %v3195 = vadd.f32 %v2821, %v3153
      %v3196 = vadd.f32 %v2822, %v3155
      %v3197 = vadd.f32 %v2823, %v3159
      %v3198 = vadd.f32 %v2824, %v3161
      %v3199 = vadd.f32 %v2825, %v3165
      %v3200 = vadd.f32 %v2826, %v3167
      %v3201 = vld [vmem:[%s346 + $0x30] sm:$0xfc]
      %v3202 = vld [vmem:[%s346 + $0x38] sm:$0xfc]
      %v3203 = vld [vmem:[%s346 + $0x120] sm:$0xf]
      %v3204 = vld [vmem:[%s346 + $0x128] sm:$0xf]
      %s3205 = scalar_lea.vmem %s1, 3072
      %v3206 = vld [vmem:[%s3205] sm:$0xff]
      %v3207 = vld [vmem:[%s3205 + $0x8] sm:$0xff]
      %v3208 = vld [vmem:[%s3205 + $0x10] sm:$0xff]
      %v3209 = vld [vmem:[%s3205 + $0x18] sm:$0xff]
      %v3210 = vld [vmem:[%s3205 + $0x20] sm:$0xff]
      %v3211 = vld [vmem:[%s3205 + $0x28] sm:$0xff]
      %v3212 = vld [vmem:[%s3205 + $0x30] sm:$0xff]
      %v3213 = vld [vmem:[%s3205 + $0x38] sm:$0xff]
      %v3214 = vld [vmem:[%s3205 + $0x40] sm:$0xff]
      %v3215 = vld [vmem:[%s3205 + $0x48] sm:$0xff]
      %v3216 = vld [vmem:[%s3205 + $0x50] sm:$0xff]
      %v3217 = vld [vmem:[%s3205 + $0x58] sm:$0xff]
      %v3218 = vld [vmem:[%s3205 + $0x60] sm:$0xff]
      %v3219 = vld [vmem:[%s3205 + $0x68] sm:$0xff]
      %v3220 = vld [vmem:[%s3205 + $0x70] sm:$0xff]
      %v3221 = vld [vmem:[%s3205 + $0x78] sm:$0xff]
      %v3222 = vld [vmem:[%s3205 + $0x80] sm:$0xff]
      %v3223 = vld [vmem:[%s3205 + $0x88] sm:$0xff]
      %v3224 = vld [vmem:[%s3205 + $0x90] sm:$0xff]
      %v3225 = vld [vmem:[%s3205 + $0x98] sm:$0xff]
      %v3226 = vld [vmem:[%s3205 + $0xa0] sm:$0xff]
      %v3227 = vld [vmem:[%s3205 + $0xa8] sm:$0xff]
      %v3228 = vld [vmem:[%s3205 + $0xb0] sm:$0xff]
      %v3229 = vld [vmem:[%s3205 + $0xb8] sm:$0xff]
      %v3230 = vld [vmem:[%s3205 + $0xc0] sm:$0xff]
      %v3231 = vld [vmem:[%s3205 + $0xc8] sm:$0xff]
      %v3232 = vld [vmem:[%s3205 + $0xd0] sm:$0xff]
      %v3233 = vld [vmem:[%s3205 + $0xd8] sm:$0xff]
      %v3234 = vld [vmem:[%s3205 + $0xe0] sm:$0xff]
      %v3235 = vld [vmem:[%s3205 + $0xe8] sm:$0xff]
      %v3236 = vld [vmem:[%s3205 + $0xf0] sm:$0xff]
      %v3237 = vld [vmem:[%s3205 + $0xf8] sm:$0xff]
      %v3238 = vld [vmem:[%s3205 + $0x100] sm:$0xff]
      %v3239 = vld [vmem:[%s3205 + $0x108] sm:$0xff]
      %v3240 = vld [vmem:[%s3205 + $0x110] sm:$0xff]
      %v3241 = vld [vmem:[%s3205 + $0x118] sm:$0xff]
      %v3242 = vld [vmem:[%s3205 + $0x120] sm:$0xff]
      %v3243 = vld [vmem:[%s3205 + $0x128] sm:$0xff]
      %v3244 = vld [vmem:[%s3205 + $0x130] sm:$0xff]
      %v3245 = vld [vmem:[%s3205 + $0x138] sm:$0xff]
      %v3246 = vld [vmem:[%s3205 + $0x140] sm:$0xff]
      %v3247 = vld [vmem:[%s3205 + $0x148] sm:$0xff]
      %v3248 = vld [vmem:[%s3205 + $0x150] sm:$0xff]
      %v3249 = vld [vmem:[%s3205 + $0x158] sm:$0xff]
      %v3250 = vld [vmem:[%s3205 + $0x160] sm:$0xff]
      %v3251 = vld [vmem:[%s3205 + $0x168] sm:$0xff]
      %v3252 = vld [vmem:[%s3205 + $0x170] sm:$0xff]
      %v3253 = vld [vmem:[%s3205 + $0x178] sm:$0xff]
      %v3258 = vrot.slane %v3201, 2
      %v3259 = vrot.slane %v2507, 2
      %v3260 = vsel %vm1062, %v3258, %v3259
      %v3261 = vrot.slane %v3202, 2
      %v3262 = vrot.slane %v2508, 2
      %v3263 = vsel %vm1062, %v3261, %v3262
      %v3264 = vrot.slane %v2509, 2
      %v3265 = vsel %vm1062, %v3259, %v3264
      %v3266 = vrot.slane %v2510, 2
      %v3267 = vsel %vm1062, %v3262, %v3266
      %v3268 = vrot.slane %v2511, 2
      %v3269 = vsel %vm1062, %v3264, %v3268
      %v3270 = vrot.slane %v2512, 2
      %v3271 = vsel %vm1062, %v3266, %v3270
      %v3272 = vrot.slane %v2513, 2
      %v3273 = vsel %vm1062, %v3268, %v3272
      %v3274 = vrot.slane %v2514, 2
      %v3275 = vsel %vm1062, %v3270, %v3274
      %v3276 = vrot.slane %v2515, 2
      %v3277 = vsel %vm1062, %v3272, %v3276
      %v3278 = vrot.slane %v2516, 2
      %v3279 = vsel %vm1062, %v3274, %v3278
      %v3280 = vrot.slane %v2517, 2
      %v3281 = vsel %vm1062, %v3276, %v3280
      %v3282 = vrot.slane %v2518, 2
      %v3283 = vsel %vm1062, %v3278, %v3282
      %v3284 = vrot.slane %v2519, 2
      %v3285 = vsel %vm1062, %v3280, %v3284
      %v3286 = vrot.slane %v2520, 2
      %v3287 = vsel %vm1062, %v3282, %v3286
      %v3288 = vrot.slane %v2521, 2
      %v3289 = vsel %vm1062, %v3284, %v3288
      %v3290 = vrot.slane %v2522, 2
      %v3291 = vsel %vm1062, %v3286, %v3290
      %v3292 = vrot.slane %v2523, 2
      %v3293 = vsel %vm1062, %v3288, %v3292
      %v3294 = vrot.slane %v2524, 2
      %v3295 = vsel %vm1062, %v3290, %v3294
      %v3296 = vrot.slane %v2525, 2
      %v3297 = vsel %vm1062, %v3292, %v3296
      %v3298 = vrot.slane %v2526, 2
      %v3299 = vsel %vm1062, %v3294, %v3298
      %v3300 = vrot.slane %v2527, 2
      %v3301 = vsel %vm1062, %v3296, %v3300
      %v3302 = vrot.slane %v2528, 2
      %v3303 = vsel %vm1062, %v3298, %v3302
      %v3304 = vrot.slane %v2529, 2
      %v3305 = vsel %vm1062, %v3300, %v3304
      %v3306 = vrot.slane %v2530, 2
      %v3307 = vsel %vm1062, %v3302, %v3306
      %v3308 = vrot.slane %v2531, 2
      %v3309 = vsel %vm1062, %v3304, %v3308
      %v3310 = vrot.slane %v2532, 2
      %v3311 = vsel %vm1062, %v3306, %v3310
      %v3312 = vrot.slane %v2533, 2
      %v3313 = vsel %vm1062, %v3308, %v3312
      %v3314 = vrot.slane %v2534, 2
      %v3315 = vsel %vm1062, %v3310, %v3314
      %v3316 = vrot.slane %v3203, 2
      %v3317 = vsel %vm1062, %v3312, %v3316
      %v3318 = vrot.slane %v3204, 2
      %v3319 = vsel %vm1062, %v3314, %v3318
      %v3336 = vsel %vm616, %v3263, 0
      %v3338 = vsel %vm616, %v3267, 0
      %v3340 = vsel %vm616, %v3271, 0
      %v3342 = vsel %vm616, %v3275, 0
      %v3344 = vsel %vm616, %v3279, 0
      %v3346 = vsel %vm616, %v3283, 0
      %v3348 = vsel %vm616, %v3287, 0
      %v3350 = vsel %vm616, %v3291, 0
      %v3352 = vsel %vm616, %v3295, 0
      %v3354 = vsel %vm616, %v3299, 0
      %v3356 = vsel %vm616, %v3303, 0
      %v3358 = vsel %vm616, %v3307, 0
      %v3360 = vsel %vm616, %v3311, 0
      %v3362 = vsel %vm616, %v3315, 0
      %v3364 = vsel %vm616, %v3319, 0
      %v3366 = vsel %vm616, %v3318, 0
      %3368 = vmatprep.subr.mxu0 %v3207
      %3369 = vmatpush1.msra.mxu0 %v3206
      %3370 = vmatprep.subr.mxu0 %v3209
      %3371 = vmatpush1.msra.mxu0 %v3208
      %3372 = vmatprep.subr.mxu0 %v3211
      %3373 = vmatpush1.msra.mxu0 %v3210
      %3374 = vmatprep.subr.mxu0 %v3213
      %3375 = vmatpush1.msra.mxu0 %v3212
      %3376 = vmatprep.subr.mxu0 %v3215
      %3377 = vmatpush1.msra.mxu0 %v3214
      %3378 = vmatprep.subr.mxu0 %v3217
      %3379 = vmatpush1.msra.mxu0 %v3216
      %3380 = vmatprep.subr.mxu0 %v3219
      %3381 = vmatpush1.msra.mxu0 %v3218
      %3382 = vmatprep.subr.mxu0 %v3221
      %3383 = vmatpush1.msra.mxu0 %v3220
      %3384 = vmatprep.subr.mxu0 %v3223
      %3385 = vmatpush1.msra.mxu0 %v3222
      %3386 = vmatprep.subr.mxu0 %v3225
      %3387 = vmatpush1.msra.mxu0 %v3224
      %3388 = vmatprep.subr.mxu0 %v3227
      %3389 = vmatpush1.msra.mxu0 %v3226
      %3390 = vmatprep.subr.mxu0 %v3229
      %3391 = vmatpush1.msra.mxu0 %v3228
      %3392 = vmatprep.subr.mxu0 %v3231
      %3393 = vmatpush1.msra.mxu0 %v3230
      %3394 = vmatprep.subr.mxu0 %v3233
      %3395 = vmatpush1.msra.mxu0 %v3232
      %3396 = vmatprep.subr.mxu0 %v3235
      %3397 = vmatpush1.msra.mxu0 %v3234
      %3398 = vmatprep.subr.mxu0 %v3237
      %3399 = vmatpush1.msra.mxu0 %v3236
      %3400 = vmatprep.subr.mxu0 %v3239
      %3401 = vmatpush1.msra.mxu0 %v3238
      %3402 = vmatprep.subr.mxu0 %v3241
      %3403 = vmatpush1.msra.mxu0 %v3240
      %3404 = vmatprep.subr.mxu0 %v3243
      %3405 = vmatpush1.msra.mxu0 %v3242
      %3406 = vmatprep.subr.mxu0 %v3245
      %3407 = vmatpush1.msra.mxu0 %v3244
      %3408 = vmatprep.subr.mxu0 %v3247
      %3409 = vmatpush1.msra.mxu0 %v3246
      %3410 = vmatprep.subr.mxu0 %v3249
      %3411 = vmatpush1.msra.mxu0 %v3248
      %3412 = vmatprep.subr.mxu0 %v3251
      %3413 = vmatpush1.msra.mxu0 %v3250
      %3414 = vmatprep.subr.mxu0 %v3253
      %3415 = vmatpush1.msra.mxu0 %v3252
      %3416 = vmatprep.subr.mxu0 0.0
      %3417 = vmatpush1.msra.mxu0 0.0
      %3418 = vmatprep.subr.mxu0 0.0
      %3419 = vmatpush1.msra.mxu0 0.0
      %3420 = vmatprep.subr.mxu0 0.0
      %3421 = vmatpush1.msra.mxu0 0.0
      %3422 = vmatprep.subr.mxu0 0.0
      %3423 = vmatpush1.msra.mxu0 0.0
      %3424 = vmatprep.subr.mxu0 0.0
      %3425 = vmatpush1.msra.mxu0 0.0
      %3426 = vmatprep.subr.mxu0 0.0
      %3427 = vmatpush1.msra.mxu0 0.0
      %3428 = vmatprep.subr.mxu0 0.0
      %3429 = vmatpush1.msra.mxu0 0.0
      %3430 = vmatprep.subr.mxu0 0.0
      %3431 = vmatpush1.msra.mxu0 0.0
      %3432 = vmatprep.mubr.f32.mxu0 %v3336
      %3433 = vmatmul.mubr.f32.gmra.mrb[0].mxu0 %v3260
      %v3434 = vpop.f32.mrb[0].mxu0
      %v3435 = vadd.f32 0.0, %v3434
      %v3436 = vpop.f32.mrb[0].mxu0
      %v3437 = vadd.f32 0.0, %v3436
      %3438 = vmatprep.mubr.f32.mxu0 %v3338
      %3439 = vmatmul.mubr.f32.gmra.mrb[0].mxu0 %v3265
      %v3440 = vpop.f32.mrb[0].mxu0
      %v3441 = vadd.f32 0.0, %v3440
      %v3442 = vpop.f32.mrb[0].mxu0
      %v3443 = vadd.f32 0.0, %v3442
      %3444 = vmatprep.mubr.f32.mxu0 %v3340
      %3445 = vmatmul.mubr.f32.gmra.mrb[0].mxu0 %v3269
      %v3446 = vpop.f32.mrb[0].mxu0
      %v3447 = vadd.f32 0.0, %v3446
      %v3448 = vpop.f32.mrb[0].mxu0
      %v3449 = vadd.f32 0.0, %v3448
      %3450 = vmatprep.mubr.f32.mxu0 %v3342
      %3451 = vmatmul.mubr.f32.gmra.mrb[0].mxu0 %v3273
      %v3452 = vpop.f32.mrb[0].mxu0
      %v3453 = vadd.f32 0.0, %v3452
      %v3454 = vpop.f32.mrb[0].mxu0
      %v3455 = vadd.f32 0.0, %v3454
      %3456 = vmatprep.mubr.f32.mxu0 %v3344
      %3457 = vmatmul.mubr.f32.gmra.mrb[0].mxu0 %v3277
      %v3458 = vpop.f32.mrb[0].mxu0
      %v3459 = vadd.f32 0.0, %v3458
      %v3460 = vpop.f32.mrb[0].mxu0
      %v3461 = vadd.f32 0.0, %v3460
      %3462 = vmatprep.mubr.f32.mxu0 %v3346
      %3463 = vmatmul.mubr.f32.gmra.mrb[0].mxu0 %v3281
      %v3464 = vpop.f32.mrb[0].mxu0
      %v3465 = vadd.f32 0.0, %v3464
      %v3466 = vpop.f32.mrb[0].mxu0
      %v3467 = vadd.f32 0.0, %v3466
      %3468 = vmatprep.mubr.f32.mxu0 %v3348
      %3469 = vmatmul.mubr.f32.gmra.mrb[0].mxu0 %v3285
      %v3470 = vpop.f32.mrb[0].mxu0
      %v3471 = vadd.f32 0.0, %v3470
      %v3472 = vpop.f32.mrb[0].mxu0
      %v3473 = vadd.f32 0.0, %v3472
      %3474 = vmatprep.mubr.f32.mxu0 %v3350
      %3475 = vmatmul.mubr.f32.gmra.mrb[0].mxu0 %v3289
      %v3476 = vpop.f32.mrb[0].mxu0
      %v3477 = vadd.f32 0.0, %v3476
      %v3478 = vpop.f32.mrb[0].mxu0
      %v3479 = vadd.f32 0.0, %v3478
      %3480 = vmatprep.mubr.f32.mxu0 %v3352
      %3481 = vmatmul.mubr.f32.gmra.mrb[0].mxu0 %v3293
      %v3482 = vpop.f32.mrb[0].mxu0
      %v3483 = vadd.f32 0.0, %v3482
      %v3484 = vpop.f32.mrb[0].mxu0
      %v3485 = vadd.f32 0.0, %v3484
      %3486 = vmatprep.mubr.f32.mxu0 %v3354
      %3487 = vmatmul.mubr.f32.gmra.mrb[0].mxu0 %v3297
      %v3488 = vpop.f32.mrb[0].mxu0
      %v3489 = vadd.f32 0.0, %v3488
      %v3490 = vpop.f32.mrb[0].mxu0
      %v3491 = vadd.f32 0.0, %v3490
      %3492 = vmatprep.mubr.f32.mxu0 %v3356
      %3493 = vmatmul.mubr.f32.gmra.mrb[0].mxu0 %v3301
      %v3494 = vpop.f32.mrb[0].mxu0
      %v3495 = vadd.f32 0.0, %v3494
      %v3496 = vpop.f32.mrb[0].mxu0
      %v3497 = vadd.f32 0.0, %v3496
      %3498 = vmatprep.mubr.f32.mxu0 %v3358
      %3499 = vmatmul.mubr.f32.gmra.mrb[0].mxu0 %v3305
      %v3500 = vpop.f32.mrb[0].mxu0
      %v3501 = vadd.f32 0.0, %v3500
      %v3502 = vpop.f32.mrb[0].mxu0
      %v3503 = vadd.f32 0.0, %v3502
      %3504 = vmatprep.mubr.f32.mxu0 %v3360
      %3505 = vmatmul.mubr.f32.gmra.mrb[0].mxu0 %v3309
      %v3506 = vpop.f32.mrb[0].mxu0
      %v3507 = vadd.f32 0.0, %v3506
      %v3508 = vpop.f32.mrb[0].mxu0
      %v3509 = vadd.f32 0.0, %v3508
      %3510 = vmatprep.mubr.f32.mxu0 %v3362
      %3511 = vmatmul.mubr.f32.gmra.mrb[0].mxu0 %v3313
      %v3512 = vpop.f32.mrb[0].mxu0
      %v3513 = vadd.f32 0.0, %v3512
      %v3514 = vpop.f32.mrb[0].mxu0
      %v3515 = vadd.f32 0.0, %v3514
      %3516 = vmatprep.mubr.f32.mxu0 %v3364
      %3517 = vmatmul.mubr.f32.gmra.mrb[0].mxu0 %v3317
      %v3518 = vpop.f32.mrb[0].mxu0
      %v3519 = vadd.f32 0.0, %v3518
      %v3520 = vpop.f32.mrb[0].mxu0
      %v3521 = vadd.f32 0.0, %v3520
      %3522 = vmatprep.mubr.f32.mxu0 %v3366
      %3523 = vmatmul.mubr.f32.gmra.mrb[0].mxu0 %v3316
      %v3524 = vpop.f32.mrb[0].mxu0
      %v3525 = vadd.f32 0.0, %v3524
      %v3526 = vpop.f32.mrb[0].mxu0
      %v3527 = vadd.f32 0.0, %v3526
      %3528 = vdwg.mxu0
      %v3529 = vadd.f32 %v3169, %v3435
      %v3530 = vadd.f32 %v3170, %v3437
      %v3531 = vadd.f32 %v3171, %v3441
      %v3532 = vadd.f32 %v3172, %v3443
      %v3533 = vadd.f32 %v3173, %v3447
      %v3534 = vadd.f32 %v3174, %v3449
      %v3535 = vadd.f32 %v3175, %v3453
      %v3536 = vadd.f32 %v3176, %v3455
      %v3537 = vadd.f32 %v3177, %v3459
      %v3538 = vadd.f32 %v3178, %v3461
      %v3539 = vadd.f32 %v3179, %v3465
      %v3540 = vadd.f32 %v3180, %v3467
      %v3541 = vadd.f32 %v3181, %v3471
      %v3542 = vadd.f32 %v3182, %v3473
      %v3543 = vadd.f32 %v3183, %v3477
      %v3544 = vadd.f32 %v3184, %v3479
      %v3545 = vadd.f32 %v3185, %v3483
      %v3546 = vadd.f32 %v3186, %v3485
      %v3547 = vadd.f32 %v3187, %v3489
      %v3548 = vadd.f32 %v3188, %v3491
      %v3549 = vadd.f32 %v3189, %v3495
      %v3550 = vadd.f32 %v3190, %v3497
      %v3551 = vadd.f32 %v3191, %v3501
      %v3552 = vadd.f32 %v3192, %v3503
      %v3553 = vadd.f32 %v3193, %v3507
      %v3554 = vadd.f32 %v3194, %v3509
      %v3555 = vadd.f32 %v3195, %v3513
      %v3556 = vadd.f32 %v3196, %v3515
      %v3557 = vadd.f32 %v3197, %v3519
      %v3558 = vadd.f32 %v3198, %v3521
      %v3559 = vadd.f32 %v3199, %v3525
      %v3560 = vadd.f32 %v3200, %v3527
      %v3561 = vld [vmem:[%s2] sm:$0x3]
      %v3563 = vlaneseq
      %v3564 = vshrl.u32 %v3563, 7
      %v3565 = vsub.s32 0, %v3564
      %v3566 = vrot.slane %v3561, %v3565
      %v3567 = vlaneseq
      %v3568 = vshrl.u32 %v3567, 7
      %v3569 = vsub.s32 1, %v3568
      %v3570 = vrot.slane %v3561, %v3569
      %v3573 = vadd.f32 %v3529, %v3566
      %v3574 = vadd.f32 %v3530, %v3570
      %v3575 = vadd.f32 %v3531, %v3566
      %v3576 = vadd.f32 %v3532, %v3570
      %v3577 = vadd.f32 %v3533, %v3566
      %v3578 = vadd.f32 %v3534, %v3570
      %v3579 = vadd.f32 %v3535, %v3566
      %v3580 = vadd.f32 %v3536, %v3570
      %v3581 = vadd.f32 %v3537, %v3566
      %v3582 = vadd.f32 %v3538, %v3570
      %v3583 = vadd.f32 %v3539, %v3566
      %v3584 = vadd.f32 %v3540, %v3570
      %v3585 = vadd.f32 %v3541, %v3566
      %v3586 = vadd.f32 %v3542, %v3570
      %v3587 = vadd.f32 %v3543, %v3566
      %v3588 = vadd.f32 %v3544, %v3570
      %v3589 = vadd.f32 %v3545, %v3566
      %v3590 = vadd.f32 %v3546, %v3570
      %v3591 = vadd.f32 %v3547, %v3566
      %v3592 = vadd.f32 %v3548, %v3570
      %v3593 = vadd.f32 %v3549, %v3566
      %v3594 = vadd.f32 %v3550, %v3570
      %v3595 = vadd.f32 %v3551, %v3566
      %v3596 = vadd.f32 %v3552, %v3570
      %v3597 = vadd.f32 %v3553, %v3566
      %v3598 = vadd.f32 %v3554, %v3570
      %v3599 = vadd.f32 %v3555, %v3566
      %v3600 = vadd.f32 %v3556, %v3570
      %v3601 = vadd.f32 %v3557, %v3566
      %v3602 = vadd.f32 %v3558, %v3570
      %v3603 = vadd.f32 %v3559, %v3566
      %v3604 = vadd.f32 %v3560, %v3570
      %v3605 = vmax.f32 %v3573, 0.0
      %v3606 = vmax.f32 %v3574, 0.0
      %v3607 = vmax.f32 %v3575, 0.0
      %v3608 = vmax.f32 %v3576, 0.0
      %v3609 = vmax.f32 %v3577, 0.0
      %v3610 = vmax.f32 %v3578, 0.0
      %v3611 = vmax.f32 %v3579, 0.0
      %v3612 = vmax.f32 %v3580, 0.0
      %v3613 = vmax.f32 %v3581, 0.0
      %v3614 = vmax.f32 %v3582, 0.0
      %v3615 = vmax.f32 %v3583, 0.0
      %v3616 = vmax.f32 %v3584, 0.0
      %v3617 = vmax.f32 %v3585, 0.0
      %v3618 = vmax.f32 %v3586, 0.0
      %v3619 = vmax.f32 %v3587, 0.0
      %v3620 = vmax.f32 %v3588, 0.0
      %v3621 = vmax.f32 %v3589, 0.0
      %v3622 = vmax.f32 %v3590, 0.0
      %v3623 = vmax.f32 %v3591, 0.0
      %v3624 = vmax.f32 %v3592, 0.0
      %v3625 = vmax.f32 %v3593, 0.0
      %v3626 = vmax.f32 %v3594, 0.0
      %v3627 = vmax.f32 %v3595, 0.0
      %v3628 = vmax.f32 %v3596, 0.0
      %v3629 = vmax.f32 %v3597, 0.0
      %v3630 = vmax.f32 %v3598, 0.0
      %v3631 = vmax.f32 %v3599, 0.0
      %v3632 = vmax.f32 %v3600, 0.0
      %v3633 = vmax.f32 %v3601, 0.0
      %v3634 = vmax.f32 %v3602, 0.0
      %v3635 = vmax.f32 %v3603, 0.0
      %v3636 = vmax.f32 %v3604, 0.0
      %v3637 = vld [vmem:[%s351] sm:$0xff]
      %v3638 = vld [vmem:[%s351 + $0x8] sm:$0xff]
      %v3639 = vld [vmem:[%s351 + $0x10] sm:$0xff]
      %v3640 = vld [vmem:[%s351 + $0x18] sm:$0xff]
      %v3641 = vld [vmem:[%s351 + $0x20] sm:$0xff]
      %v3642 = vld [vmem:[%s351 + $0x28] sm:$0xff]
      %v3643 = vld [vmem:[%s351 + $0x30] sm:$0xff]
      %v3644 = vld [vmem:[%s351 + $0x38] sm:$0xff]
      %v3645 = vld [vmem:[%s351 + $0x40] sm:$0xff]
      %v3646 = vld [vmem:[%s351 + $0x48] sm:$0xff]
      %v3647 = vld [vmem:[%s351 + $0x50] sm:$0xff]
      %v3648 = vld [vmem:[%s351 + $0x58] sm:$0xff]
      %v3649 = vld [vmem:[%s351 + $0x60] sm:$0xff]
      %v3650 = vld [vmem:[%s351 + $0x68] sm:$0xff]
      %v3651 = vld [vmem:[%s351 + $0x70] sm:$0xff]
      %v3652 = vld [vmem:[%s351 + $0x78] sm:$0x3]
      %3654 = vset.pattern.permute.xlu0 0
      %3655 = vperm.xlu0 %3654, %v3637
      %v3656 = vpop.permute.xlu0 %3655
      %3659 = vset.pattern.permute.xlu0 0
      %3660 = vperm.xlu0 %3659, %v3638
      %v3661 = vpop.permute.xlu0 %3660
      %3664 = vset.pattern.permute.xlu0 0
      %3665 = vperm.xlu0 %3664, %v3639
      %v3666 = vpop.permute.xlu0 %3665
      %3669 = vset.pattern.permute.xlu0 0
      %3670 = vperm.xlu0 %3669, %v3640
      %v3671 = vpop.permute.xlu0 %3670
      %3674 = vset.pattern.permute.xlu0 0
      %3675 = vperm.xlu0 %3674, %v3641
      %v3676 = vpop.permute.xlu0 %3675
      %3679 = vset.pattern.permute.xlu0 0
      %3680 = vperm.xlu0 %3679, %v3642
      %v3681 = vpop.permute.xlu0 %3680
      %3684 = vset.pattern.permute.xlu0 0
      %3685 = vperm.xlu0 %3684, %v3643
      %v3686 = vpop.permute.xlu0 %3685
      %3689 = vset.pattern.permute.xlu0 0
      %3690 = vperm.xlu0 %3689, %v3644
      %v3691 = vpop.permute.xlu0 %3690
      %3694 = vset.pattern.permute.xlu0 0
      %3695 = vperm.xlu0 %3694, %v3645
      %v3696 = vpop.permute.xlu0 %3695
      %3699 = vset.pattern.permute.xlu0 0
      %3700 = vperm.xlu0 %3699, %v3646
      %v3701 = vpop.permute.xlu0 %3700
      %3704 = vset.pattern.permute.xlu0 0
      %3705 = vperm.xlu0 %3704, %v3647
      %v3706 = vpop.permute.xlu0 %3705
      %3709 = vset.pattern.permute.xlu0 0
      %3710 = vperm.xlu0 %3709, %v3648
      %v3711 = vpop.permute.xlu0 %3710
      %3714 = vset.pattern.permute.xlu0 0
      %3715 = vperm.xlu0 %3714, %v3649
      %v3716 = vpop.permute.xlu0 %3715
      %3719 = vset.pattern.permute.xlu0 0
      %3720 = vperm.xlu0 %3719, %v3650
      %v3721 = vpop.permute.xlu0 %3720
      %3724 = vset.pattern.permute.xlu0 0
      %3725 = vperm.xlu0 %3724, %v3651
      %v3726 = vpop.permute.xlu0 %3725
      %3729 = vset.pattern.permute.xlu0 0
      %3730 = vperm.xlu0 %3729, %v3652
      %v3731 = vpop.permute.xlu0 %3730
      %v3733 = vmul.f32 %v3605, %v3656
      %v3734 = vmul.f32 %v3606, %v3656
      %v3735 = vmul.f32 %v3607, %v3661
      %v3736 = vmul.f32 %v3608, %v3661
      %v3737 = vmul.f32 %v3609, %v3666
      %v3738 = vmul.f32 %v3610, %v3666
      %v3739 = vmul.f32 %v3611, %v3671
      %v3740 = vmul.f32 %v3612, %v3671
      %v3741 = vmul.f32 %v3613, %v3676
      %v3742 = vmul.f32 %v3614, %v3676
      %v3743 = vmul.f32 %v3615, %v3681
      %v3744 = vmul.f32 %v3616, %v3681
      %v3745 = vmul.f32 %v3617, %v3686
      %v3746 = vmul.f32 %v3618, %v3686
      %v3747 = vmul.f32 %v3619, %v3691
      %v3748 = vmul.f32 %v3620, %v3691
      %v3749 = vmul.f32 %v3621, %v3696
      %v3750 = vmul.f32 %v3622, %v3696
      %v3751 = vmul.f32 %v3623, %v3701
      %v3752 = vmul.f32 %v3624, %v3701
      %v3753 = vmul.f32 %v3625, %v3706
      %v3754 = vmul.f32 %v3626, %v3706
      %v3755 = vmul.f32 %v3627, %v3711
      %v3756 = vmul.f32 %v3628, %v3711
      %v3757 = vmul.f32 %v3629, %v3716
      %v3758 = vmul.f32 %v3630, %v3716
      %v3759 = vmul.f32 %v3631, %v3721
      %v3760 = vmul.f32 %v3632, %v3721
      %v3761 = vmul.f32 %v3633, %v3726
      %v3762 = vmul.f32 %v3634, %v3726
      %v3763 = vmul.f32 %v3635, %v3731
      %v3764 = vmul.f32 %v3636, %v3731
      %v3765 = vld [vmem:[%s3] sm:$0xff]
      %v3766 = vld [vmem:[%s3 + $0x8] sm:$0xff]
      %v3767 = vld [vmem:[%s3 + $0x10] sm:$0xff]
      %v3768 = vld [vmem:[%s3 + $0x18] sm:$0xff]
      %v3769 = vld [vmem:[%s3 + $0x20] sm:$0xff]
      %v3770 = vld [vmem:[%s3 + $0x28] sm:$0xff]
      %v3771 = vld [vmem:[%s3 + $0x30] sm:$0xff]
      %v3772 = vld [vmem:[%s3 + $0x38] sm:$0xff]
      %v3773 = vld [vmem:[%s3 + $0x40] sm:$0xff]
      %v3774 = vld [vmem:[%s3 + $0x48] sm:$0xff]
      %v3775 = vld [vmem:[%s3 + $0x50] sm:$0xff]
      %v3776 = vld [vmem:[%s3 + $0x58] sm:$0xff]
      %v3777 = vld [vmem:[%s3 + $0x60] sm:$0xff]
      %v3778 = vld [vmem:[%s3 + $0x68] sm:$0xff]
      %v3779 = vld [vmem:[%s3 + $0x70] sm:$0xff]
      %v3780 = vld [vmem:[%s3 + $0x78] sm:$0xff]
      %v3781 = vld [vmem:[%s3 + $0x80] sm:$0xff]
      %v3782 = vld [vmem:[%s3 + $0x88] sm:$0xff]
      %v3783 = vld [vmem:[%s3 + $0x90] sm:$0xff]
      %v3784 = vld [vmem:[%s3 + $0x98] sm:$0xff]
      %s3785 = scalar_lea.vmem %s3, 160
      %v3786 = vld [vmem:[%s3785] sm:$0xff]
      %v3787 = vld [vmem:[%s3785 + $0x8] sm:$0xff]
      %v3788 = vld [vmem:[%s3785 + $0x10] sm:$0xff]
      %v3789 = vld [vmem:[%s3785 + $0x18] sm:$0xff]
      %v3790 = vld [vmem:[%s3785 + $0x20] sm:$0xff]
      %v3791 = vld [vmem:[%s3785 + $0x28] sm:$0xff]
      %v3792 = vld [vmem:[%s3785 + $0x30] sm:$0xff]
      %v3793 = vld [vmem:[%s3785 + $0x38] sm:$0xff]
      %v3794 = vld [vmem:[%s3785 + $0x40] sm:$0xff]
      %v3795 = vld [vmem:[%s3785 + $0x48] sm:$0xff]
      %v3796 = vld [vmem:[%s3785 + $0x50] sm:$0xff]
      %v3797 = vld [vmem:[%s3785 + $0x58] sm:$0xff]
      %v3798 = vld [vmem:[%s3785 + $0x60] sm:$0xff]
      %v3799 = vld [vmem:[%s3785 + $0x68] sm:$0xff]
      %v3800 = vld [vmem:[%s3785 + $0x70] sm:$0xff]
      %v3801 = vld [vmem:[%s3785 + $0x78] sm:$0xff]
      %v3802 = vld [vmem:[%s3785 + $0x80] sm:$0xff]
      %v3803 = vld [vmem:[%s3785 + $0x88] sm:$0xff]
      %v3804 = vld [vmem:[%s3785 + $0x90] sm:$0xff]
      %v3805 = vld [vmem:[%s3785 + $0x98] sm:$0xff]
      %v3832 = vrot.slane %v3733, 1
      %v3833 = vrot.slane %v3735, 1
      %v3834 = vsel %vm537, %v3832, %v3833
      %v3835 = vrot.slane %v3734, 1
      %v3836 = vrot.slane %v3736, 1
      %v3837 = vsel %vm537, %v3835, %v3836
      %v3838 = vrot.slane %v3737, 1
      %v3839 = vsel %vm537, %v3833, %v3838
      %v3840 = vrot.slane %v3738, 1
      %v3841 = vsel %vm537, %v3836, %v3840
      %v3842 = vrot.slane %v3739, 1
      %v3843 = vsel %vm537, %v3838, %v3842
      %v3844 = vrot.slane %v3740, 1
      %v3845 = vsel %vm537, %v3840, %v3844
      %v3846 = vrot.slane %v3741, 1
      %v3847 = vsel %vm537, %v3842, %v3846
      %v3848 = vrot.slane %v3742, 1
      %v3849 = vsel %vm537, %v3844, %v3848
      %v3850 = vrot.slane %v3743, 1
      %v3851 = vsel %vm537, %v3846, %v3850
      %v3852 = vrot.slane %v3744, 1
      %v3853 = vsel %vm537, %v3848, %v3852
      %v3854 = vrot.slane %v3745, 1
      %v3855 = vsel %vm537, %v3850, %v3854
      %v3856 = vrot.slane %v3746, 1
      %v3857 = vsel %vm537, %v3852, %v3856
      %v3858 = vrot.slane %v3747, 1
      %v3859 = vsel %vm537, %v3854, %v3858
      %v3860 = vrot.slane %v3748, 1
      %v3861 = vsel %vm537, %v3856, %v3860
      %v3862 = vrot.slane %v3749, 1
      %v3863 = vsel %vm537, %v3858, %v3862
      %v3864 = vrot.slane %v3750, 1
      %v3865 = vsel %vm537, %v3860, %v3864
      %v3866 = vrot.slane %v3751, 1
      %v3867 = vsel %vm537, %v3862, %v3866
      %v3868 = vrot.slane %v3752, 1
      %v3869 = vsel %vm537, %v3864, %v3868
      %v3870 = vrot.slane %v3753, 1
      %v3871 = vsel %vm537, %v3866, %v3870
      %v3872 = vrot.slane %v3754, 1
      %v3873 = vsel %vm537, %v3868, %v3872
      %v3874 = vrot.slane %v3755, 1
      %v3875 = vsel %vm537, %v3870, %v3874
      %v3876 = vrot.slane %v3756, 1
      %v3877 = vsel %vm537, %v3872, %v3876
      %v3878 = vrot.slane %v3757, 1
      %v3879 = vsel %vm537, %v3874, %v3878
      %v3880 = vrot.slane %v3758, 1
      %v3881 = vsel %vm537, %v3876, %v3880
      %vm3894 = vcmask 261120
      %v3895 = vsel %vm3894, %v3837, 0
      %v3897 = vsel %vm3894, %v3841, 0
      %v3899 = vsel %vm3894, %v3845, 0
      %v3901 = vsel %vm3894, %v3849, 0
      %v3903 = vsel %vm3894, %v3853, 0
      %v3905 = vsel %vm3894, %v3857, 0
      %v3907 = vsel %vm3894, %v3861, 0
      %v3909 = vsel %vm3894, %v3865, 0
      %v3911 = vsel %vm3894, %v3869, 0
      %v3913 = vsel %vm3894, %v3873, 0
      %v3915 = vsel %vm3894, %v3877, 0
      %v3917 = vsel %vm3894, %v3881, 0
      %3919 = vmatprep.subr.mxu0 0.0
      %3920 = vmatpush1.msra.mxu0 %v3786
      %3921 = vmatprep.subr.mxu0 0.0
      %3922 = vmatpush1.msra.mxu0 %v3787
      %3923 = vmatprep.subr.mxu0 0.0
      %3924 = vmatpush1.msra.mxu0 %v3788
      %3925 = vmatprep.subr.mxu0 0.0
      %3926 = vmatpush1.msra.mxu0 %v3789
      %3927 = vmatprep.subr.mxu0 0.0
      %3928 = vmatpush1.msra.mxu0 %v3790
      %3929 = vmatprep.subr.mxu0 0.0
      %3930 = vmatpush1.msra.mxu0 %v3791
      %3931 = vmatprep.subr.mxu0 0.0
      %3932 = vmatpush1.msra.mxu0 %v3792
      %3933 = vmatprep.subr.mxu0 0.0
      %3934 = vmatpush1.msra.mxu0 %v3793
      %3935 = vmatprep.subr.mxu0 0.0
      %3936 = vmatpush1.msra.mxu0 %v3794
      %3937 = vmatprep.subr.mxu0 0.0
      %3938 = vmatpush1.msra.mxu0 %v3795
      %3939 = vmatprep.subr.mxu0 0.0
      %3940 = vmatpush1.msra.mxu0 %v3796
      %3941 = vmatprep.subr.mxu0 0.0
      %3942 = vmatpush1.msra.mxu0 %v3797
      %3943 = vmatprep.subr.mxu0 0.0
      %3944 = vmatpush1.msra.mxu0 %v3798
      %3945 = vmatprep.subr.mxu0 0.0
      %3946 = vmatpush1.msra.mxu0 %v3799
      %3947 = vmatprep.subr.mxu0 0.0
      %3948 = vmatpush1.msra.mxu0 %v3800
      %3949 = vmatprep.subr.mxu0 0.0
      %3950 = vmatpush1.msra.mxu0 %v3801
      %3951 = vmatprep.subr.mxu0 0.0
      %3952 = vmatpush1.msra.mxu0 %v3802
      %3953 = vmatprep.subr.mxu0 0.0
      %3954 = vmatpush1.msra.mxu0 %v3803
      %3955 = vmatprep.subr.mxu0 0.0
      %3956 = vmatpush1.msra.mxu0 %v3804
      %3957 = vmatprep.subr.mxu0 0.0
      %3958 = vmatpush1.msra.mxu0 %v3805
      %3959 = vmatprep.subr.mxu0 0.0
      %3960 = vmatpush1.msra.mxu0 0.0
      %3961 = vmatprep.subr.mxu0 0.0
      %3962 = vmatpush1.msra.mxu0 0.0
      %3963 = vmatprep.subr.mxu0 0.0
      %3964 = vmatpush1.msra.mxu0 0.0
      %3965 = vmatprep.subr.mxu0 0.0
      %3966 = vmatpush1.msra.mxu0 0.0
      %3967 = vmatprep.subr.mxu0 0.0
      %3968 = vmatpush1.msra.mxu0 0.0
      %3969 = vmatprep.subr.mxu0 0.0
      %3970 = vmatpush1.msra.mxu0 0.0
      %3971 = vmatprep.subr.mxu0 0.0
      %3972 = vmatpush1.msra.mxu0 0.0
      %3973 = vmatprep.subr.mxu0 0.0
      %3974 = vmatpush1.msra.mxu0 0.0
      %3975 = vmatprep.subr.mxu0 0.0
      %3976 = vmatpush1.msra.mxu0 0.0
      %3977 = vmatprep.subr.mxu0 0.0
      %3978 = vmatpush1.msra.mxu0 0.0
      %3979 = vmatprep.subr.mxu0 0.0
      %3980 = vmatpush1.msra.mxu0 0.0
      %3981 = vmatprep.subr.mxu0 0.0
      %3982 = vmatpush1.msra.mxu0 0.0
      %3983 = vmatprep.mubr.f32.mxu0 %v3895
      %3984 = vmatmul.mubr.f32.gmra.mrb[0].mxu0 %v3834
      %v3985 = vpop.f32.mrb[0].mxu0
      %v3986 = vadd.f32 0.0, %v3985
      %v3987 = vpop.f32.mrb[0].mxu0
      %3988 = vmatprep.mubr.f32.mxu0 %v3897
      %3989 = vmatmul.mubr.f32.gmra.mrb[0].mxu0 %v3839
      %v3990 = vpop.f32.mrb[0].mxu0
      %v3991 = vadd.f32 0.0, %v3990
      %v3992 = vpop.f32.mrb[0].mxu0
      %3993 = vmatprep.mubr.f32.mxu0 %v3899
      %3994 = vmatmul.mubr.f32.gmra.mrb[0].mxu0 %v3843
      %v3995 = vpop.f32.mrb[0].mxu0
      %v3996 = vadd.f32 0.0, %v3995
      %v3997 = vpop.f32.mrb[0].mxu0
      %3998 = vmatprep.mubr.f32.mxu0 %v3901
      %3999 = vmatmul.mubr.f32.gmra.mrb[0].mxu0 %v3847
      %v4000 = vpop.f32.mrb[0].mxu0
      %v4001 = vadd.f32 0.0, %v4000
      %v4002 = vpop.f32.mrb[0].mxu0
      %4003 = vmatprep.mubr.f32.mxu0 %v3903
      %4004 = vmatmul.mubr.f32.gmra.mrb[0].mxu0 %v3851
      %v4005 = vpop.f32.mrb[0].mxu0
      %v4006 = vadd.f32 0.0, %v4005
      %v4007 = vpop.f32.mrb[0].mxu0
      %4008 = vmatprep.mubr.f32.mxu0 %v3905
      %4009 = vmatmul.mubr.f32.gmra.mrb[0].mxu0 %v3855
      %v4010 = vpop.f32.mrb[0].mxu0
      %v4011 = vadd.f32 0.0, %v4010
      %v4012 = vpop.f32.mrb[0].mxu0
      %4013 = vmatprep.mubr.f32.mxu0 %v3907
      %4014 = vmatmul.mubr.f32.gmra.mrb[0].mxu0 %v3859
      %v4015 = vpop.f32.mrb[0].mxu0
      %v4016 = vadd.f32 0.0, %v4015
      %v4017 = vpop.f32.mrb[0].mxu0
      %4018 = vmatprep.mubr.f32.mxu0 %v3909
      %4019 = vmatmul.mubr.f32.gmra.mrb[0].mxu0 %v3863
      %v4020 = vpop.f32.mrb[0].mxu0
      %v4021 = vadd.f32 0.0, %v4020
      %v4022 = vpop.f32.mrb[0].mxu0
      %4023 = vmatprep.mubr.f32.mxu0 %v3911
      %4024 = vmatmul.mubr.f32.gmra.mrb[0].mxu0 %v3867
      %v4025 = vpop.f32.mrb[0].mxu0
      %v4026 = vadd.f32 0.0, %v4025
      %v4027 = vpop.f32.mrb[0].mxu0
      %4028 = vmatprep.mubr.f32.mxu0 %v3913
      %4029 = vmatmul.mubr.f32.gmra.mrb[0].mxu0 %v3871
      %v4030 = vpop.f32.mrb[0].mxu0
      %v4031 = vadd.f32 0.0, %v4030
      %v4032 = vpop.f32.mrb[0].mxu0
      %4033 = vmatprep.mubr.f32.mxu0 %v3915
      %4034 = vmatmul.mubr.f32.gmra.mrb[0].mxu0 %v3875
      %v4035 = vpop.f32.mrb[0].mxu0
      %v4036 = vadd.f32 0.0, %v4035
      %v4037 = vpop.f32.mrb[0].mxu0
      %4038 = vmatprep.mubr.f32.mxu0 %v3917
      %4039 = vmatmul.mubr.f32.gmra.mrb[0].mxu0 %v3879
      %v4040 = vpop.f32.mrb[0].mxu0
      %v4041 = vadd.f32 0.0, %v4040
      %v4042 = vpop.f32.mrb[0].mxu0
      %4043 = vdwg.mxu0
      %v4044 = vsel %vm3894, %v3734, 0
      %v4046 = vsel %vm3894, %v3736, 0
      %v4048 = vsel %vm3894, %v3738, 0
      %v4050 = vsel %vm3894, %v3740, 0
      %v4052 = vsel %vm3894, %v3742, 0
      %v4054 = vsel %vm3894, %v3744, 0
      %v4056 = vsel %vm3894, %v3746, 0
      %v4058 = vsel %vm3894, %v3748, 0
      %v4060 = vsel %vm3894, %v3750, 0
      %v4062 = vsel %vm3894, %v3752, 0
      %v4064 = vsel %vm3894, %v3754, 0
      %v4066 = vsel %vm3894, %v3756, 0
      %4068 = vmatprep.subr.mxu0 0.0
      %4069 = vmatpush1.msra.mxu0 %v3765
      %4070 = vmatprep.subr.mxu0 0.0
      %4071 = vmatpush1.msra.mxu0 %v3766
      %4072 = vmatprep.subr.mxu0 0.0
      %4073 = vmatpush1.msra.mxu0 %v3767
      %4074 = vmatprep.subr.mxu0 0.0
      %4075 = vmatpush1.msra.mxu0 %v3768
      %4076 = vmatprep.subr.mxu0 0.0
      %4077 = vmatpush1.msra.mxu0 %v3769
      %4078 = vmatprep.subr.mxu0 0.0
      %4079 = vmatpush1.msra.mxu0 %v3770
      %4080 = vmatprep.subr.mxu0 0.0
      %4081 = vmatpush1.msra.mxu0 %v3771
      %4082 = vmatprep.subr.mxu0 0.0
      %4083 = vmatpush1.msra.mxu0 %v3772
      %4084 = vmatprep.subr.mxu0 0.0
      %4085 = vmatpush1.msra.mxu0 %v3773
      %4086 = vmatprep.subr.mxu0 0.0
      %4087 = vmatpush1.msra.mxu0 %v3774
      %4088 = vmatprep.subr.mxu0 0.0
      %4089 = vmatpush1.msra.mxu0 %v3775
      %4090 = vmatprep.subr.mxu0 0.0
      %4091 = vmatpush1.msra.mxu0 %v3776
      %4092 = vmatprep.subr.mxu0 0.0
      %4093 = vmatpush1.msra.mxu0 %v3777
      %4094 = vmatprep.subr.mxu0 0.0
      %4095 = vmatpush1.msra.mxu0 %v3778
      %4096 = vmatprep.subr.mxu0 0.0
      %4097 = vmatpush1.msra.mxu0 %v3779
      %4098 = vmatprep.subr.mxu0 0.0
      %4099 = vmatpush1.msra.mxu0 %v3780
      %4100 = vmatprep.subr.mxu0 0.0
      %4101 = vmatpush1.msra.mxu0 %v3781
      %4102 = vmatprep.subr.mxu0 0.0
      %4103 = vmatpush1.msra.mxu0 %v3782
      %4104 = vmatprep.subr.mxu0 0.0
      %4105 = vmatpush1.msra.mxu0 %v3783
      %4106 = vmatprep.subr.mxu0 0.0
      %4107 = vmatpush1.msra.mxu0 %v3784
      %4108 = vmatprep.subr.mxu0 0.0
      %4109 = vmatpush1.msra.mxu0 0.0
      %4110 = vmatprep.subr.mxu0 0.0
      %4111 = vmatpush1.msra.mxu0 0.0
      %4112 = vmatprep.subr.mxu0 0.0
      %4113 = vmatpush1.msra.mxu0 0.0
      %4114 = vmatprep.subr.mxu0 0.0
      %4115 = vmatpush1.msra.mxu0 0.0
      %4116 = vmatprep.subr.mxu0 0.0
      %4117 = vmatpush1.msra.mxu0 0.0
      %4118 = vmatprep.subr.mxu0 0.0
      %4119 = vmatpush1.msra.mxu0 0.0
      %4120 = vmatprep.subr.mxu0 0.0
      %4121 = vmatpush1.msra.mxu0 0.0
      %4122 = vmatprep.subr.mxu0 0.0
      %4123 = vmatpush1.msra.mxu0 0.0
      %4124 = vmatprep.subr.mxu0 0.0
      %4125 = vmatpush1.msra.mxu0 0.0
      %4126 = vmatprep.subr.mxu0 0.0
      %4127 = vmatpush1.msra.mxu0 0.0
      %4128 = vmatprep.subr.mxu0 0.0
      %4129 = vmatpush1.msra.mxu0 0.0
      %4130 = vmatprep.subr.mxu0 0.0
      %4131 = vmatpush1.msra.mxu0 0.0
      %4132 = vmatprep.mubr.f32.mxu0 %v4044
      %4133 = vmatmul.mubr.f32.gmra.mrb[0].mxu0 %v3733
      %v4134 = vpop.f32.mrb[0].mxu0
      %v4135 = vadd.f32 %v3986, %v4134
      %v4136 = vpop.f32.mrb[0].mxu0
      %4137 = vmatprep.mubr.f32.mxu0 %v4046
      %4138 = vmatmul.mubr.f32.gmra.mrb[0].mxu0 %v3735
      %v4139 = vpop.f32.mrb[0].mxu0
      %v4140 = vadd.f32 %v3991, %v4139
      %v4141 = vpop.f32.mrb[0].mxu0
      %4142 = vmatprep.mubr.f32.mxu0 %v4048
      %4143 = vmatmul.mubr.f32.gmra.mrb[0].mxu0 %v3737
      %v4144 = vpop.f32.mrb[0].mxu0
      %v4145 = vadd.f32 %v3996, %v4144
      %v4146 = vpop.f32.mrb[0].mxu0
      %4147 = vmatprep.mubr.f32.mxu0 %v4050
      %4148 = vmatmul.mubr.f32.gmra.mrb[0].mxu0 %v3739
      %v4149 = vpop.f32.mrb[0].mxu0
      %v4150 = vadd.f32 %v4001, %v4149
      %v4151 = vpop.f32.mrb[0].mxu0
      %4152 = vmatprep.mubr.f32.mxu0 %v4052
      %4153 = vmatmul.mubr.f32.gmra.mrb[0].mxu0 %v3741
      %v4154 = vpop.f32.mrb[0].mxu0
      %v4155 = vadd.f32 %v4006, %v4154
      %v4156 = vpop.f32.mrb[0].mxu0
      %4157 = vmatprep.mubr.f32.mxu0 %v4054
      %4158 = vmatmul.mubr.f32.gmra.mrb[0].mxu0 %v3743
      %v4159 = vpop.f32.mrb[0].mxu0
      %v4160 = vadd.f32 %v4011, %v4159
      %v4161 = vpop.f32.mrb[0].mxu0
      %4162 = vmatprep.mubr.f32.mxu0 %v4056
      %4163 = vmatmul.mubr.f32.gmra.mrb[0].mxu0 %v3745
      %v4164 = vpop.f32.mrb[0].mxu0
      %v4165 = vadd.f32 %v4016, %v4164
      %v4166 = vpop.f32.mrb[0].mxu0
      %4167 = vmatprep.mubr.f32.mxu0 %v4058
      %4168 = vmatmul.mubr.f32.gmra.mrb[0].mxu0 %v3747
      %v4169 = vpop.f32.mrb[0].mxu0
      %v4170 = vadd.f32 %v4021, %v4169
      %v4171 = vpop.f32.mrb[0].mxu0
      %4172 = vmatprep.mubr.f32.mxu0 %v4060
      %4173 = vmatmul.mubr.f32.gmra.mrb[0].mxu0 %v3749
      %v4174 = vpop.f32.mrb[0].mxu0
      %v4175 = vadd.f32 %v4026, %v4174
      %v4176 = vpop.f32.mrb[0].mxu0
      %4177 = vmatprep.mubr.f32.mxu0 %v4062
      %4178 = vmatmul.mubr.f32.gmra.mrb[0].mxu0 %v3751
      %v4179 = vpop.f32.mrb[0].mxu0
      %v4180 = vadd.f32 %v4031, %v4179
      %v4181 = vpop.f32.mrb[0].mxu0
      %4182 = vmatprep.mubr.f32.mxu0 %v4064
      %4183 = vmatmul.mubr.f32.gmra.mrb[0].mxu0 %v3753
      %v4184 = vpop.f32.mrb[0].mxu0
      %v4185 = vadd.f32 %v4036, %v4184
      %v4186 = vpop.f32.mrb[0].mxu0
      %4187 = vmatprep.mubr.f32.mxu0 %v4066
      %4188 = vmatmul.mubr.f32.gmra.mrb[0].mxu0 %v3755
      %v4189 = vpop.f32.mrb[0].mxu0
      %v4190 = vadd.f32 %v4041, %v4189
      %v4191 = vpop.f32.mrb[0].mxu0
      %4192 = vdwg.mxu0
      %s4193 = scalar_lea.vmem %s3, 320
      %v4194 = vld [vmem:[%s4193] sm:$0xff]
      %v4195 = vld [vmem:[%s4193 + $0x8] sm:$0xff]
      %v4196 = vld [vmem:[%s4193 + $0x10] sm:$0xff]
      %v4197 = vld [vmem:[%s4193 + $0x18] sm:$0xff]
      %v4198 = vld [vmem:[%s4193 + $0x20] sm:$0xff]
      %v4199 = vld [vmem:[%s4193 + $0x28] sm:$0xff]
      %v4200 = vld [vmem:[%s4193 + $0x30] sm:$0xff]
      %v4201 = vld [vmem:[%s4193 + $0x38] sm:$0xff]
      %v4202 = vld [vmem:[%s4193 + $0x40] sm:$0xff]
      %v4203 = vld [vmem:[%s4193 + $0x48] sm:$0xff]
      %v4204 = vld [vmem:[%s4193 + $0x50] sm:$0xff]
      %v4205 = vld [vmem:[%s4193 + $0x58] sm:$0xff]
      %v4206 = vld [vmem:[%s4193 + $0x60] sm:$0xff]
      %v4207 = vld [vmem:[%s4193 + $0x68] sm:$0xff]
      %v4208 = vld [vmem:[%s4193 + $0x70] sm:$0xff]
      %v4209 = vld [vmem:[%s4193 + $0x78] sm:$0xff]
      %v4210 = vld [vmem:[%s4193 + $0x80] sm:$0xff]
      %v4211 = vld [vmem:[%s4193 + $0x88] sm:$0xff]
      %v4212 = vld [vmem:[%s4193 + $0x90] sm:$0xff]
      %v4213 = vld [vmem:[%s4193 + $0x98] sm:$0xff]
      %v4214 = vrot.slane %v3733, 2
      %v4215 = vrot.slane %v3735, 2
      %v4216 = vsel %vm1062, %v4214, %v4215
      %v4217 = vrot.slane %v3734, 2
      %v4218 = vrot.slane %v3736, 2
      %v4219 = vsel %vm1062, %v4217, %v4218
      %v4220 = vrot.slane %v3737, 2
      %v4221 = vsel %vm1062, %v4215, %v4220
      %v4222 = vrot.slane %v3738, 2
      %v4223 = vsel %vm1062, %v4218, %v4222
      %v4224 = vrot.slane %v3739, 2
      %v4225 = vsel %vm1062, %v4220, %v4224
      %v4226 = vrot.slane %v3740, 2
      %v4227 = vsel %vm1062, %v4222, %v4226
      %v4228 = vrot.slane %v3741, 2
      %v4229 = vsel %vm1062, %v4224, %v4228
      %v4230 = vrot.slane %v3742, 2
      %v4231 = vsel %vm1062, %v4226, %v4230
      %v4232 = vrot.slane %v3743, 2
      %v4233 = vsel %vm1062, %v4228, %v4232
      %v4234 = vrot.slane %v3744, 2
      %v4235 = vsel %vm1062, %v4230, %v4234
      %v4236 = vrot.slane %v3745, 2
      %v4237 = vsel %vm1062, %v4232, %v4236
      %v4238 = vrot.slane %v3746, 2
      %v4239 = vsel %vm1062, %v4234, %v4238
      %v4240 = vrot.slane %v3747, 2
      %v4241 = vsel %vm1062, %v4236, %v4240
      %v4242 = vrot.slane %v3748, 2
      %v4243 = vsel %vm1062, %v4238, %v4242
      %v4244 = vrot.slane %v3749, 2
      %v4245 = vsel %vm1062, %v4240, %v4244
      %v4246 = vrot.slane %v3750, 2
      %v4247 = vsel %vm1062, %v4242, %v4246
      %v4248 = vrot.slane %v3751, 2
      %v4249 = vsel %vm1062, %v4244, %v4248
      %v4250 = vrot.slane %v3752, 2
      %v4251 = vsel %vm1062, %v4246, %v4250
      %v4252 = vrot.slane %v3753, 2
      %v4253 = vsel %vm1062, %v4248, %v4252
      %v4254 = vrot.slane %v3754, 2
      %v4255 = vsel %vm1062, %v4250, %v4254
      %v4256 = vrot.slane %v3755, 2
      %v4257 = vsel %vm1062, %v4252, %v4256
      %v4258 = vrot.slane %v3756, 2
      %v4259 = vsel %vm1062, %v4254, %v4258
      %v4260 = vrot.slane %v3757, 2
      %v4261 = vsel %vm1062, %v4256, %v4260
      %v4262 = vrot.slane %v3758, 2
      %v4263 = vsel %vm1062, %v4258, %v4262
      %v4276 = vsel %vm3894, %v4219, 0
      %v4278 = vsel %vm3894, %v4223, 0
      %v4280 = vsel %vm3894, %v4227, 0
      %v4282 = vsel %vm3894, %v4231, 0
      %v4284 = vsel %vm3894, %v4235, 0
      %v4286 = vsel %vm3894, %v4239, 0
      %v4288 = vsel %vm3894, %v4243, 0
      %v4290 = vsel %vm3894, %v4247, 0
      %v4292 = vsel %vm3894, %v4251, 0
      %v4294 = vsel %vm3894, %v4255, 0
      %v4296 = vsel %vm3894, %v4259, 0
      %v4298 = vsel %vm3894, %v4263, 0
      %4300 = vmatprep.subr.mxu0 0.0
      %4301 = vmatpush1.msra.mxu0 %v4194
      %4302 = vmatprep.subr.mxu0 0.0
      %4303 = vmatpush1.msra.mxu0 %v4195
      %4304 = vmatprep.subr.mxu0 0.0
      %4305 = vmatpush1.msra.mxu0 %v4196
      %4306 = vmatprep.subr.mxu0 0.0
      %4307 = vmatpush1.msra.mxu0 %v4197
      %4308 = vmatprep.subr.mxu0 0.0
      %4309 = vmatpush1.msra.mxu0 %v4198
      %4310 = vmatprep.subr.mxu0 0.0
      %4311 = vmatpush1.msra.mxu0 %v4199
      %4312 = vmatprep.subr.mxu0 0.0
      %4313 = vmatpush1.msra.mxu0 %v4200
      %4314 = vmatprep.subr.mxu0 0.0
      %4315 = vmatpush1.msra.mxu0 %v4201
      %4316 = vmatprep.subr.mxu0 0.0
      %4317 = vmatpush1.msra.mxu0 %v4202
      %4318 = vmatprep.subr.mxu0 0.0
      %4319 = vmatpush1.msra.mxu0 %v4203
      %4320 = vmatprep.subr.mxu0 0.0
      %4321 = vmatpush1.msra.mxu0 %v4204
      %4322 = vmatprep.subr.mxu0 0.0
      %4323 = vmatpush1.msra.mxu0 %v4205
      %4324 = vmatprep.subr.mxu0 0.0
      %4325 = vmatpush1.msra.mxu0 %v4206
      %4326 = vmatprep.subr.mxu0 0.0
      %4327 = vmatpush1.msra.mxu0 %v4207
      %4328 = vmatprep.subr.mxu0 0.0
      %4329 = vmatpush1.msra.mxu0 %v4208
      %4330 = vmatprep.subr.mxu0 0.0
      %4331 = vmatpush1.msra.mxu0 %v4209
      %4332 = vmatprep.subr.mxu0 0.0
      %4333 = vmatpush1.msra.mxu0 %v4210
      %4334 = vmatprep.subr.mxu0 0.0
      %4335 = vmatpush1.msra.mxu0 %v4211
      %4336 = vmatprep.subr.mxu0 0.0
      %4337 = vmatpush1.msra.mxu0 %v4212
      %4338 = vmatprep.subr.mxu0 0.0
      %4339 = vmatpush1.msra.mxu0 %v4213
      %4340 = vmatprep.subr.mxu0 0.0
      %4341 = vmatpush1.msra.mxu0 0.0
      %4342 = vmatprep.subr.mxu0 0.0
      %4343 = vmatpush1.msra.mxu0 0.0
      %4344 = vmatprep.subr.mxu0 0.0
      %4345 = vmatpush1.msra.mxu0 0.0
      %4346 = vmatprep.subr.mxu0 0.0
      %4347 = vmatpush1.msra.mxu0 0.0
      %4348 = vmatprep.subr.mxu0 0.0
      %4349 = vmatpush1.msra.mxu0 0.0
      %4350 = vmatprep.subr.mxu0 0.0
      %4351 = vmatpush1.msra.mxu0 0.0
      %4352 = vmatprep.subr.mxu0 0.0
      %4353 = vmatpush1.msra.mxu0 0.0
      %4354 = vmatprep.subr.mxu0 0.0
      %4355 = vmatpush1.msra.mxu0 0.0
      %4356 = vmatprep.subr.mxu0 0.0
      %4357 = vmatpush1.msra.mxu0 0.0
      %4358 = vmatprep.subr.mxu0 0.0
      %4359 = vmatpush1.msra.mxu0 0.0
      %4360 = vmatprep.subr.mxu0 0.0
      %4361 = vmatpush1.msra.mxu0 0.0
      %4362 = vmatprep.subr.mxu0 0.0
      %4363 = vmatpush1.msra.mxu0 0.0
      %4364 = vmatprep.mubr.f32.mxu0 %v4276
      %4365 = vmatmul.mubr.f32.gmra.mrb[0].mxu0 %v4216
      %v4366 = vpop.f32.mrb[0].mxu0
      %v4367 = vadd.f32 0.0, %v4366
      %v4368 = vpop.f32.mrb[0].mxu0
      %4369 = vmatprep.mubr.f32.mxu0 %v4278
      %4370 = vmatmul.mubr.f32.gmra.mrb[0].mxu0 %v4221
      %v4371 = vpop.f32.mrb[0].mxu0
      %v4372 = vadd.f32 0.0, %v4371
      %v4373 = vpop.f32.mrb[0].mxu0
      %4374 = vmatprep.mubr.f32.mxu0 %v4280
      %4375 = vmatmul.mubr.f32.gmra.mrb[0].mxu0 %v4225
      %v4376 = vpop.f32.mrb[0].mxu0
      %v4377 = vadd.f32 0.0, %v4376
      %v4378 = vpop.f32.mrb[0].mxu0
      %4379 = vmatprep.mubr.f32.mxu0 %v4282
      %4380 = vmatmul.mubr.f32.gmra.mrb[0].mxu0 %v4229
      %v4381 = vpop.f32.mrb[0].mxu0
      %v4382 = vadd.f32 0.0, %v4381
      %v4383 = vpop.f32.mrb[0].mxu0
      %4384 = vmatprep.mubr.f32.mxu0 %v4284
      %4385 = vmatmul.mubr.f32.gmra.mrb[0].mxu0 %v4233
      %v4386 = vpop.f32.mrb[0].mxu0
      %v4387 = vadd.f32 0.0, %v4386
      %v4388 = vpop.f32.mrb[0].mxu0
      %4389 = vmatprep.mubr.f32.mxu0 %v4286
      %4390 = vmatmul.mubr.f32.gmra.mrb[0].mxu0 %v4237
      %v4391 = vpop.f32.mrb[0].mxu0
      %v4392 = vadd.f32 0.0, %v4391
      %v4393 = vpop.f32.mrb[0].mxu0
      %4394 = vmatprep.mubr.f32.mxu0 %v4288
      %4395 = vmatmul.mubr.f32.gmra.mrb[0].mxu0 %v4241
      %v4396 = vpop.f32.mrb[0].mxu0
      %v4397 = vadd.f32 0.0, %v4396
      %v4398 = vpop.f32.mrb[0].mxu0
      %4399 = vmatprep.mubr.f32.mxu0 %v4290
      %4400 = vmatmul.mubr.f32.gmra.mrb[0].mxu0 %v4245
      %v4401 = vpop.f32.mrb[0].mxu0
      %v4402 = vadd.f32 0.0, %v4401
      %v4403 = vpop.f32.mrb[0].mxu0
      %4404 = vmatprep.mubr.f32.mxu0 %v4292
      %4405 = vmatmul.mubr.f32.gmra.mrb[0].mxu0 %v4249
      %v4406 = vpop.f32.mrb[0].mxu0
      %v4407 = vadd.f32 0.0, %v4406
      %v4408 = vpop.f32.mrb[0].mxu0
      %4409 = vmatprep.mubr.f32.mxu0 %v4294
      %4410 = vmatmul.mubr.f32.gmra.mrb[0].mxu0 %v4253
      %v4411 = vpop.f32.mrb[0].mxu0
      %v4412 = vadd.f32 0.0, %v4411
      %v4413 = vpop.f32.mrb[0].mxu0
      %4414 = vmatprep.mubr.f32.mxu0 %v4296
      %4415 = vmatmul.mubr.f32.gmra.mrb[0].mxu0 %v4257
      %v4416 = vpop.f32.mrb[0].mxu0
      %v4417 = vadd.f32 0.0, %v4416
      %v4418 = vpop.f32.mrb[0].mxu0
      %4419 = vmatprep.mubr.f32.mxu0 %v4298
      %4420 = vmatmul.mubr.f32.gmra.mrb[0].mxu0 %v4261
      %v4421 = vpop.f32.mrb[0].mxu0
      %v4422 = vadd.f32 0.0, %v4421
      %v4423 = vpop.f32.mrb[0].mxu0
      %4424 = vdwg.mxu0
      %v4425 = vadd.f32 %v4135, %v4367
      %v4426 = vadd.f32 %v4140, %v4372
      %v4427 = vadd.f32 %v4145, %v4377
      %v4428 = vadd.f32 %v4150, %v4382
      %v4429 = vadd.f32 %v4155, %v4387
      %v4430 = vadd.f32 %v4160, %v4392
      %v4431 = vadd.f32 %v4165, %v4397
      %v4432 = vadd.f32 %v4170, %v4402
      %v4433 = vadd.f32 %v4175, %v4407
      %v4434 = vadd.f32 %v4180, %v4412
      %v4435 = vadd.f32 %v4185, %v4417
      %v4436 = vadd.f32 %v4190, %v4422
      %s4437 = scalar_lea.vmem %s3, 480
      %v4438 = vld [vmem:[%s4437] sm:$0xff]
      %v4439 = vld [vmem:[%s4437 + $0x8] sm:$0xff]
      %v4440 = vld [vmem:[%s4437 + $0x10] sm:$0xff]
      %v4441 = vld [vmem:[%s4437 + $0x18] sm:$0xff]
      %v4442 = vld [vmem:[%s4437 + $0x20] sm:$0xff]
      %v4443 = vld [vmem:[%s4437 + $0x28] sm:$0xff]
      %v4444 = vld [vmem:[%s4437 + $0x30] sm:$0xff]
      %v4445 = vld [vmem:[%s4437 + $0x38] sm:$0xff]
      %v4446 = vld [vmem:[%s4437 + $0x40] sm:$0xff]
      %v4447 = vld [vmem:[%s4437 + $0x48] sm:$0xff]
      %v4448 = vld [vmem:[%s4437 + $0x50] sm:$0xff]
      %v4449 = vld [vmem:[%s4437 + $0x58] sm:$0xff]
      %v4450 = vld [vmem:[%s4437 + $0x60] sm:$0xff]
      %v4451 = vld [vmem:[%s4437 + $0x68] sm:$0xff]
      %v4452 = vld [vmem:[%s4437 + $0x70] sm:$0xff]
      %v4453 = vld [vmem:[%s4437 + $0x78] sm:$0xff]
      %v4454 = vld [vmem:[%s4437 + $0x80] sm:$0xff]
      %v4455 = vld [vmem:[%s4437 + $0x88] sm:$0xff]
      %v4456 = vld [vmem:[%s4437 + $0x90] sm:$0xff]
      %v4457 = vld [vmem:[%s4437 + $0x98] sm:$0xff]
      %v4460 = vrot.slane %v3735, 4
      %v4461 = vrot.slane %v3737, 4
      %v4462 = vsel %vm1479, %v4460, %v4461
      %v4463 = vrot.slane %v3736, 4
      %v4464 = vrot.slane %v3738, 4
      %v4465 = vsel %vm1479, %v4463, %v4464
      %v4466 = vrot.slane %v3739, 4
      %v4467 = vsel %vm1479, %v4461, %v4466
      %v4468 = vrot.slane %v3740, 4
      %v4469 = vsel %vm1479, %v4464, %v4468
      %v4470 = vrot.slane %v3741, 4
      %v4471 = vsel %vm1479, %v4466, %v4470
      %v4472 = vrot.slane %v3742, 4
      %v4473 = vsel %vm1479, %v4468, %v4472
      %v4474 = vrot.slane %v3743, 4
      %v4475 = vsel %vm1479, %v4470, %v4474
      %v4476 = vrot.slane %v3744, 4
      %v4477 = vsel %vm1479, %v4472, %v4476
      %v4478 = vrot.slane %v3745, 4
      %v4479 = vsel %vm1479, %v4474, %v4478
      %v4480 = vrot.slane %v3746, 4
      %v4481 = vsel %vm1479, %v4476, %v4480
      %v4482 = vrot.slane %v3747, 4
      %v4483 = vsel %vm1479, %v4478, %v4482
      %v4484 = vrot.slane %v3748, 4
      %v4485 = vsel %vm1479, %v4480, %v4484
      %v4486 = vrot.slane %v3749, 4
      %v4487 = vsel %vm1479, %v4482, %v4486
      %v4488 = vrot.slane %v3750, 4
      %v4489 = vsel %vm1479, %v4484, %v4488
      %v4490 = vrot.slane %v3751, 4
      %v4491 = vsel %vm1479, %v4486, %v4490
      %v4492 = vrot.slane %v3752, 4
      %v4493 = vsel %vm1479, %v4488, %v4492
      %v4494 = vrot.slane %v3753, 4
      %v4495 = vsel %vm1479, %v4490, %v4494
      %v4496 = vrot.slane %v3754, 4
      %v4497 = vsel %vm1479, %v4492, %v4496
      %v4498 = vrot.slane %v3755, 4
      %v4499 = vsel %vm1479, %v4494, %v4498
      %v4500 = vrot.slane %v3756, 4
      %v4501 = vsel %vm1479, %v4496, %v4500
      %v4502 = vrot.slane %v3757, 4
      %v4503 = vsel %vm1479, %v4498, %v4502
      %v4504 = vrot.slane %v3758, 4
      %v4505 = vsel %vm1479, %v4500, %v4504
      %v4506 = vrot.slane %v3759, 4
      %v4507 = vsel %vm1479, %v4502, %v4506
      %v4508 = vrot.slane %v3760, 4
      %v4509 = vsel %vm1479, %v4504, %v4508
      %v4522 = vsel %vm3894, %v4465, 0
      %v4524 = vsel %vm3894, %v4469, 0
      %v4526 = vsel %vm3894, %v4473, 0
      %v4528 = vsel %vm3894, %v4477, 0
      %v4530 = vsel %vm3894, %v4481, 0
      %v4532 = vsel %vm3894, %v4485, 0
      %v4534 = vsel %vm3894, %v4489, 0
      %v4536 = vsel %vm3894, %v4493, 0
      %v4538 = vsel %vm3894, %v4497, 0
      %v4540 = vsel %vm3894, %v4501, 0
      %v4542 = vsel %vm3894, %v4505, 0
      %v4544 = vsel %vm3894, %v4509, 0
      %4546 = vmatprep.subr.mxu0 0.0
      %4547 = vmatpush1.msra.mxu0 %v4438
      %4548 = vmatprep.subr.mxu0 0.0
      %4549 = vmatpush1.msra.mxu0 %v4439
      %4550 = vmatprep.subr.mxu0 0.0
      %4551 = vmatpush1.msra.mxu0 %v4440
      %4552 = vmatprep.subr.mxu0 0.0
      %4553 = vmatpush1.msra.mxu0 %v4441
      %4554 = vmatprep.subr.mxu0 0.0
      %4555 = vmatpush1.msra.mxu0 %v4442
      %4556 = vmatprep.subr.mxu0 0.0
      %4557 = vmatpush1.msra.mxu0 %v4443
      %4558 = vmatprep.subr.mxu0 0.0
      %4559 = vmatpush1.msra.mxu0 %v4444
      %4560 = vmatprep.subr.mxu0 0.0
      %4561 = vmatpush1.msra.mxu0 %v4445
      %4562 = vmatprep.subr.mxu0 0.0
      %4563 = vmatpush1.msra.mxu0 %v4446
      %4564 = vmatprep.subr.mxu0 0.0
      %4565 = vmatpush1.msra.mxu0 %v4447
      %4566 = vmatprep.subr.mxu0 0.0
      %4567 = vmatpush1.msra.mxu0 %v4448
      %4568 = vmatprep.subr.mxu0 0.0
      %4569 = vmatpush1.msra.mxu0 %v4449
      %4570 = vmatprep.subr.mxu0 0.0
      %4571 = vmatpush1.msra.mxu0 %v4450
      %4572 = vmatprep.subr.mxu0 0.0
      %4573 = vmatpush1.msra.mxu0 %v4451
      %4574 = vmatprep.subr.mxu0 0.0
      %4575 = vmatpush1.msra.mxu0 %v4452
      %4576 = vmatprep.subr.mxu0 0.0
      %4577 = vmatpush1.msra.mxu0 %v4453
      %4578 = vmatprep.subr.mxu0 0.0
      %4579 = vmatpush1.msra.mxu0 %v4454
      %4580 = vmatprep.subr.mxu0 0.0
      %4581 = vmatpush1.msra.mxu0 %v4455
      %4582 = vmatprep.subr.mxu0 0.0
      %4583 = vmatpush1.msra.mxu0 %v4456
      %4584 = vmatprep.subr.mxu0 0.0
      %4585 = vmatpush1.msra.mxu0 %v4457
      %4586 = vmatprep.subr.mxu0 0.0
      %4587 = vmatpush1.msra.mxu0 0.0
      %4588 = vmatprep.subr.mxu0 0.0
      %4589 = vmatpush1.msra.mxu0 0.0
      %4590 = vmatprep.subr.mxu0 0.0
      %4591 = vmatpush1.msra.mxu0 0.0
      %4592 = vmatprep.subr.mxu0 0.0
      %4593 = vmatpush1.msra.mxu0 0.0
      %4594 = vmatprep.subr.mxu0 0.0
      %4595 = vmatpush1.msra.mxu0 0.0
      %4596 = vmatprep.subr.mxu0 0.0
      %4597 = vmatpush1.msra.mxu0 0.0
      %4598 = vmatprep.subr.mxu0 0.0
      %4599 = vmatpush1.msra.mxu0 0.0
      %4600 = vmatprep.subr.mxu0 0.0
      %4601 = vmatpush1.msra.mxu0 0.0
      %4602 = vmatprep.subr.mxu0 0.0
      %4603 = vmatpush1.msra.mxu0 0.0
      %4604 = vmatprep.subr.mxu0 0.0
      %4605 = vmatpush1.msra.mxu0 0.0
      %4606 = vmatprep.subr.mxu0 0.0
      %4607 = vmatpush1.msra.mxu0 0.0
      %4608 = vmatprep.subr.mxu0 0.0
      %4609 = vmatpush1.msra.mxu0 0.0
      %4610 = vmatprep.mubr.f32.mxu0 %v4522
      %4611 = vmatmul.mubr.f32.gmra.mrb[0].mxu0 %v4462
      %v4612 = vpop.f32.mrb[0].mxu0
      %v4613 = vadd.f32 0.0, %v4612
      %v4614 = vpop.f32.mrb[0].mxu0
      %4615 = vmatprep.mubr.f32.mxu0 %v4524
      %4616 = vmatmul.mubr.f32.gmra.mrb[0].mxu0 %v4467
      %v4617 = vpop.f32.mrb[0].mxu0
      %v4618 = vadd.f32 0.0, %v4617
      %v4619 = vpop.f32.mrb[0].mxu0
      %4620 = vmatprep.mubr.f32.mxu0 %v4526
      %4621 = vmatmul.mubr.f32.gmra.mrb[0].mxu0 %v4471
      %v4622 = vpop.f32.mrb[0].mxu0
      %v4623 = vadd.f32 0.0, %v4622
      %v4624 = vpop.f32.mrb[0].mxu0
      %4625 = vmatprep.mubr.f32.mxu0 %v4528
      %4626 = vmatmul.mubr.f32.gmra.mrb[0].mxu0 %v4475
      %v4627 = vpop.f32.mrb[0].mxu0
      %v4628 = vadd.f32 0.0, %v4627
      %v4629 = vpop.f32.mrb[0].mxu0
      %4630 = vmatprep.mubr.f32.mxu0 %v4530
      %4631 = vmatmul.mubr.f32.gmra.mrb[0].mxu0 %v4479
      %v4632 = vpop.f32.mrb[0].mxu0
      %v4633 = vadd.f32 0.0, %v4632
      %v4634 = vpop.f32.mrb[0].mxu0
      %4635 = vmatprep.mubr.f32.mxu0 %v4532
      %4636 = vmatmul.mubr.f32.gmra.mrb[0].mxu0 %v4483
      %v4637 = vpop.f32.mrb[0].mxu0
      %v4638 = vadd.f32 0.0, %v4637
      %v4639 = vpop.f32.mrb[0].mxu0
      %4640 = vmatprep.mubr.f32.mxu0 %v4534
      %4641 = vmatmul.mubr.f32.gmra.mrb[0].mxu0 %v4487
      %v4642 = vpop.f32.mrb[0].mxu0
      %v4643 = vadd.f32 0.0, %v4642
      %v4644 = vpop.f32.mrb[0].mxu0
      %4645 = vmatprep.mubr.f32.mxu0 %v4536
      %4646 = vmatmul.mubr.f32.gmra.mrb[0].mxu0 %v4491
      %v4647 = vpop.f32.mrb[0].mxu0
      %v4648 = vadd.f32 0.0, %v4647
      %v4649 = vpop.f32.mrb[0].mxu0
      %4650 = vmatprep.mubr.f32.mxu0 %v4538
      %4651 = vmatmul.mubr.f32.gmra.mrb[0].mxu0 %v4495
      %v4652 = vpop.f32.mrb[0].mxu0
      %v4653 = vadd.f32 0.0, %v4652
      %v4654 = vpop.f32.mrb[0].mxu0
      %4655 = vmatprep.mubr.f32.mxu0 %v4540
      %4656 = vmatmul.mubr.f32.gmra.mrb[0].mxu0 %v4499
      %v4657 = vpop.f32.mrb[0].mxu0
      %v4658 = vadd.f32 0.0, %v4657
      %v4659 = vpop.f32.mrb[0].mxu0
      %4660 = vmatprep.mubr.f32.mxu0 %v4542
      %4661 = vmatmul.mubr.f32.gmra.mrb[0].mxu0 %v4503
      %v4662 = vpop.f32.mrb[0].mxu0
      %v4663 = vadd.f32 0.0, %v4662
      %v4664 = vpop.f32.mrb[0].mxu0
      %4665 = vmatprep.mubr.f32.mxu0 %v4544
      %4666 = vmatmul.mubr.f32.gmra.mrb[0].mxu0 %v4507
      %v4667 = vpop.f32.mrb[0].mxu0
      %v4668 = vadd.f32 0.0, %v4667
      %v4669 = vpop.f32.mrb[0].mxu0
      %4670 = vdwg.mxu0
      %v4671 = vadd.f32 %v4425, %v4613
      %v4672 = vadd.f32 %v4426, %v4618
      %v4673 = vadd.f32 %v4427, %v4623
      %v4674 = vadd.f32 %v4428, %v4628
      %v4675 = vadd.f32 %v4429, %v4633
      %v4676 = vadd.f32 %v4430, %v4638
      %v4677 = vadd.f32 %v4431, %v4643
      %v4678 = vadd.f32 %v4432, %v4648
      %v4679 = vadd.f32 %v4433, %v4653
      %v4680 = vadd.f32 %v4434, %v4658
      %v4681 = vadd.f32 %v4435, %v4663
      %v4682 = vadd.f32 %v4436, %v4668
      %s4683 = scalar_lea.vmem %s3, 640
      %v4684 = vld [vmem:[%s4683] sm:$0xff]
      %v4685 = vld [vmem:[%s4683 + $0x8] sm:$0xff]
      %v4686 = vld [vmem:[%s4683 + $0x10] sm:$0xff]
      %v4687 = vld [vmem:[%s4683 + $0x18] sm:$0xff]
      %v4688 = vld [vmem:[%s4683 + $0x20] sm:$0xff]
      %v4689 = vld [vmem:[%s4683 + $0x28] sm:$0xff]
      %v4690 = vld [vmem:[%s4683 + $0x30] sm:$0xff]
      %v4691 = vld [vmem:[%s4683 + $0x38] sm:$0xff]
      %v4692 = vld [vmem:[%s4683 + $0x40] sm:$0xff]
      %v4693 = vld [vmem:[%s4683 + $0x48] sm:$0xff]
      %v4694 = vld [vmem:[%s4683 + $0x50] sm:$0xff]
      %v4695 = vld [vmem:[%s4683 + $0x58] sm:$0xff]
      %v4696 = vld [vmem:[%s4683 + $0x60] sm:$0xff]
      %v4697 = vld [vmem:[%s4683 + $0x68] sm:$0xff]
      %v4698 = vld [vmem:[%s4683 + $0x70] sm:$0xff]
      %v4699 = vld [vmem:[%s4683 + $0x78] sm:$0xff]
      %v4700 = vld [vmem:[%s4683 + $0x80] sm:$0xff]
      %v4701 = vld [vmem:[%s4683 + $0x88] sm:$0xff]
      %v4702 = vld [vmem:[%s4683 + $0x90] sm:$0xff]
      %v4703 = vld [vmem:[%s4683 + $0x98] sm:$0xff]
      %v4704 = vrot.slane %v3735, 5
      %v4705 = vrot.slane %v3737, 5
      %v4706 = vsel %vm1840, %v4704, %v4705
      %v4707 = vrot.slane %v3736, 5
      %v4708 = vrot.slane %v3738, 5
      %v4709 = vsel %vm1840, %v4707, %v4708
      %v4710 = vrot.slane %v3739, 5
      %v4711 = vsel %vm1840, %v4705, %v4710
      %v4712 = vrot.slane %v3740, 5
      %v4713 = vsel %vm1840, %v4708, %v4712
      %v4714 = vrot.slane %v3741, 5
      %v4715 = vsel %vm1840, %v4710, %v4714
      %v4716 = vrot.slane %v3742, 5
      %v4717 = vsel %vm1840, %v4712, %v4716
      %v4718 = vrot.slane %v3743, 5
      %v4719 = vsel %vm1840, %v4714, %v4718
      %v4720 = vrot.slane %v3744, 5
      %v4721 = vsel %vm1840, %v4716, %v4720
      %v4722 = vrot.slane %v3745, 5
      %v4723 = vsel %vm1840, %v4718, %v4722
      %v4724 = vrot.slane %v3746, 5
      %v4725 = vsel %vm1840, %v4720, %v4724
      %v4726 = vrot.slane %v3747, 5
      %v4727 = vsel %vm1840, %v4722, %v4726
      %v4728 = vrot.slane %v3748, 5
      %v4729 = vsel %vm1840, %v4724, %v4728
      %v4730 = vrot.slane %v3749, 5
      %v4731 = vsel %vm1840, %v4726, %v4730
      %v4732 = vrot.slane %v3750, 5
      %v4733 = vsel %vm1840, %v4728, %v4732
      %v4734 = vrot.slane %v3751, 5
      %v4735 = vsel %vm1840, %v4730, %v4734
      %v4736 = vrot.slane %v3752, 5
      %v4737 = vsel %vm1840, %v4732, %v4736
      %v4738 = vrot.slane %v3753, 5
      %v4739 = vsel %vm1840, %v4734, %v4738
      %v4740 = vrot.slane %v3754, 5
      %v4741 = vsel %vm1840, %v4736, %v4740
      %v4742 = vrot.slane %v3755, 5
      %v4743 = vsel %vm1840, %v4738, %v4742
      %v4744 = vrot.slane %v3756, 5
      %v4745 = vsel %vm1840, %v4740, %v4744
      %v4746 = vrot.slane %v3757, 5
      %v4747 = vsel %vm1840, %v4742, %v4746
      %v4748 = vrot.slane %v3758, 5
      %v4749 = vsel %vm1840, %v4744, %v4748
      %v4750 = vrot.slane %v3759, 5
      %v4751 = vsel %vm1840, %v4746, %v4750
      %v4752 = vrot.slane %v3760, 5
      %v4753 = vsel %vm1840, %v4748, %v4752
      %v4766 = vsel %vm3894, %v4709, 0
      %v4768 = vsel %vm3894, %v4713, 0
      %v4770 = vsel %vm3894, %v4717, 0
      %v4772 = vsel %vm3894, %v4721, 0
      %v4774 = vsel %vm3894, %v4725, 0
      %v4776 = vsel %vm3894, %v4729, 0
      %v4778 = vsel %vm3894, %v4733, 0
      %v4780 = vsel %vm3894, %v4737, 0
      %v4782 = vsel %vm3894, %v4741, 0
      %v4784 = vsel %vm3894, %v4745, 0
      %v4786 = vsel %vm3894, %v4749, 0
      %v4788 = vsel %vm3894, %v4753, 0
      %4790 = vmatprep.subr.mxu0 0.0
      %4791 = vmatpush1.msra.mxu0 %v4684
      %4792 = vmatprep.subr.mxu0 0.0
      %4793 = vmatpush1.msra.mxu0 %v4685
      %4794 = vmatprep.subr.mxu0 0.0
      %4795 = vmatpush1.msra.mxu0 %v4686
      %4796 = vmatprep.subr.mxu0 0.0
      %4797 = vmatpush1.msra.mxu0 %v4687
      %4798 = vmatprep.subr.mxu0 0.0
      %4799 = vmatpush1.msra.mxu0 %v4688
      %4800 = vmatprep.subr.mxu0 0.0
      %4801 = vmatpush1.msra.mxu0 %v4689
      %4802 = vmatprep.subr.mxu0 0.0
      %4803 = vmatpush1.msra.mxu0 %v4690
      %4804 = vmatprep.subr.mxu0 0.0
      %4805 = vmatpush1.msra.mxu0 %v4691
      %4806 = vmatprep.subr.mxu0 0.0
      %4807 = vmatpush1.msra.mxu0 %v4692
      %4808 = vmatprep.subr.mxu0 0.0
      %4809 = vmatpush1.msra.mxu0 %v4693
      %4810 = vmatprep.subr.mxu0 0.0
      %4811 = vmatpush1.msra.mxu0 %v4694
      %4812 = vmatprep.subr.mxu0 0.0
      %4813 = vmatpush1.msra.mxu0 %v4695
      %4814 = vmatprep.subr.mxu0 0.0
      %4815 = vmatpush1.msra.mxu0 %v4696
      %4816 = vmatprep.subr.mxu0 0.0
      %4817 = vmatpush1.msra.mxu0 %v4697
      %4818 = vmatprep.subr.mxu0 0.0
      %4819 = vmatpush1.msra.mxu0 %v4698
      %4820 = vmatprep.subr.mxu0 0.0
      %4821 = vmatpush1.msra.mxu0 %v4699
      %4822 = vmatprep.subr.mxu0 0.0
      %4823 = vmatpush1.msra.mxu0 %v4700
      %4824 = vmatprep.subr.mxu0 0.0
      %4825 = vmatpush1.msra.mxu0 %v4701
      %4826 = vmatprep.subr.mxu0 0.0
      %4827 = vmatpush1.msra.mxu0 %v4702
      %4828 = vmatprep.subr.mxu0 0.0
      %4829 = vmatpush1.msra.mxu0 %v4703
      %4830 = vmatprep.subr.mxu0 0.0
      %4831 = vmatpush1.msra.mxu0 0.0
      %4832 = vmatprep.subr.mxu0 0.0
      %4833 = vmatpush1.msra.mxu0 0.0
      %4834 = vmatprep.subr.mxu0 0.0
      %4835 = vmatpush1.msra.mxu0 0.0
      %4836 = vmatprep.subr.mxu0 0.0
      %4837 = vmatpush1.msra.mxu0 0.0
      %4838 = vmatprep.subr.mxu0 0.0
      %4839 = vmatpush1.msra.mxu0 0.0
      %4840 = vmatprep.subr.mxu0 0.0
      %4841 = vmatpush1.msra.mxu0 0.0
      %4842 = vmatprep.subr.mxu0 0.0
      %4843 = vmatpush1.msra.mxu0 0.0
      %4844 = vmatprep.subr.mxu0 0.0
      %4845 = vmatpush1.msra.mxu0 0.0
      %4846 = vmatprep.subr.mxu0 0.0
      %4847 = vmatpush1.msra.mxu0 0.0
      %4848 = vmatprep.subr.mxu0 0.0
      %4849 = vmatpush1.msra.mxu0 0.0
      %4850 = vmatprep.subr.mxu0 0.0
      %4851 = vmatpush1.msra.mxu0 0.0
      %4852 = vmatprep.subr.mxu0 0.0
      %4853 = vmatpush1.msra.mxu0 0.0
      %4854 = vmatprep.mubr.f32.mxu0 %v4766
      %4855 = vmatmul.mubr.f32.gmra.mrb[0].mxu0 %v4706
      %v4856 = vpop.f32.mrb[0].mxu0
      %v4857 = vadd.f32 0.0, %v4856
      %v4858 = vpop.f32.mrb[0].mxu0
      %4859 = vmatprep.mubr.f32.mxu0 %v4768
      %4860 = vmatmul.mubr.f32.gmra.mrb[0].mxu0 %v4711
      %v4861 = vpop.f32.mrb[0].mxu0
      %v4862 = vadd.f32 0.0, %v4861
      %v4863 = vpop.f32.mrb[0].mxu0
      %4864 = vmatprep.mubr.f32.mxu0 %v4770
      %4865 = vmatmul.mubr.f32.gmra.mrb[0].mxu0 %v4715
      %v4866 = vpop.f32.mrb[0].mxu0
      %v4867 = vadd.f32 0.0, %v4866
      %v4868 = vpop.f32.mrb[0].mxu0
      %4869 = vmatprep.mubr.f32.mxu0 %v4772
      %4870 = vmatmul.mubr.f32.gmra.mrb[0].mxu0 %v4719
      %v4871 = vpop.f32.mrb[0].mxu0
      %v4872 = vadd.f32 0.0, %v4871
      %v4873 = vpop.f32.mrb[0].mxu0
      %4874 = vmatprep.mubr.f32.mxu0 %v4774
      %4875 = vmatmul.mubr.f32.gmra.mrb[0].mxu0 %v4723
      %v4876 = vpop.f32.mrb[0].mxu0
      %v4877 = vadd.f32 0.0, %v4876
      %v4878 = vpop.f32.mrb[0].mxu0
      %4879 = vmatprep.mubr.f32.mxu0 %v4776
      %4880 = vmatmul.mubr.f32.gmra.mrb[0].mxu0 %v4727
      %v4881 = vpop.f32.mrb[0].mxu0
      %v4882 = vadd.f32 0.0, %v4881
      %v4883 = vpop.f32.mrb[0].mxu0
      %4884 = vmatprep.mubr.f32.mxu0 %v4778
      %4885 = vmatmul.mubr.f32.gmra.mrb[0].mxu0 %v4731
      %v4886 = vpop.f32.mrb[0].mxu0
      %v4887 = vadd.f32 0.0, %v4886
      %v4888 = vpop.f32.mrb[0].mxu0
      %4889 = vmatprep.mubr.f32.mxu0 %v4780
      %4890 = vmatmul.mubr.f32.gmra.mrb[0].mxu0 %v4735
      %v4891 = vpop.f32.mrb[0].mxu0
      %v4892 = vadd.f32 0.0, %v4891
      %v4893 = vpop.f32.mrb[0].mxu0
      %4894 = vmatprep.mubr.f32.mxu0 %v4782
      %4895 = vmatmul.mubr.f32.gmra.mrb[0].mxu0 %v4739
      %v4896 = vpop.f32.mrb[0].mxu0
      %v4897 = vadd.f32 0.0, %v4896
      %v4898 = vpop.f32.mrb[0].mxu0
      %4899 = vmatprep.mubr.f32.mxu0 %v4784
      %4900 = vmatmul.mubr.f32.gmra.mrb[0].mxu0 %v4743
      %v4901 = vpop.f32.mrb[0].mxu0
      %v4902 = vadd.f32 0.0, %v4901
      %v4903 = vpop.f32.mrb[0].mxu0
      %4904 = vmatprep.mubr.f32.mxu0 %v4786
      %4905 = vmatmul.mubr.f32.gmra.mrb[0].mxu0 %v4747
      %v4906 = vpop.f32.mrb[0].mxu0
      %v4907 = vadd.f32 0.0, %v4906
      %v4908 = vpop.f32.mrb[0].mxu0
      %4909 = vmatprep.mubr.f32.mxu0 %v4788
      %4910 = vmatmul.mubr.f32.gmra.mrb[0].mxu0 %v4751
      %v4911 = vpop.f32.mrb[0].mxu0
      %v4912 = vadd.f32 0.0, %v4911
      %v4913 = vpop.f32.mrb[0].mxu0
      %4914 = vdwg.mxu0
      %v4915 = vadd.f32 %v4671, %v4857
      %v4916 = vadd.f32 %v4672, %v4862
      %v4917 = vadd.f32 %v4673, %v4867
      %v4918 = vadd.f32 %v4674, %v4872
      %v4919 = vadd.f32 %v4675, %v4877
      %v4920 = vadd.f32 %v4676, %v4882
      %v4921 = vadd.f32 %v4677, %v4887
      %v4922 = vadd.f32 %v4678, %v4892
      %v4923 = vadd.f32 %v4679, %v4897
      %v4924 = vadd.f32 %v4680, %v4902
      %v4925 = vadd.f32 %v4681, %v4907
      %v4926 = vadd.f32 %v4682, %v4912
      %s4927 = scalar_lea.vmem %s3, 800
      %v4928 = vld [vmem:[%s4927] sm:$0xff]
      %v4929 = vld [vmem:[%s4927 + $0x8] sm:$0xff]
      %v4930 = vld [vmem:[%s4927 + $0x10] sm:$0xff]
      %v4931 = vld [vmem:[%s4927 + $0x18] sm:$0xff]
      %v4932 = vld [vmem:[%s4927 + $0x20] sm:$0xff]
      %v4933 = vld [vmem:[%s4927 + $0x28] sm:$0xff]
      %v4934 = vld [vmem:[%s4927 + $0x30] sm:$0xff]
      %v4935 = vld [vmem:[%s4927 + $0x38] sm:$0xff]
      %v4936 = vld [vmem:[%s4927 + $0x40] sm:$0xff]
      %v4937 = vld [vmem:[%s4927 + $0x48] sm:$0xff]
      %v4938 = vld [vmem:[%s4927 + $0x50] sm:$0xff]
      %v4939 = vld [vmem:[%s4927 + $0x58] sm:$0xff]
      %v4940 = vld [vmem:[%s4927 + $0x60] sm:$0xff]
      %v4941 = vld [vmem:[%s4927 + $0x68] sm:$0xff]
      %v4942 = vld [vmem:[%s4927 + $0x70] sm:$0xff]
      %v4943 = vld [vmem:[%s4927 + $0x78] sm:$0xff]
      %v4944 = vld [vmem:[%s4927 + $0x80] sm:$0xff]
      %v4945 = vld [vmem:[%s4927 + $0x88] sm:$0xff]
      %v4946 = vld [vmem:[%s4927 + $0x90] sm:$0xff]
      %v4947 = vld [vmem:[%s4927 + $0x98] sm:$0xff]
      %v4948 = vrot.slane %v3735, 6
      %v4949 = vrot.slane %v3737, 6
      %v4950 = vsel %vm2201, %v4948, %v4949
      %v4951 = vrot.slane %v3736, 6
      %v4952 = vrot.slane %v3738, 6
      %v4953 = vsel %vm2201, %v4951, %v4952
      %v4954 = vrot.slane %v3739, 6
      %v4955 = vsel %vm2201, %v4949, %v4954
      %v4956 = vrot.slane %v3740, 6
      %v4957 = vsel %vm2201, %v4952, %v4956
      %v4958 = vrot.slane %v3741, 6
      %v4959 = vsel %vm2201, %v4954, %v4958
      %v4960 = vrot.slane %v3742, 6
      %v4961 = vsel %vm2201, %v4956, %v4960
      %v4962 = vrot.slane %v3743, 6
      %v4963 = vsel %vm2201, %v4958, %v4962
      %v4964 = vrot.slane %v3744, 6
      %v4965 = vsel %vm2201, %v4960, %v4964
      %v4966 = vrot.slane %v3745, 6
      %v4967 = vsel %vm2201, %v4962, %v4966
      %v4968 = vrot.slane %v3746, 6
      %v4969 = vsel %vm2201, %v4964, %v4968
      %v4970 = vrot.slane %v3747, 6
      %v4971 = vsel %vm2201, %v4966, %v4970
      %v4972 = vrot.slane %v3748, 6
      %v4973 = vsel %vm2201, %v4968, %v4972
      %v4974 = vrot.slane %v3749, 6
      %v4975 = vsel %vm2201, %v4970, %v4974
      %v4976 = vrot.slane %v3750, 6
      %v4977 = vsel %vm2201, %v4972, %v4976
      %v4978 = vrot.slane %v3751, 6
      %v4979 = vsel %vm2201, %v4974, %v4978
      %v4980 = vrot.slane %v3752, 6
      %v4981 = vsel %vm2201, %v4976, %v4980
      %v4982 = vrot.slane %v3753, 6
      %v4983 = vsel %vm2201, %v4978, %v4982
      %v4984 = vrot.slane %v3754, 6
      %v4985 = vsel %vm2201, %v4980, %v4984
      %v4986 = vrot.slane %v3755, 6
      %v4987 = vsel %vm2201, %v4982, %v4986
      %v4988 = vrot.slane %v3756, 6
      %v4989 = vsel %vm2201, %v4984, %v4988
      %v4990 = vrot.slane %v3757, 6
      %v4991 = vsel %vm2201, %v4986, %v4990
      %v4992 = vrot.slane %v3758, 6
      %v4993 = vsel %vm2201, %v4988, %v4992
      %v4994 = vrot.slane %v3759, 6
      %v4995 = vsel %vm2201, %v4990, %v4994
      %v4996 = vrot.slane %v3760, 6
      %v4997 = vsel %vm2201, %v4992, %v4996
      %v5010 = vsel %vm3894, %v4953, 0
      %v5012 = vsel %vm3894, %v4957, 0
      %v5014 = vsel %vm3894, %v4961, 0
      %v5016 = vsel %vm3894, %v4965, 0
      %v5018 = vsel %vm3894, %v4969, 0
      %v5020 = vsel %vm3894, %v4973, 0
      %v5022 = vsel %vm3894, %v4977, 0
      %v5024 = vsel %vm3894, %v4981, 0
      %v5026 = vsel %vm3894, %v4985, 0
      %v5028 = vsel %vm3894, %v4989, 0
      %v5030 = vsel %vm3894, %v4993, 0
      %v5032 = vsel %vm3894, %v4997, 0
      %5034 = vmatprep.subr.mxu0 0.0
      %5035 = vmatpush1.msra.mxu0 %v4928
      %5036 = vmatprep.subr.mxu0 0.0
      %5037 = vmatpush1.msra.mxu0 %v4929
      %5038 = vmatprep.subr.mxu0 0.0
      %5039 = vmatpush1.msra.mxu0 %v4930
      %5040 = vmatprep.subr.mxu0 0.0
      %5041 = vmatpush1.msra.mxu0 %v4931
      %5042 = vmatprep.subr.mxu0 0.0
      %5043 = vmatpush1.msra.mxu0 %v4932
      %5044 = vmatprep.subr.mxu0 0.0
      %5045 = vmatpush1.msra.mxu0 %v4933
      %5046 = vmatprep.subr.mxu0 0.0
      %5047 = vmatpush1.msra.mxu0 %v4934
      %5048 = vmatprep.subr.mxu0 0.0
      %5049 = vmatpush1.msra.mxu0 %v4935
      %5050 = vmatprep.subr.mxu0 0.0
      %5051 = vmatpush1.msra.mxu0 %v4936
      %5052 = vmatprep.subr.mxu0 0.0
      %5053 = vmatpush1.msra.mxu0 %v4937
      %5054 = vmatprep.subr.mxu0 0.0
      %5055 = vmatpush1.msra.mxu0 %v4938
      %5056 = vmatprep.subr.mxu0 0.0
      %5057 = vmatpush1.msra.mxu0 %v4939
      %5058 = vmatprep.subr.mxu0 0.0
      %5059 = vmatpush1.msra.mxu0 %v4940
      %5060 = vmatprep.subr.mxu0 0.0
      %5061 = vmatpush1.msra.mxu0 %v4941
      %5062 = vmatprep.subr.mxu0 0.0
      %5063 = vmatpush1.msra.mxu0 %v4942
      %5064 = vmatprep.subr.mxu0 0.0
      %5065 = vmatpush1.msra.mxu0 %v4943
      %5066 = vmatprep.subr.mxu0 0.0
      %5067 = vmatpush1.msra.mxu0 %v4944
      %5068 = vmatprep.subr.mxu0 0.0
      %5069 = vmatpush1.msra.mxu0 %v4945
      %5070 = vmatprep.subr.mxu0 0.0
      %5071 = vmatpush1.msra.mxu0 %v4946
      %5072 = vmatprep.subr.mxu0 0.0
      %5073 = vmatpush1.msra.mxu0 %v4947
      %5074 = vmatprep.subr.mxu0 0.0
      %5075 = vmatpush1.msra.mxu0 0.0
      %5076 = vmatprep.subr.mxu0 0.0
      %5077 = vmatpush1.msra.mxu0 0.0
      %5078 = vmatprep.subr.mxu0 0.0
      %5079 = vmatpush1.msra.mxu0 0.0
      %5080 = vmatprep.subr.mxu0 0.0
      %5081 = vmatpush1.msra.mxu0 0.0
      %5082 = vmatprep.subr.mxu0 0.0
      %5083 = vmatpush1.msra.mxu0 0.0
      %5084 = vmatprep.subr.mxu0 0.0
      %5085 = vmatpush1.msra.mxu0 0.0
      %5086 = vmatprep.subr.mxu0 0.0
      %5087 = vmatpush1.msra.mxu0 0.0
      %5088 = vmatprep.subr.mxu0 0.0
      %5089 = vmatpush1.msra.mxu0 0.0
      %5090 = vmatprep.subr.mxu0 0.0
      %5091 = vmatpush1.msra.mxu0 0.0
      %5092 = vmatprep.subr.mxu0 0.0
      %5093 = vmatpush1.msra.mxu0 0.0
      %5094 = vmatprep.subr.mxu0 0.0
      %5095 = vmatpush1.msra.mxu0 0.0
      %5096 = vmatprep.subr.mxu0 0.0
      %5097 = vmatpush1.msra.mxu0 0.0
      %5098 = vmatprep.mubr.f32.mxu0 %v5010
      %5099 = vmatmul.mubr.f32.gmra.mrb[0].mxu0 %v4950
      %v5100 = vpop.f32.mrb[0].mxu0
      %v5101 = vadd.f32 0.0, %v5100
      %v5102 = vpop.f32.mrb[0].mxu0
      %5103 = vmatprep.mubr.f32.mxu0 %v5012
      %5104 = vmatmul.mubr.f32.gmra.mrb[0].mxu0 %v4955
      %v5105 = vpop.f32.mrb[0].mxu0
      %v5106 = vadd.f32 0.0, %v5105
      %v5107 = vpop.f32.mrb[0].mxu0
      %5108 = vmatprep.mubr.f32.mxu0 %v5014
      %5109 = vmatmul.mubr.f32.gmra.mrb[0].mxu0 %v4959
      %v5110 = vpop.f32.mrb[0].mxu0
      %v5111 = vadd.f32 0.0, %v5110
      %v5112 = vpop.f32.mrb[0].mxu0
      %5113 = vmatprep.mubr.f32.mxu0 %v5016
      %5114 = vmatmul.mubr.f32.gmra.mrb[0].mxu0 %v4963
      %v5115 = vpop.f32.mrb[0].mxu0
      %v5116 = vadd.f32 0.0, %v5115
      %v5117 = vpop.f32.mrb[0].mxu0
      %5118 = vmatprep.mubr.f32.mxu0 %v5018
      %5119 = vmatmul.mubr.f32.gmra.mrb[0].mxu0 %v4967
      %v5120 = vpop.f32.mrb[0].mxu0
      %v5121 = vadd.f32 0.0, %v5120
      %v5122 = vpop.f32.mrb[0].mxu0
      %5123 = vmatprep.mubr.f32.mxu0 %v5020
      %5124 = vmatmul.mubr.f32.gmra.mrb[0].mxu0 %v4971
      %v5125 = vpop.f32.mrb[0].mxu0
      %v5126 = vadd.f32 0.0, %v5125
      %v5127 = vpop.f32.mrb[0].mxu0
      %5128 = vmatprep.mubr.f32.mxu0 %v5022
      %5129 = vmatmul.mubr.f32.gmra.mrb[0].mxu0 %v4975
      %v5130 = vpop.f32.mrb[0].mxu0
      %v5131 = vadd.f32 0.0, %v5130
      %v5132 = vpop.f32.mrb[0].mxu0
      %5133 = vmatprep.mubr.f32.mxu0 %v5024
      %5134 = vmatmul.mubr.f32.gmra.mrb[0].mxu0 %v4979
      %v5135 = vpop.f32.mrb[0].mxu0
      %v5136 = vadd.f32 0.0, %v5135
      %v5137 = vpop.f32.mrb[0].mxu0
      %5138 = vmatprep.mubr.f32.mxu0 %v5026
      %5139 = vmatmul.mubr.f32.gmra.mrb[0].mxu0 %v4983
      %v5140 = vpop.f32.mrb[0].mxu0
      %v5141 = vadd.f32 0.0, %v5140
      %v5142 = vpop.f32.mrb[0].mxu0
      %5143 = vmatprep.mubr.f32.mxu0 %v5028
      %5144 = vmatmul.mubr.f32.gmra.mrb[0].mxu0 %v4987
      %v5145 = vpop.f32.mrb[0].mxu0
      %v5146 = vadd.f32 0.0, %v5145
      %v5147 = vpop.f32.mrb[0].mxu0
      %5148 = vmatprep.mubr.f32.mxu0 %v5030
      %5149 = vmatmul.mubr.f32.gmra.mrb[0].mxu0 %v4991
      %v5150 = vpop.f32.mrb[0].mxu0
      %v5151 = vadd.f32 0.0, %v5150
      %v5152 = vpop.f32.mrb[0].mxu0
      %5153 = vmatprep.mubr.f32.mxu0 %v5032
      %5154 = vmatmul.mubr.f32.gmra.mrb[0].mxu0 %v4995
      %v5155 = vpop.f32.mrb[0].mxu0
      %v5156 = vadd.f32 0.0, %v5155
      %v5157 = vpop.f32.mrb[0].mxu0
      %5158 = vdwg.mxu0
      %v5159 = vadd.f32 %v4915, %v5101
      %v5160 = vadd.f32 %v4916, %v5106
      %v5161 = vadd.f32 %v4917, %v5111
      %v5162 = vadd.f32 %v4918, %v5116
      %v5163 = vadd.f32 %v4919, %v5121
      %v5164 = vadd.f32 %v4920, %v5126
      %v5165 = vadd.f32 %v4921, %v5131
      %v5166 = vadd.f32 %v4922, %v5136
      %v5167 = vadd.f32 %v4923, %v5141
      %v5168 = vadd.f32 %v4924, %v5146
      %v5169 = vadd.f32 %v4925, %v5151
      %v5170 = vadd.f32 %v4926, %v5156
      %s5171 = scalar_lea.vmem %s3, 960
      %v5172 = vld [vmem:[%s5171] sm:$0xff]
      %v5173 = vld [vmem:[%s5171 + $0x8] sm:$0xff]
      %v5174 = vld [vmem:[%s5171 + $0x10] sm:$0xff]
      %v5175 = vld [vmem:[%s5171 + $0x18] sm:$0xff]
      %v5176 = vld [vmem:[%s5171 + $0x20] sm:$0xff]
      %v5177 = vld [vmem:[%s5171 + $0x28] sm:$0xff]
      %v5178 = vld [vmem:[%s5171 + $0x30] sm:$0xff]
      %v5179 = vld [vmem:[%s5171 + $0x38] sm:$0xff]
      %v5180 = vld [vmem:[%s5171 + $0x40] sm:$0xff]
      %v5181 = vld [vmem:[%s5171 + $0x48] sm:$0xff]
      %v5182 = vld [vmem:[%s5171 + $0x50] sm:$0xff]
      %v5183 = vld [vmem:[%s5171 + $0x58] sm:$0xff]
      %v5184 = vld [vmem:[%s5171 + $0x60] sm:$0xff]
      %v5185 = vld [vmem:[%s5171 + $0x68] sm:$0xff]
      %v5186 = vld [vmem:[%s5171 + $0x70] sm:$0xff]
      %v5187 = vld [vmem:[%s5171 + $0x78] sm:$0xff]
      %v5188 = vld [vmem:[%s5171 + $0x80] sm:$0xff]
      %v5189 = vld [vmem:[%s5171 + $0x88] sm:$0xff]
      %v5190 = vld [vmem:[%s5171 + $0x90] sm:$0xff]
      %v5191 = vld [vmem:[%s5171 + $0x98] sm:$0xff]
      %v5192 = vsel %vm3894, %v3758, 0
      %v5194 = vsel %vm3894, %v3760, 0
      %v5197 = vsel %vm3894, %v3762, 0
      %5199 = vmatprep.subr.mxu0 0.0
      %5200 = vmatpush1.msra.mxu0 %v5172
      %5201 = vmatprep.subr.mxu0 0.0
      %5202 = vmatpush1.msra.mxu0 %v5173
      %5203 = vmatprep.subr.mxu0 0.0
      %5204 = vmatpush1.msra.mxu0 %v5174
      %5205 = vmatprep.subr.mxu0 0.0
      %5206 = vmatpush1.msra.mxu0 %v5175
      %5207 = vmatprep.subr.mxu0 0.0
      %5208 = vmatpush1.msra.mxu0 %v5176
      %5209 = vmatprep.subr.mxu0 0.0
      %5210 = vmatpush1.msra.mxu0 %v5177
      %5211 = vmatprep.subr.mxu0 0.0
      %5212 = vmatpush1.msra.mxu0 %v5178
      %5213 = vmatprep.subr.mxu0 0.0
      %5214 = vmatpush1.msra.mxu0 %v5179
      %5215 = vmatprep.subr.mxu0 0.0
      %5216 = vmatpush1.msra.mxu0 %v5180
      %5217 = vmatprep.subr.mxu0 0.0
      %5218 = vmatpush1.msra.mxu0 %v5181
      %5219 = vmatprep.subr.mxu0 0.0
      %5220 = vmatpush1.msra.mxu0 %v5182
      %5221 = vmatprep.subr.mxu0 0.0
      %5222 = vmatpush1.msra.mxu0 %v5183
      %5223 = vmatprep.subr.mxu0 0.0
      %5224 = vmatpush1.msra.mxu0 %v5184
      %5225 = vmatprep.subr.mxu0 0.0
      %5226 = vmatpush1.msra.mxu0 %v5185
      %5227 = vmatprep.subr.mxu0 0.0
      %5228 = vmatpush1.msra.mxu0 %v5186
      %5229 = vmatprep.subr.mxu0 0.0
      %5230 = vmatpush1.msra.mxu0 %v5187
      %5231 = vmatprep.subr.mxu0 0.0
      %5232 = vmatpush1.msra.mxu0 %v5188
      %5233 = vmatprep.subr.mxu0 0.0
      %5234 = vmatpush1.msra.mxu0 %v5189
      %5235 = vmatprep.subr.mxu0 0.0
      %5236 = vmatpush1.msra.mxu0 %v5190
      %5237 = vmatprep.subr.mxu0 0.0
      %5238 = vmatpush1.msra.mxu0 %v5191
      %5239 = vmatprep.subr.mxu0 0.0
      %5240 = vmatpush1.msra.mxu0 0.0
      %5241 = vmatprep.subr.mxu0 0.0
      %5242 = vmatpush1.msra.mxu0 0.0
      %5243 = vmatprep.subr.mxu0 0.0
      %5244 = vmatpush1.msra.mxu0 0.0
      %5245 = vmatprep.subr.mxu0 0.0
      %5246 = vmatpush1.msra.mxu0 0.0
      %5247 = vmatprep.subr.mxu0 0.0
      %5248 = vmatpush1.msra.mxu0 0.0
      %5249 = vmatprep.subr.mxu0 0.0
      %5250 = vmatpush1.msra.mxu0 0.0
      %5251 = vmatprep.subr.mxu0 0.0
      %5252 = vmatpush1.msra.mxu0 0.0
      %5253 = vmatprep.subr.mxu0 0.0
      %5254 = vmatpush1.msra.mxu0 0.0
      %5255 = vmatprep.subr.mxu0 0.0
      %5256 = vmatpush1.msra.mxu0 0.0
      %5257 = vmatprep.subr.mxu0 0.0
      %5258 = vmatpush1.msra.mxu0 0.0
      %5259 = vmatprep.subr.mxu0 0.0
      %5260 = vmatpush1.msra.mxu0 0.0
      %5261 = vmatprep.subr.mxu0 0.0
      %5262 = vmatpush1.msra.mxu0 0.0
      %5263 = vmatprep.mubr.f32.mxu0 %v4050
      %5264 = vmatmul.mubr.f32.gmra.mrb[0].mxu0 %v3739
      %v5265 = vpop.f32.mrb[0].mxu0
      %v5266 = vadd.f32 0.0, %v5265
      %v5267 = vpop.f32.mrb[0].mxu0
      %5268 = vmatprep.mubr.f32.mxu0 %v4052
      %5269 = vmatmul.mubr.f32.gmra.mrb[0].mxu0 %v3741
      %v5270 = vpop.f32.mrb[0].mxu0
      %v5271 = vadd.f32 0.0, %v5270
      %v5272 = vpop.f32.mrb[0].mxu0
      %5273 = vmatprep.mubr.f32.mxu0 %v4054
      %5274 = vmatmul.mubr.f32.gmra.mrb[0].mxu0 %v3743
      %v5275 = vpop.f32.mrb[0].mxu0
      %v5276 = vadd.f32 0.0, %v5275
      %v5277 = vpop.f32.mrb[0].mxu0
      %5278 = vmatprep.mubr.f32.mxu0 %v4056
      %5279 = vmatmul.mubr.f32.gmra.mrb[0].mxu0 %v3745
      %v5280 = vpop.f32.mrb[0].mxu0
      %v5281 = vadd.f32 0.0, %v5280
      %v5282 = vpop.f32.mrb[0].mxu0
      %5283 = vmatprep.mubr.f32.mxu0 %v4058
      %5284 = vmatmul.mubr.f32.gmra.mrb[0].mxu0 %v3747
      %v5285 = vpop.f32.mrb[0].mxu0
      %v5286 = vadd.f32 0.0, %v5285
      %v5287 = vpop.f32.mrb[0].mxu0
      %5288 = vmatprep.mubr.f32.mxu0 %v4060
      %5289 = vmatmul.mubr.f32.gmra.mrb[0].mxu0 %v3749
      %v5290 = vpop.f32.mrb[0].mxu0
      %v5291 = vadd.f32 0.0, %v5290
      %v5292 = vpop.f32.mrb[0].mxu0
      %5293 = vmatprep.mubr.f32.mxu0 %v4062
      %5294 = vmatmul.mubr.f32.gmra.mrb[0].mxu0 %v3751
      %v5295 = vpop.f32.mrb[0].mxu0
      %v5296 = vadd.f32 0.0, %v5295
      %v5297 = vpop.f32.mrb[0].mxu0
      %5298 = vmatprep.mubr.f32.mxu0 %v4064
      %5299 = vmatmul.mubr.f32.gmra.mrb[0].mxu0 %v3753
      %v5300 = vpop.f32.mrb[0].mxu0
      %v5301 = vadd.f32 0.0, %v5300
      %v5302 = vpop.f32.mrb[0].mxu0
      %5303 = vmatprep.mubr.f32.mxu0 %v4066
      %5304 = vmatmul.mubr.f32.gmra.mrb[0].mxu0 %v3755
      %v5305 = vpop.f32.mrb[0].mxu0
      %v5306 = vadd.f32 0.0, %v5305
      %v5307 = vpop.f32.mrb[0].mxu0
      %5308 = vmatprep.mubr.f32.mxu0 %v5192
      %5309 = vmatmul.mubr.f32.gmra.mrb[0].mxu0 %v3757
      %v5310 = vpop.f32.mrb[0].mxu0
      %v5311 = vadd.f32 0.0, %v5310
      %v5312 = vpop.f32.mrb[0].mxu0
      %5313 = vmatprep.mubr.f32.mxu0 %v5194
      %5314 = vmatmul.mubr.f32.gmra.mrb[0].mxu0 %v3759
      %v5315 = vpop.f32.mrb[0].mxu0
      %v5316 = vadd.f32 0.0, %v5315
      %v5317 = vpop.f32.mrb[0].mxu0
      %5318 = vmatprep.mubr.f32.mxu0 %v5197
      %5319 = vmatmul.mubr.f32.gmra.mrb[0].mxu0 %v3761
      %v5320 = vpop.f32.mrb[0].mxu0
      %v5321 = vadd.f32 0.0, %v5320
      %v5322 = vpop.f32.mrb[0].mxu0
      %5323 = vdwg.mxu0
      %v5324 = vadd.f32 %v5159, %v5266
      %v5325 = vadd.f32 %v5160, %v5271
      %v5326 = vadd.f32 %v5161, %v5276
      %v5327 = vadd.f32 %v5162, %v5281
      %v5328 = vadd.f32 %v5163, %v5286
      %v5329 = vadd.f32 %v5164, %v5291
      %v5330 = vadd.f32 %v5165, %v5296
      %v5331 = vadd.f32 %v5166, %v5301
      %v5332 = vadd.f32 %v5167, %v5306
      %v5333 = vadd.f32 %v5168, %v5311
      %v5334 = vadd.f32 %v5169, %v5316
      %v5335 = vadd.f32 %v5170, %v5321
      %s5336 = scalar_lea.vmem %s3, 1120
      %v5337 = vld [vmem:[%s5336] sm:$0xff]
      %v5338 = vld [vmem:[%s5336 + $0x8] sm:$0xff]
      %v5339 = vld [vmem:[%s5336 + $0x10] sm:$0xff]
      %v5340 = vld [vmem:[%s5336 + $0x18] sm:$0xff]
      %v5341 = vld [vmem:[%s5336 + $0x20] sm:$0xff]
      %v5342 = vld [vmem:[%s5336 + $0x28] sm:$0xff]
      %v5343 = vld [vmem:[%s5336 + $0x30] sm:$0xff]
      %v5344 = vld [vmem:[%s5336 + $0x38] sm:$0xff]
      %v5345 = vld [vmem:[%s5336 + $0x40] sm:$0xff]
      %v5346 = vld [vmem:[%s5336 + $0x48] sm:$0xff]
      %v5347 = vld [vmem:[%s5336 + $0x50] sm:$0xff]
      %v5348 = vld [vmem:[%s5336 + $0x58] sm:$0xff]
      %v5349 = vld [vmem:[%s5336 + $0x60] sm:$0xff]
      %v5350 = vld [vmem:[%s5336 + $0x68] sm:$0xff]
      %v5351 = vld [vmem:[%s5336 + $0x70] sm:$0xff]
      %v5352 = vld [vmem:[%s5336 + $0x78] sm:$0xff]
      %v5353 = vld [vmem:[%s5336 + $0x80] sm:$0xff]
      %v5354 = vld [vmem:[%s5336 + $0x88] sm:$0xff]
      %v5355 = vld [vmem:[%s5336 + $0x90] sm:$0xff]
      %v5356 = vld [vmem:[%s5336 + $0x98] sm:$0xff]
      %v5360 = vrot.slane %v3759, 1
      %v5361 = vsel %vm537, %v3878, %v5360
      %v5362 = vrot.slane %v3760, 1
      %v5363 = vsel %vm537, %v3880, %v5362
      %v5364 = vrot.slane %v3761, 1
      %v5365 = vsel %vm537, %v5360, %v5364
      %v5366 = vrot.slane %v3762, 1
      %v5367 = vsel %vm537, %v5362, %v5366
      %v5368 = vrot.slane %v3763, 1
      %v5369 = vsel %vm537, %v5364, %v5368
      %v5370 = vrot.slane %v3764, 1
      %v5371 = vsel %vm537, %v5366, %v5370
      %v5375 = vsel %vm3894, %v5363, 0
      %v5377 = vsel %vm3894, %v5367, 0
      %v5379 = vsel %vm3894, %v5371, 0
      %5381 = vmatprep.subr.mxu0 0.0
      %5382 = vmatpush1.msra.mxu0 %v5337
      %5383 = vmatprep.subr.mxu0 0.0
      %5384 = vmatpush1.msra.mxu0 %v5338
      %5385 = vmatprep.subr.mxu0 0.0
      %5386 = vmatpush1.msra.mxu0 %v5339
      %5387 = vmatprep.subr.mxu0 0.0
      %5388 = vmatpush1.msra.mxu0 %v5340
      %5389 = vmatprep.subr.mxu0 0.0
      %5390 = vmatpush1.msra.mxu0 %v5341
      %5391 = vmatprep.subr.mxu0 0.0
      %5392 = vmatpush1.msra.mxu0 %v5342
      %5393 = vmatprep.subr.mxu0 0.0
      %5394 = vmatpush1.msra.mxu0 %v5343
      %5395 = vmatprep.subr.mxu0 0.0
      %5396 = vmatpush1.msra.mxu0 %v5344
      %5397 = vmatprep.subr.mxu0 0.0
      %5398 = vmatpush1.msra.mxu0 %v5345
      %5399 = vmatprep.subr.mxu0 0.0
      %5400 = vmatpush1.msra.mxu0 %v5346
      %5401 = vmatprep.subr.mxu0 0.0
      %5402 = vmatpush1.msra.mxu0 %v5347
      %5403 = vmatprep.subr.mxu0 0.0
      %5404 = vmatpush1.msra.mxu0 %v5348
      %5405 = vmatprep.subr.mxu0 0.0
      %5406 = vmatpush1.msra.mxu0 %v5349
      %5407 = vmatprep.subr.mxu0 0.0
      %5408 = vmatpush1.msra.mxu0 %v5350
      %5409 = vmatprep.subr.mxu0 0.0
      %5410 = vmatpush1.msra.mxu0 %v5351
      %5411 = vmatprep.subr.mxu0 0.0
      %5412 = vmatpush1.msra.mxu0 %v5352
      %5413 = vmatprep.subr.mxu0 0.0
      %5414 = vmatpush1.msra.mxu0 %v5353
      %5415 = vmatprep.subr.mxu0 0.0
      %5416 = vmatpush1.msra.mxu0 %v5354
      %5417 = vmatprep.subr.mxu0 0.0
      %5418 = vmatpush1.msra.mxu0 %v5355
      %5419 = vmatprep.subr.mxu0 0.0
      %5420 = vmatpush1.msra.mxu0 %v5356
      %5421 = vmatprep.subr.mxu0 0.0
      %5422 = vmatpush1.msra.mxu0 0.0
      %5423 = vmatprep.subr.mxu0 0.0
      %5424 = vmatpush1.msra.mxu0 0.0
      %5425 = vmatprep.subr.mxu0 0.0
      %5426 = vmatpush1.msra.mxu0 0.0
      %5427 = vmatprep.subr.mxu0 0.0
      %5428 = vmatpush1.msra.mxu0 0.0
      %5429 = vmatprep.subr.mxu0 0.0
      %5430 = vmatpush1.msra.mxu0 0.0
      %5431 = vmatprep.subr.mxu0 0.0
      %5432 = vmatpush1.msra.mxu0 0.0
      %5433 = vmatprep.subr.mxu0 0.0
      %5434 = vmatpush1.msra.mxu0 0.0
      %5435 = vmatprep.subr.mxu0 0.0
      %5436 = vmatpush1.msra.mxu0 0.0
      %5437 = vmatprep.subr.mxu0 0.0
      %5438 = vmatpush1.msra.mxu0 0.0
      %5439 = vmatprep.subr.mxu0 0.0
      %5440 = vmatpush1.msra.mxu0 0.0
      %5441 = vmatprep.subr.mxu0 0.0
      %5442 = vmatpush1.msra.mxu0 0.0
      %5443 = vmatprep.subr.mxu0 0.0
      %5444 = vmatpush1.msra.mxu0 0.0
      %5445 = vmatprep.mubr.f32.mxu0 %v3901
      %5446 = vmatmul.mubr.f32.gmra.mrb[0].mxu0 %v3847
      %v5447 = vpop.f32.mrb[0].mxu0
      %v5448 = vadd.f32 0.0, %v5447
      %v5449 = vpop.f32.mrb[0].mxu0
      %5450 = vmatprep.mubr.f32.mxu0 %v3903
      %5451 = vmatmul.mubr.f32.gmra.mrb[0].mxu0 %v3851
      %v5452 = vpop.f32.mrb[0].mxu0
      %v5453 = vadd.f32 0.0, %v5452
      %v5454 = vpop.f32.mrb[0].mxu0
      %5455 = vmatprep.mubr.f32.mxu0 %v3905
      %5456 = vmatmul.mubr.f32.gmra.mrb[0].mxu0 %v3855
      %v5457 = vpop.f32.mrb[0].mxu0
      %v5458 = vadd.f32 0.0, %v5457
      %v5459 = vpop.f32.mrb[0].mxu0
      %5460 = vmatprep.mubr.f32.mxu0 %v3907
      %5461 = vmatmul.mubr.f32.gmra.mrb[0].mxu0 %v3859
      %v5462 = vpop.f32.mrb[0].mxu0
      %v5463 = vadd.f32 0.0, %v5462
      %v5464 = vpop.f32.mrb[0].mxu0
      %5465 = vmatprep.mubr.f32.mxu0 %v3909
      %5466 = vmatmul.mubr.f32.gmra.mrb[0].mxu0 %v3863
      %v5467 = vpop.f32.mrb[0].mxu0
      %v5468 = vadd.f32 0.0, %v5467
      %v5469 = vpop.f32.mrb[0].mxu0
      %5470 = vmatprep.mubr.f32.mxu0 %v3911
      %5471 = vmatmul.mubr.f32.gmra.mrb[0].mxu0 %v3867
      %v5472 = vpop.f32.mrb[0].mxu0
      %v5473 = vadd.f32 0.0, %v5472
      %v5474 = vpop.f32.mrb[0].mxu0
      %5475 = vmatprep.mubr.f32.mxu0 %v3913
      %5476 = vmatmul.mubr.f32.gmra.mrb[0].mxu0 %v3871
      %v5477 = vpop.f32.mrb[0].mxu0
      %v5478 = vadd.f32 0.0, %v5477
      %v5479 = vpop.f32.mrb[0].mxu0
      %5480 = vmatprep.mubr.f32.mxu0 %v3915
      %5481 = vmatmul.mubr.f32.gmra.mrb[0].mxu0 %v3875
      %v5482 = vpop.f32.mrb[0].mxu0
      %v5483 = vadd.f32 0.0, %v5482
      %v5484 = vpop.f32.mrb[0].mxu0
      %5485 = vmatprep.mubr.f32.mxu0 %v3917
      %5486 = vmatmul.mubr.f32.gmra.mrb[0].mxu0 %v3879
      %v5487 = vpop.f32.mrb[0].mxu0
      %v5488 = vadd.f32 0.0, %v5487
      %v5489 = vpop.f32.mrb[0].mxu0
      %5490 = vmatprep.mubr.f32.mxu0 %v5375
      %5491 = vmatmul.mubr.f32.gmra.mrb[0].mxu0 %v5361
      %v5492 = vpop.f32.mrb[0].mxu0
      %v5493 = vadd.f32 0.0, %v5492
      %v5494 = vpop.f32.mrb[0].mxu0
      %5495 = vmatprep.mubr.f32.mxu0 %v5377
      %5496 = vmatmul.mubr.f32.gmra.mrb[0].mxu0 %v5365
      %v5497 = vpop.f32.mrb[0].mxu0
      %v5498 = vadd.f32 0.0, %v5497
      %v5499 = vpop.f32.mrb[0].mxu0
      %5500 = vmatprep.mubr.f32.mxu0 %v5379
      %5501 = vmatmul.mubr.f32.gmra.mrb[0].mxu0 %v5369
      %v5502 = vpop.f32.mrb[0].mxu0
      %v5503 = vadd.f32 0.0, %v5502
      %v5504 = vpop.f32.mrb[0].mxu0
      %5505 = vdwg.mxu0
      %v5506 = vadd.f32 %v5324, %v5448
      %v5507 = vadd.f32 %v5325, %v5453
      %v5508 = vadd.f32 %v5326, %v5458
      %v5509 = vadd.f32 %v5327, %v5463
      %v5510 = vadd.f32 %v5328, %v5468
      %v5511 = vadd.f32 %v5329, %v5473
      %v5512 = vadd.f32 %v5330, %v5478
      %v5513 = vadd.f32 %v5331, %v5483
      %v5514 = vadd.f32 %v5332, %v5488
      %v5515 = vadd.f32 %v5333, %v5493
      %v5516 = vadd.f32 %v5334, %v5498
      %v5517 = vadd.f32 %v5335, %v5503
      %s5518 = scalar_lea.vmem %s3, 1280
      %v5519 = vld [vmem:[%s5518] sm:$0xff]
      %v5520 = vld [vmem:[%s5518 + $0x8] sm:$0xff]
      %v5521 = vld [vmem:[%s5518 + $0x10] sm:$0xff]
      %v5522 = vld [vmem:[%s5518 + $0x18] sm:$0xff]
      %v5523 = vld [vmem:[%s5518 + $0x20] sm:$0xff]
      %v5524 = vld [vmem:[%s5518 + $0x28] sm:$0xff]
      %v5525 = vld [vmem:[%s5518 + $0x30] sm:$0xff]
      %v5526 = vld [vmem:[%s5518 + $0x38] sm:$0xff]
      %v5527 = vld [vmem:[%s5518 + $0x40] sm:$0xff]
      %v5528 = vld [vmem:[%s5518 + $0x48] sm:$0xff]
      %v5529 = vld [vmem:[%s5518 + $0x50] sm:$0xff]
      %v5530 = vld [vmem:[%s5518 + $0x58] sm:$0xff]
      %v5531 = vld [vmem:[%s5518 + $0x60] sm:$0xff]
      %v5532 = vld [vmem:[%s5518 + $0x68] sm:$0xff]
      %v5533 = vld [vmem:[%s5518 + $0x70] sm:$0xff]
      %v5534 = vld [vmem:[%s5518 + $0x78] sm:$0xff]
      %v5535 = vld [vmem:[%s5518 + $0x80] sm:$0xff]
      %v5536 = vld [vmem:[%s5518 + $0x88] sm:$0xff]
      %v5537 = vld [vmem:[%s5518 + $0x90] sm:$0xff]
      %v5538 = vld [vmem:[%s5518 + $0x98] sm:$0xff]
      %v5539 = vrot.slane %v3759, 2
      %v5540 = vsel %vm1062, %v4260, %v5539
      %v5541 = vrot.slane %v3760, 2
      %v5542 = vsel %vm1062, %v4262, %v5541
      %v5543 = vrot.slane %v3761, 2
      %v5544 = vsel %vm1062, %v5539, %v5543
      %v5545 = vrot.slane %v3762, 2
      %v5546 = vsel %vm1062, %v5541, %v5545
      %v5547 = vrot.slane %v3763, 2
      %v5548 = vsel %vm1062, %v5543, %v5547
      %v5549 = vrot.slane %v3764, 2
      %v5550 = vsel %vm1062, %v5545, %v5549
      %v5554 = vsel %vm3894, %v5542, 0
      %v5556 = vsel %vm3894, %v5546, 0
      %v5558 = vsel %vm3894, %v5550, 0
      %5560 = vmatprep.subr.mxu0 0.0
      %5561 = vmatpush1.msra.mxu0 %v5519
      %5562 = vmatprep.subr.mxu0 0.0
      %5563 = vmatpush1.msra.mxu0 %v5520
      %5564 = vmatprep.subr.mxu0 0.0
      %5565 = vmatpush1.msra.mxu0 %v5521
      %5566 = vmatprep.subr.mxu0 0.0
      %5567 = vmatpush1.msra.mxu0 %v5522
      %5568 = vmatprep.subr.mxu0 0.0
      %5569 = vmatpush1.msra.mxu0 %v5523
      %5570 = vmatprep.subr.mxu0 0.0
      %5571 = vmatpush1.msra.mxu0 %v5524
      %5572 = vmatprep.subr.mxu0 0.0
      %5573 = vmatpush1.msra.mxu0 %v5525
      %5574 = vmatprep.subr.mxu0 0.0
      %5575 = vmatpush1.msra.mxu0 %v5526
      %5576 = vmatprep.subr.mxu0 0.0
      %5577 = vmatpush1.msra.mxu0 %v5527
      %5578 = vmatprep.subr.mxu0 0.0
      %5579 = vmatpush1.msra.mxu0 %v5528
      %5580 = vmatprep.subr.mxu0 0.0
      %5581 = vmatpush1.msra.mxu0 %v5529
      %5582 = vmatprep.subr.mxu0 0.0
      %5583 = vmatpush1.msra.mxu0 %v5530
      %5584 = vmatprep.subr.mxu0 0.0
      %5585 = vmatpush1.msra.mxu0 %v5531
      %5586 = vmatprep.subr.mxu0 0.0
      %5587 = vmatpush1.msra.mxu0 %v5532
      %5588 = vmatprep.subr.mxu0 0.0
      %5589 = vmatpush1.msra.mxu0 %v5533
      %5590 = vmatprep.subr.mxu0 0.0
      %5591 = vmatpush1.msra.mxu0 %v5534
      %5592 = vmatprep.subr.mxu0 0.0
      %5593 = vmatpush1.msra.mxu0 %v5535
      %5594 = vmatprep.subr.mxu0 0.0
      %5595 = vmatpush1.msra.mxu0 %v5536
      %5596 = vmatprep.subr.mxu0 0.0
      %5597 = vmatpush1.msra.mxu0 %v5537
      %5598 = vmatprep.subr.mxu0 0.0
      %5599 = vmatpush1.msra.mxu0 %v5538
      %5600 = vmatprep.subr.mxu0 0.0
      %5601 = vmatpush1.msra.mxu0 0.0
      %5602 = vmatprep.subr.mxu0 0.0
      %5603 = vmatpush1.msra.mxu0 0.0
      %5604 = vmatprep.subr.mxu0 0.0
      %5605 = vmatpush1.msra.mxu0 0.0
      %5606 = vmatprep.subr.mxu0 0.0
      %5607 = vmatpush1.msra.mxu0 0.0
      %5608 = vmatprep.subr.mxu0 0.0
      %5609 = vmatpush1.msra.mxu0 0.0
      %5610 = vmatprep.subr.mxu0 0.0
      %5611 = vmatpush1.msra.mxu0 0.0
      %5612 = vmatprep.subr.mxu0 0.0
      %5613 = vmatpush1.msra.mxu0 0.0
      %5614 = vmatprep.subr.mxu0 0.0
      %5615 = vmatpush1.msra.mxu0 0.0
      %5616 = vmatprep.subr.mxu0 0.0
      %5617 = vmatpush1.msra.mxu0 0.0
      %5618 = vmatprep.subr.mxu0 0.0
      %5619 = vmatpush1.msra.mxu0 0.0
      %5620 = vmatprep.subr.mxu0 0.0
      %5621 = vmatpush1.msra.mxu0 0.0
      %5622 = vmatprep.subr.mxu0 0.0
      %5623 = vmatpush1.msra.mxu0 0.0
      %5624 = vmatprep.mubr.f32.mxu0 %v4282
      %5625 = vmatmul.mubr.f32.gmra.mrb[0].mxu0 %v4229
      %v5626 = vpop.f32.mrb[0].mxu0
      %v5627 = vadd.f32 0.0, %v5626
      %v5628 = vpop.f32.mrb[0].mxu0
      %5629 = vmatprep.mubr.f32.mxu0 %v4284
      %5630 = vmatmul.mubr.f32.gmra.mrb[0].mxu0 %v4233
      %v5631 = vpop.f32.mrb[0].mxu0
      %v5632 = vadd.f32 0.0, %v5631
      %v5633 = vpop.f32.mrb[0].mxu0
      %5634 = vmatprep.mubr.f32.mxu0 %v4286
      %5635 = vmatmul.mubr.f32.gmra.mrb[0].mxu0 %v4237
      %v5636 = vpop.f32.mrb[0].mxu0
      %v5637 = vadd.f32 0.0, %v5636
      %v5638 = vpop.f32.mrb[0].mxu0
      %5639 = vmatprep.mubr.f32.mxu0 %v4288
      %5640 = vmatmul.mubr.f32.gmra.mrb[0].mxu0 %v4241
      %v5641 = vpop.f32.mrb[0].mxu0
      %v5642 = vadd.f32 0.0, %v5641
      %v5643 = vpop.f32.mrb[0].mxu0
      %5644 = vmatprep.mubr.f32.mxu0 %v4290
      %5645 = vmatmul.mubr.f32.gmra.mrb[0].mxu0 %v4245
      %v5646 = vpop.f32.mrb[0].mxu0
      %v5647 = vadd.f32 0.0, %v5646
      %v5648 = vpop.f32.mrb[0].mxu0
      %5649 = vmatprep.mubr.f32.mxu0 %v4292
      %5650 = vmatmul.mubr.f32.gmra.mrb[0].mxu0 %v4249
      %v5651 = vpop.f32.mrb[0].mxu0
      %v5652 = vadd.f32 0.0, %v5651
      %v5653 = vpop.f32.mrb[0].mxu0
      %5654 = vmatprep.mubr.f32.mxu0 %v4294
      %5655 = vmatmul.mubr.f32.gmra.mrb[0].mxu0 %v4253
      %v5656 = vpop.f32.mrb[0].mxu0
      %v5657 = vadd.f32 0.0, %v5656
      %v5658 = vpop.f32.mrb[0].mxu0
      %5659 = vmatprep.mubr.f32.mxu0 %v4296
      %5660 = vmatmul.mubr.f32.gmra.mrb[0].mxu0 %v4257
      %v5661 = vpop.f32.mrb[0].mxu0
      %v5662 = vadd.f32 0.0, %v5661
      %v5663 = vpop.f32.mrb[0].mxu0
      %5664 = vmatprep.mubr.f32.mxu0 %v4298
      %5665 = vmatmul.mubr.f32.gmra.mrb[0].mxu0 %v4261
      %v5666 = vpop.f32.mrb[0].mxu0
      %v5667 = vadd.f32 0.0, %v5666
      %v5668 = vpop.f32.mrb[0].mxu0
      %5669 = vmatprep.mubr.f32.mxu0 %v5554
      %5670 = vmatmul.mubr.f32.gmra.mrb[0].mxu0 %v5540
      %v5671 = vpop.f32.mrb[0].mxu0
      %v5672 = vadd.f32 0.0, %v5671
      %v5673 = vpop.f32.mrb[0].mxu0
      %5674 = vmatprep.mubr.f32.mxu0 %v5556
      %5675 = vmatmul.mubr.f32.gmra.mrb[0].mxu0 %v5544
      %v5676 = vpop.f32.mrb[0].mxu0
      %v5677 = vadd.f32 0.0, %v5676
      %v5678 = vpop.f32.mrb[0].mxu0
      %5679 = vmatprep.mubr.f32.mxu0 %v5558
      %5680 = vmatmul.mubr.f32.gmra.mrb[0].mxu0 %v5548
      %v5681 = vpop.f32.mrb[0].mxu0
      %v5682 = vadd.f32 0.0, %v5681
      %v5683 = vpop.f32.mrb[0].mxu0
      %5684 = vdwg.mxu0
      %v5685 = vadd.f32 %v5506, %v5627
      %v5686 = vadd.f32 %v5507, %v5632
      %v5687 = vadd.f32 %v5508, %v5637
      %v5688 = vadd.f32 %v5509, %v5642
      %v5689 = vadd.f32 %v5510, %v5647
      %v5690 = vadd.f32 %v5511, %v5652
      %v5691 = vadd.f32 %v5512, %v5657
      %v5692 = vadd.f32 %v5513, %v5662
      %v5693 = vadd.f32 %v5514, %v5667
      %v5694 = vadd.f32 %v5515, %v5672
      %v5695 = vadd.f32 %v5516, %v5677
      %v5696 = vadd.f32 %v5517, %v5682
      %v5697 = vld [vmem:[%s4] sm:$0x1]
      %v5699 = vlaneseq
      %v5700 = vshrl.u32 %v5699, 7
      %v5701 = vsub.s32 0, %v5700
      %v5702 = vrot.slane %v5697, %v5701
      %v5704 = vadd.f32 %v5685, %v5702
      %v5705 = vadd.f32 %v5686, %v5702
      %v5706 = vadd.f32 %v5687, %v5702
      %v5707 = vadd.f32 %v5688, %v5702
      %v5708 = vadd.f32 %v5689, %v5702
      %v5709 = vadd.f32 %v5690, %v5702
      %v5710 = vadd.f32 %v5691, %v5702
      %v5711 = vadd.f32 %v5692, %v5702
      %v5712 = vadd.f32 %v5693, %v5702
      %v5713 = vadd.f32 %v5694, %v5702
      %v5714 = vadd.f32 %v5695, %v5702
      %v5715 = vadd.f32 %v5696, %v5702
      %v5716 = vmax.f32 %v5704, 0.0
      %v5717 = vmax.f32 %v5705, 0.0
      %v5718 = vmax.f32 %v5706, 0.0
      %v5719 = vmax.f32 %v5707, 0.0
      %v5720 = vmax.f32 %v5708, 0.0
      %v5721 = vmax.f32 %v5709, 0.0
      %v5722 = vmax.f32 %v5710, 0.0
      %v5723 = vmax.f32 %v5711, 0.0
      %v5724 = vmax.f32 %v5712, 0.0
      %v5725 = vmax.f32 %v5713, 0.0
      %v5726 = vmax.f32 %v5714, 0.0
      %v5727 = vmax.f32 %v5715, 0.0
      %v5728 = vld [vmem:[%s360] sm:$0xff]
      %v5729 = vadd.f32 %v5716, %v5728
      %5730 = vst [vmem:[%s370] sm:$0xff] %v5729
      %v5731 = vld [vmem:[%s360 + $0x8] sm:$0xff]
      %v5733 = vrot.slane %v5731, 4
      %v5735 = vadd.f32 %v5717, %v5733
      %v5736 = vadd.f32 %v5718, %v5733
      %5737 = vst [vmem:[%s370 + $0x4] sm:$0xf0] %v5735
      %5738 = vst [vmem:[%s370 + $0xc] sm:$0xf] %v5736
      %v5739 = vld [vmem:[%s360 + $0x10] sm:$0xff]
      %v5740 = vadd.f32 %v5719, %v5739
      %5741 = vst [vmem:[%s370 + $0x10] sm:$0xff] %v5740
      %v5742 = vld [vmem:[%s360 + $0x18] sm:$0xff]
      %v5744 = vrot.slane %v5742, 4
      %v5746 = vadd.f32 %v5720, %v5744
      %v5747 = vadd.f32 %v5721, %v5744
      %5748 = vst [vmem:[%s370 + $0x14] sm:$0xf0] %v5746
      %5749 = vst [vmem:[%s370 + $0x1c] sm:$0xf] %v5747
      %v5750 = vld [vmem:[%s360 + $0x20] sm:$0xff]
      %v5751 = vadd.f32 %v5722, %v5750
      %5752 = vst [vmem:[%s370 + $0x20] sm:$0xff] %v5751
      %v5753 = vld [vmem:[%s360 + $0x28] sm:$0xff]
      %v5755 = vrot.slane %v5753, 4
      %v5757 = vadd.f32 %v5723, %v5755
      %v5758 = vadd.f32 %v5724, %v5755
      %5759 = vst [vmem:[%s370 + $0x24] sm:$0xf0] %v5757
      %5760 = vst [vmem:[%s370 + $0x2c] sm:$0xf] %v5758
      %v5761 = vld [vmem:[%s360 + $0x30] sm:$0xff]
      %v5762 = vadd.f32 %v5725, %v5761
      %5763 = vst [vmem:[%s370 + $0x30] sm:$0xff] %v5762
      %v5764 = vld [vmem:[%s360 + $0x38] sm:$0xff]
      %v5766 = vrot.slane %v5764, 4
      %v5768 = vadd.f32 %v5726, %v5766
      %v5769 = vadd.f32 %v5727, %v5766
      %5770 = vst [vmem:[%s370 + $0x34] sm:$0xf0] %v5768
      %5771 = vst [vmem:[%s370 + $0x3c] sm:$0xf] %v5769
      %s5772 = smul.u32 8, %s23
      %p5773 = scmp.lt.s32.totalorder %s22, 1
      %s5774 = scalar_select %p5773, %s22, 1
      %p5775 = scmp.lt.s32.totalorder %s5772, 7
      %s5776 = scalar_select %p5775, %s5772, 7
      %s5777 = smul.addr %s5774, 8
      %s5778 = sadd.s32 %s5776, %s5777
      %s5779 = smul.addr %s5778, 8
      %s5780 = scalar_lea.vmem %s7, %s5779
      // Predicated region
      $region49: #{resblock_up_forward.1} parent=47 // pred_check
        %p5781 = pneg %p216
      $region50: #{resblock_up_forward.1} parent=47 // pred_check_branch
        %5783 = sbr.rel (%p5781) target = $region52
      $region51: #{resblock_up_forward.1} parent=47 // pred_region
        %s5784 = smul.u32 8, %s23
      $region52: #{resblock_up_forward.1} parent=47 // pred_fallthru
        _
    $region48: #{resblock_up_forward.1} parent=5 // pred_fallthru
      _
    %p5785 = scmp.le.s32.totalorder 2, %s13
    // Predicated region
    $region53: #{resblock_up_forward.1} parent=5 // pred_check
      %p5786 = pneg %p5785
    $region54: #{resblock_up_forward.1} parent=5 // pred_check_branch
      %5788 = sbr.rel (%p5786) target = $region56
    $region55: #{resblock_up_forward.1} parent=5 // pred_region
      %s5789 = ssub.s32 %s13, 2
      // Predicated region
      $region57: #{resblock_up_forward.1} parent=55 // pred_check
        %p5790 = pneg %p222
      $region58: #{resblock_up_forward.1} parent=55 // pred_check_branch
        %5792 = sbr.rel (%p5790) target = $region60
      $region59: #{resblock_up_forward.1} parent=55 // pred_region
        %s5793 = smul.u32 8, %s25
        %p5794 = scmp.lt.s32.totalorder %s24, 1
        %s5795 = scalar_select %p5794, %s24, 1
        %p5796 = scmp.lt.s32.totalorder %s5793, 7
        %s5797 = scalar_select %p5796, %s5793, 7
        %s5798 = smul.addr %s5795, 8
        %s5799 = sadd.s32 %s5797, %s5798
        %s5800 = smul.addr %s5799, 8
        %s5801 = scalar_lea.vmem %s7, %s5800
      $region60: #{resblock_up_forward.1} parent=55 // pred_fallthru
        _
    $region56: #{resblock_up_forward.1} parent=5 // pred_fallthru
      _
  $region6: #{resblock_up_forward.1} parent=0 // loop_footer
    %s17 = sadd.s32 1, %s13
  $region7: #{resblock_up_forward.1} parent=0 // loop_footer_branch
    %12 = sbr.rel target = $region3
  $region8: #{resblock_up_forward.1} parent=0 // loop_exit
    _

</llo_original>
